<compile_context>
chip_gen: v7x
topology: tpu7x:2x2x1
jax: 0.10.0
libtpu: 0.0.40
codegen_flags: <defaults>
</compile_context>

<pallas_src>
import functools

import jax
import jax.numpy as jnp
import numpy as np
from jax import lax
from jax.experimental import pallas as pl
from jax.experimental.pallas import tpu as pltpu

LANE = 128                      # TPU lane width (last-dim alignment target)
VMEM_LIMIT = 48 * 1024 * 1024   # <= v7x 64 MiB/TC physical; headroom on v5e/v6e


def _round_up(x, m):
    return (x + m - 1) // m * m


def _pick_row_tile(h):
    """Largest row-tile (multiple of 8 when possible) that divides H."""
    for cand in (32, 16, 8):
        if cand <= h and h % cand == 0:
            return cand
    return h


# ----------------------------------------------------------------------------
# Kernel 1: tiled GEMM + folded-BN affine (+ optional residual) + ReLU
#   grid = (Mp//tm, N//tn, K//tk); f32 accumulator lives in VMEM scratch.
# ----------------------------------------------------------------------------
def _mm_bn_act_kernel(x_ref, w_ref, s_ref, b_ref, o_ref, acc_ref, *, relu):
    @pl.when(pl.program_id(2) == 0)
    def _init():
        acc_ref[...] = jnp.zeros_like(acc_ref)

    acc_ref[...] += jnp.dot(x_ref[...], w_ref[...],
                            preferred_element_type=jnp.float32)

    @pl.when(pl.program_id(2) == pl.num_programs(2) - 1)
    def _epilogue():
        acc = acc_ref[...] * s_ref[...] + b_ref[...]
        if relu:
            acc = jnp.maximum(acc, 0.0)
        o_ref[...] = acc.astype(o_ref.dtype)


def _mm_bn_add_relu_kernel(x_ref, w_ref, s_ref, b_ref, r_ref, o_ref, acc_ref):
    @pl.when(pl.program_id(2) == 0)
    def _init():
        acc_ref[...] = jnp.zeros_like(acc_ref)

    acc_ref[...] += jnp.dot(x_ref[...], w_ref[...],
                            preferred_element_type=jnp.float32)

    @pl.when(pl.program_id(2) == pl.num_programs(2) - 1)
    def _epilogue():
        acc = acc_ref[...] * s_ref[...] + b_ref[...] + r_ref[...].astype(jnp.float32)
        o_ref[...] = jnp.maximum(acc, 0.0).astype(o_ref.dtype)


def matmul_bn_act(x, w, scale2d, bias2d, *, relu=True, residual=None,
                  out_dtype=jnp.bfloat16):
    """x: (M, K) bf16, w: (K, N) bf16, scale/bias: (1, N) f32, residual: (M, N).

    K and N must be multiples of 128 (caller pads channels). M is padded up
    to the row-tile size internally (and sliced back)."""
    x = x.astype(jnp.bfloat16)
    w = w.astype(jnp.bfloat16)
    M, K = x.shape
    N = w.shape[1]
    assert K % LANE == 0 and N % LANE == 0

    # Big row tiles: pad M up instead of shrinking tm (review: 128 -> 512 tiles
    # move mem-bound kernels from ~29% to ~85% of HBM roofline).
    TM_TARGET = 512
    if M >= TM_TARGET:
        tm = TM_TARGET
        Mp = _round_up(M, tm)
    else:
        Mp = _round_up(M, 8)
        tm = Mp
    if Mp != M:
        x = jnp.pad(x, ((0, Mp - M), (0, 0)))
        if residual is not None:
            residual = jnp.pad(residual, ((0, Mp - M), (0, 0)))

    tn = 256 if N % 256 == 0 else 128   # MXU-aligned, lane-dense output tile
    tk = 256 if K % 256 == 0 else 128
    grid = (Mp // tm, N // tn, K // tk)

    x_spec = pl.BlockSpec((tm, tk), lambda i, j, k: (i, k))
    w_spec = pl.BlockSpec((tk, tn), lambda i, j, k: (k, j))   # resident across M
    s_spec = pl.BlockSpec((1, tn), lambda i, j, k: (0, j))    # resident across M, K
    o_spec = pl.BlockSpec((tm, tn), lambda i, j, k: (i, j))   # resident across K

    if residual is None:
        kernel = functools.partial(_mm_bn_act_kernel, relu=relu)
        in_specs = [x_spec, w_spec, s_spec, s_spec]
        args = (x, w, scale2d, bias2d)
    else:
        kernel = _mm_bn_add_relu_kernel
        in_specs = [x_spec, w_spec, s_spec, s_spec,
                    pl.BlockSpec((tm, tn), lambda i, j, k: (i, j))]
        args = (x, w, scale2d, bias2d, residual.astype(jnp.bfloat16))

    out_bytes = Mp * N * jnp.dtype(out_dtype).itemsize
    bytes_accessed = int(Mp * K * 2 + K * N * 2 + out_bytes
                         + (Mp * N * 2 if residual is not None else 0) + 2 * N * 4)

    out = pl.pallas_call(
        kernel,
        out_shape=jax.ShapeDtypeStruct((Mp, N), out_dtype),
        grid_spec=pltpu.PrefetchScalarGridSpec(
            num_scalar_prefetch=0,
            grid=grid,
            in_specs=in_specs,
            out_specs=o_spec,
            scratch_shapes=[pltpu.VMEM((tm, tn), jnp.float32)]),
        compiler_params=pltpu.CompilerParams(
            dimension_semantics=("parallel", "parallel", "arbitrary"),
            vmem_limit_bytes=VMEM_LIMIT),
        cost_estimate=pl.CostEstimate(flops=2 * Mp * N * K, transcendentals=0,
                                      bytes_accessed=bytes_accessed),
    )(*args)
    return out[:M] if Mp != M else out


# ----------------------------------------------------------------------------
# Kernel 2: 3x3 conv (stride=1, pad=1) + BN + ReLU, spatially tiled.
#   Per grid step (one image, th output rows, tn output channels):
#     - build a (th+2, W, 3*Cin) horizontal-im2col staging tile in VMEM
#       (halo rows come in via two block-size-1 row BlockSpecs; image borders
#       are zeroed in-kernel -> no HBM halo-pad pass),
#     - 3 deep-K GEMMs (K = 3*Cin, one per ky) accumulate in f32 VMEM scratch,
#     - fused BN affine + ReLU epilogue.
# ----------------------------------------------------------------------------
def _conv3x3_bn_relu_kernel(x_ref, xt_ref, xb_ref, w_ref, s_ref, b_ref, o_ref,
                            xs_ref, acc_ref, *, th, W, C):
    hi = pl.program_id(1)
    nh = pl.num_programs(1)

    def h_im2col(src):
        # src: (rows, W, C) -> (rows, W, 3*C): [x[w-1] | x[w] | x[w+1]] with
        # zero padding at the W borders.  Channel concat is lane-aligned.
        z = jnp.zeros((src.shape[0], 1, C), src.dtype)
        left = jnp.concatenate([z, src[:, :-1, :]], axis=1)    # value at w-1
        right = jnp.concatenate([src[:, 1:, :], z], axis=1)    # value at w+1
        return jnp.concatenate([left, src, right], axis=-1)

    # Center rows of the tile (xs rows 1 .. th).
    xs_ref[1:th + 1] = h_im2col(x_ref[0])

    # Top / bottom halo rows; zero them at the image border.
    xs_ref[0:1] = h_im2col(xt_ref[0])
    xs_ref[th + 1:th + 2] = h_im2col(xb_ref[0])

    @pl.when(hi == 0)
    def _zero_top():
        xs_ref[0:1] = jnp.zeros((1, W, 3 * C), jnp.bfloat16)

    @pl.when(hi == nh - 1)
    def _zero_bot():
        xs_ref[th + 1:th + 2] = jnp.zeros((1, W, 3 * C), jnp.bfloat16)

    # Three deep-K GEMMs (one per ky), accumulated in the f32 VMEM scratch.
    acc_ref[...] = jnp.dot(xs_ref[0:th].reshape(th * W, 3 * C), w_ref[0],
                           preferred_element_type=jnp.float32)
    acc_ref[...] += jnp.dot(xs_ref[1:th + 1].reshape(th * W, 3 * C), w_ref[1],
                            preferred_element_type=jnp.float32)
    acc_ref[...] += jnp.dot(xs_ref[2:th + 2].reshape(th * W, 3 * C), w_ref[2],
                            preferred_element_type=jnp.float32)

    out = acc_ref[...] * s_ref[...] + b_ref[...]
    out = jnp.maximum(out, 0.0)
    o_ref[...] = out.reshape(o_ref.shape).astype(o_ref.dtype)


def conv3x3_bn_relu(x_nhwc, w2k, scale2d, bias2d, out_dtype=jnp.bfloat16):
    """x_nhwc: (N, H, W, Cin) bf16; w2k: (3, 3*Cin, Cout) bf16 (ky, kx*Cin, Cout).

    stride=1, pad=1; Cin/Cout are lane-multiples (caller pads)."""
    x_nhwc = x_nhwc.astype(jnp.bfloat16)
    w2k = w2k.astype(jnp.bfloat16)
    n, h, w, c = x_nhwc.shape
    cout = w2k.shape[-1]
    assert c % LANE == 0 and cout % LANE == 0

    th = _pick_row_tile(h)
    tn = 256 if cout % 256 == 0 else 128
    grid = (n, h // th, cout // tn)

    kernel = functools.partial(_conv3x3_bn_relu_kernel, th=th, W=w, C=c)

    flops = 2 * n * h * w * 9 * c * cout
    bytes_accessed = int(n * h * w * c * 2 + 9 * c * cout * 2
                         + n * h * w * cout * jnp.dtype(out_dtype).itemsize
                         + 2 * cout * 4)

    return pl.pallas_call(
        kernel,
        out_shape=jax.ShapeDtypeStruct((n, h, w, cout), out_dtype),
        grid_spec=pltpu.PrefetchScalarGridSpec(
            num_scalar_prefetch=0,
            grid=grid,
            in_specs=[
                # main row tile: rows [hi*th, hi*th + th)
                pl.BlockSpec((1, th, w, c), lambda b, hi, j: (b, hi, 0, 0)),
                # top halo row (block size 1 along H -> element-row indexing)
                pl.BlockSpec((1, 1, w, c),
                             lambda b, hi, j: (b, jnp.maximum(hi * th - 1, 0), 0, 0)),
                # bottom halo row
                pl.BlockSpec((1, 1, w, c),
                             lambda b, hi, j: (b, jnp.minimum(hi * th + th, h - 1), 0, 0)),
                # weights / BN affine: resident across batch & row tiles
                pl.BlockSpec((3, 3 * c, tn), lambda b, hi, j: (0, 0, j)),
                pl.BlockSpec((1, tn), lambda b, hi, j: (0, j)),
                pl.BlockSpec((1, tn), lambda b, hi, j: (0, j)),
            ],
            out_specs=pl.BlockSpec((1, th, w, tn), lambda b, hi, j: (b, hi, 0, j)),
            scratch_shapes=[
                pltpu.VMEM((th + 2, w, 3 * c), jnp.bfloat16),   # im2col staging
                pltpu.VMEM((th * w, tn), jnp.float32),          # f32 accumulator
            ]),
        compiler_params=pltpu.CompilerParams(
            dimension_semantics=("parallel", "parallel", "parallel"),
            vmem_limit_bytes=VMEM_LIMIT),
        cost_estimate=pl.CostEstimate(flops=flops, transcendentals=0,
                                      bytes_accessed=bytes_accessed),
    )(x_nhwc, x_nhwc, x_nhwc, w2k, scale2d, bias2d)


# ----------------------------------------------------------------------------
# Glue: BN folding, parameter prep (padding / bf16), forward pass
# ----------------------------------------------------------------------------
def fold_bn(gamma, beta, mean, var, eps=1e-5):
    scale = gamma / jnp.sqrt(var + eps)
    bias = beta - mean * scale
    return scale, bias


def bottleneck_forward(x_nchw, kp, cout):
    """Bottleneck forward (stride=1, downsample=None). x_nchw: (N, Cin, H, W) f32."""
    n, cin, h, w = x_nchw.shape
    cpad = kp["w1"].shape[0]
    wpad = kp["w1"].shape[1]
    opad = kp["w3"].shape[1]

    # NCHW -> NHWC (channels on lanes), zero-pad channels to lane multiple, bf16.
    # TODO(synk): in a full network keep activations NHWC + channel-padded
    #             end-to-end so these layout passes become one-time costs.
    x = jnp.transpose(x_nchw, (0, 2, 3, 1))
    x = jnp.pad(x, ((0, 0), (0, 0), (0, 0), (0, cpad - cin))).astype(jnp.bfloat16)
    residual = x.reshape(n * h * w, cpad)

    # conv1x1 + bn1 + relu
    out = matmul_bn_act(residual, kp["w1"], kp["s1"], kp["b1"], relu=True)

    # conv3x3 (stride=1, pad=1) + bn2 + relu — spatially tiled, no HBM halo pad
    out = conv3x3_bn_relu(out.reshape(n, h, w, wpad), kp["w2"], kp["s2"], kp["b2"])

    # conv1x1 + bn3 + residual add + relu (fused epilogue), bf16 writeback
    out = matmul_bn_act(out.reshape(n * h * w, wpad), kp["w3"], kp["s3"], kp["b3"],
                        residual=residual, out_dtype=jnp.bfloat16)

    out = out.reshape(n, h, w, opad)[..., :cout].astype(jnp.float32)
    return jnp.transpose(out, (0, 3, 1, 2))  # back to NCHW to match the module


# ----------------------------------------------------------------------------
# Pure-JAX reference (lax conv, f32) for correctness check
# ----------------------------------------------------------------------------
def bottleneck_ref(x_nchw, rp):
    dn = ("NHWC", "HWIO", "NHWC")
    x = jnp.transpose(x_nchw, (0, 2, 3, 1))
    residual = x

    def bn(y, p):
        s, b = fold_bn(*p)
        return y * s + b

    o = lax.conv_general_dilated(x, rp["w1_io"][None, None], (1, 1), "VALID",
                                 dimension_numbers=dn)
    o = jax.nn.relu(bn(o, rp["bn1"]))
    o = lax.conv_general_dilated(o, rp["w2_hwio"], (1, 1), ((1, 1), (1, 1)),
                                 dimension_numbers=dn)
    o = jax.nn.relu(bn(o, rp["bn2"]))
    o = lax.conv_general_dilated(o, rp["w3_io"][None, None], (1, 1), "VALID",
                                 dimension_numbers=dn)
    o = jax.nn.relu(bn(o, rp["bn3"]) + residual)
    return jnp.transpose(o, (0, 3, 1, 2))


# ----------------------------------------------------------------------------
# Deterministic parameter init (PyTorch OIHW convention -> GEMM layouts)
# ----------------------------------------------------------------------------
def init_params(key, inplanes, planes, base_width=64, expansion=4):
    width = planes * base_width // 64
    cout = planes * expansion
    assert inplanes == cout, "stride=1 / downsample=None requires inplanes == planes*expansion"
    keys = jax.random.split(key, 6)

    def bn_params(k, c):
        kg, kb, km, kv = jax.random.split(k, 4)
        gamma = 1.0 + 0.1 * jax.random.normal(kg, (c,), jnp.float32)
        beta = 0.1 * jax.random.normal(kb, (c,), jnp.float32)
        mean = 0.1 * jax.random.normal(km, (c,), jnp.float32)
        var = jnp.abs(jax.random.normal(kv, (c,), jnp.float32)) + 0.5
        return gamma, beta, mean, var

    w1_oihw = 0.1 * jax.random.normal(keys[0], (width, inplanes, 1, 1), jnp.float32)
    w2_oihw = 0.1 * jax.random.normal(keys[1], (width, width, 3, 3), jnp.float32)
    w3_oihw = 0.1 * jax.random.normal(keys[2], (cout, width, 1, 1), jnp.float32)
    bn1, bn2, bn3 = bn_params(keys[3], width), bn_params(keys[4], width), bn_params(keys[5], cout)

    # Round conv weights to bf16 once (what the MXU will see); BN stays f32.
    def bf16_round(a):
        return a.astype(jnp.bfloat16).astype(jnp.float32)

    w1_io = bf16_round(jnp.transpose(w1_oihw[:, :, 0, 0], (1, 0)))   # (Cin, width)
    w2_hwio = bf16_round(jnp.transpose(w2_oihw, (2, 3, 1, 0)))       # (ky,kx,I,O)
    w3_io = bf16_round(jnp.transpose(w3_oihw[:, :, 0, 0], (1, 0)))   # (width, cout)

    cpad = _round_up(inplanes, LANE)
    wpad = _round_up(width, LANE)
    opad = _round_up(cout, LANE)
    assert cpad == opad

    def pad2(a, r, c):
        return jnp.pad(a, ((0, r - a.shape[0]), (0, c - a.shape[1])))

    def pad_sb(bn, c):
        s, b = fold_bn(*bn)
        s = jnp.pad(s, (0, c - s.shape[0])).reshape(1, c).astype(jnp.float32)
        b = jnp.pad(b, (0, c - b.shape[0])).reshape(1, c).astype(jnp.float32)
        return s, b

    s1, b1 = pad_sb(bn1, wpad)
    s2, b2 = pad_sb(bn2, wpad)
    s3, b3 = pad_sb(bn3, opad)

    # conv2 weights packed as (ky, kx*Cin_pad, Cout_pad) to match the kernel's
    # horizontal-im2col channel layout (kx-major, input-channel-minor).
    w2p = jnp.pad(w2_hwio, ((0, 0), (0, 0), (0, wpad - width), (0, wpad - width)))
    w2k = w2p.reshape(3, 3 * wpad, wpad).astype(jnp.bfloat16)

    kernel_params = {
        "w1": pad2(w1_io, cpad, wpad).astype(jnp.bfloat16),
        "w2": w2k,
        "w3": pad2(w3_io, wpad, opad).astype(jnp.bfloat16),
        "s1": s1, "b1": b1, "s2": s2, "b2": b2, "s3": s3, "b3": b3,
    }
    ref_params = {"w1_io": w1_io, "w2_hwio": w2_hwio, "w3_io": w3_io,
                  "bn1": bn1, "bn2": bn2, "bn3": bn3}
    return kernel_params, ref_params, cout


if __name__ == "__main__":
    # Small shapes: batch=2, inplanes=16, planes=4 (=> width=4, out=16), H=W=8,
    # stride=1, downsample=None (inplanes == planes * expansion).
    N, INPLANES, PLANES, H, W = 2, 16, 4, 8, 8

    key = jax.random.PRNGKey(0)
    kx_, kp_ = jax.random.split(key)
    x = jax.random.normal(kx_, (N, INPLANES, H, W), jnp.float32)
    x = x.astype(jnp.bfloat16).astype(jnp.float32)  # round once so both paths see same input
    kparams, rparams, cout = init_params(kp_, INPLANES, PLANES)

    fwd = jax.jit(bottleneck_forward, static_argnums=(2,))
    y = jax.block_until_ready(fwd(x, kparams, cout))

    y_ref = bottleneck_ref(x, rparams)
    np.testing.assert_allclose(np.asarray(y), np.asarray(y_ref), rtol=2e-2, atol=2e-2)

    print("KERNEL_OK")
</pallas_src>

<mosaic_0001>
module attributes {stable_mosaic.version = 11 : i64} {
  func.func @_mm_bn_act_kernel(%arg0: i32, %arg1: i32, %arg2: i32, %arg3: memref<128x128xbf16, #tpu.memory_space<vmem>>, %arg4: memref<128x128xbf16, #tpu.memory_space<vmem>>, %arg5: memref<1x128xf32, #tpu.memory_space<vmem>>, %arg6: memref<1x128xf32, #tpu.memory_space<vmem>>, %arg7: memref<128x128xbf16, #tpu.memory_space<vmem>>, %arg8: memref<128x128xf32, #tpu.memory_space<vmem>>) attributes {dimension_semantics = [#tpu.dimension_semantics<parallel>, #tpu.dimension_semantics<parallel>, #tpu.dimension_semantics<arbitrary>], iteration_bounds = array<i64: 1, 1, 1>, scalar_prefetch = 0 : i64, scratch_operands = 1 : i64, tpu.core_type = #tpu.core_type<tc>, window_params = [{transform_indices = @transform_0, window_bounds = array<i64: 128, 128>}, {transform_indices = @transform_1, window_bounds = array<i64: 128, 128>}, {transform_indices = @transform_2, window_bounds = array<i64: 1, 128>}, {transform_indices = @transform_3, window_bounds = array<i64: 1, 128>}, {transform_indices = @transform_4, window_bounds = array<i64: 128, 128>}]} {
    %c0_i32 = arith.constant 0 : i32
    %0 = arith.cmpi eq, %arg2, %c0_i32 : i32
    %1 = arith.extui %0 : i1 to i32
    %c0_i32_0 = arith.constant 0 : i32
    %2 = arith.cmpi ne, %1, %c0_i32_0 : i32
    scf.if %2 {
      %cst_10 = arith.constant 0.000000e+00 : f32
      %12 = vector.broadcast %cst_10 : f32 to vector<128x128xf32>
      %c0_11 = arith.constant 0 : index
      %c0_12 = arith.constant 0 : index
      %13 = vector.load %arg8[%c0_11, %c0_12] : memref<128x128xf32, #tpu.memory_space<vmem>>, vector<128x128xf32>
      tpu.vector_store %arg8[%c0_11, %c0_12], %12 {strides = array<i32>} : memref<128x128xf32, #tpu.memory_space<vmem>>, vector<128x128xf32>,
    } else {
    }
    %c0 = arith.constant 0 : index
    %c0_1 = arith.constant 0 : index
    %3 = vector.load %arg8[%c0, %c0_1] : memref<128x128xf32, #tpu.memory_space<vmem>>, vector<128x128xf32>
    %c0_2 = arith.constant 0 : index
    %c0_3 = arith.constant 0 : index
    %4 = vector.load %arg3[%c0_2, %c0_3] : memref<128x128xbf16, #tpu.memory_space<vmem>>, vector<128x128xbf16>
    %c0_4 = arith.constant 0 : index
    %c0_5 = arith.constant 0 : index
    %5 = vector.load %arg4[%c0_4, %c0_5] : memref<128x128xbf16, #tpu.memory_space<vmem>>, vector<128x128xbf16>
    %cst = arith.constant dense<0.000000e+00> : vector<128x128xf32>
    %6 = tpu.matmul %4, %5, %cst {dimension_numbers = #tpu.dot_dimension_numbers<[1], [0], [0], [1], [0, 0, 1, 1], [], []>} : vector<128x128xbf16>, vector<128x128xbf16>, vector<128x128xf32> -> vector<128x128xf32>
    %7 = arith.addf %3, %6 : vector<128x128xf32>
    %c0_6 = arith.constant 0 : index
    %c0_7 = arith.constant 0 : index
    %8 = vector.load %arg8[%c0_6, %c0_7] : memref<128x128xf32, #tpu.memory_space<vmem>>, vector<128x128xf32>
    tpu.vector_store %arg8[%c0_6, %c0_7], %7 {strides = array<i32>} : memref<128x128xf32, #tpu.memory_space<vmem>>, vector<128x128xf32>,
    %c0_i32_8 = arith.constant 0 : i32
    %9 = arith.cmpi eq, %arg2, %c0_i32_8 : i32
    %10 = arith.extui %9 : i1 to i32
    %c0_i32_9 = arith.constant 0 : i32
    %11 = arith.cmpi ne, %10, %c0_i32_9 : i32
    scf.if %11 {
      %c0_10 = arith.constant 0 : index
      %c0_11 = arith.constant 0 : index
      %12 = vector.load %arg8[%c0_10, %c0_11] : memref<128x128xf32, #tpu.memory_space<vmem>>, vector<128x128xf32>
      %c0_12 = arith.constant 0 : index
      %c0_13 = arith.constant 0 : index
      %13 = vector.load %arg5[%c0_12, %c0_13] : memref<1x128xf32, #tpu.memory_space<vmem>>, vector<1x128xf32>
      %14 = vector.broadcast %13 : vector<1x128xf32> to vector<128x128xf32>
      %15 = arith.mulf %12, %14 : vector<128x128xf32>
      %c0_14 = arith.constant 0 : index
      %c0_15 = arith.constant 0 : index
      %16 = vector.load %arg6[%c0_14, %c0_15] : memref<1x128xf32, #tpu.memory_space<vmem>>, vector<1x128xf32>
      %17 = vector.broadcast %16 : vector<1x128xf32> to vector<128x128xf32>
      %18 = arith.addf %15, %17 : vector<128x128xf32>
      %cst_16 = arith.constant 0.000000e+00 : f32
      %19 = vector.broadcast %cst_16 : f32 to vector<128x128xf32>
      %20 = arith.maximumf %18, %19 : vector<128x128xf32>
      %21 = arith.truncf %20 : vector<128x128xf32> to vector<128x128xbf16>
      %c0_17 = arith.constant 0 : index
      %c0_18 = arith.constant 0 : index
      %22 = vector.load %arg7[%c0_17, %c0_18] : memref<128x128xbf16, #tpu.memory_space<vmem>>, vector<128x128xbf16>
      tpu.vector_store %arg7[%c0_17, %c0_18], %21 {strides = array<i32>} : memref<128x128xbf16, #tpu.memory_space<vmem>>, vector<128x128xbf16>,
    } else {
    }
    return
  }
  func.func @transform_0(%arg0: i32, %arg1: i32, %arg2: i32) -> (i32, i32) {
    %c0_i32 = arith.constant 0 : i32
    return %arg0, %arg2 : i32, i32
  }
  func.func @transform_1(%arg0: i32, %arg1: i32, %arg2: i32) -> (i32, i32) {
    %c0_i32 = arith.constant 0 : i32
    return %arg2, %arg1 : i32, i32
  }
  func.func @transform_2(%arg0: i32, %arg1: i32, %arg2: i32) -> (i32, i32) {
    %c0_i32 = arith.constant 0 : i32
    %c0_i32_0 = arith.constant 0 : i32
    return %c0_i32, %arg1 : i32, i32
  }
  func.func @transform_3(%arg0: i32, %arg1: i32, %arg2: i32) -> (i32, i32) {
    %c0_i32 = arith.constant 0 : i32
    %c0_i32_0 = arith.constant 0 : i32
    return %c0_i32, %arg1 : i32, i32
  }
  func.func @transform_4(%arg0: i32, %arg1: i32, %arg2: i32) -> (i32, i32) {
    %c0_i32 = arith.constant 0 : i32
    return %arg0, %arg1 : i32, i32
  }
}

module attributes {stable_mosaic.version = 11 : i64} {
  func.func @_conv3x3_bn_relu_kernel(%arg0: i32, %arg1: i32, %arg2: i32, %arg3: memref<1x8x8x128xbf16, #tpu.memory_space<vmem>>, %arg4: memref<1x1x8x128xbf16, #tpu.memory_space<vmem>>, %arg5: memref<1x1x8x128xbf16, #tpu.memory_space<vmem>>, %arg6: memref<3x384x128xbf16, #tpu.memory_space<vmem>>, %arg7: memref<1x128xf32, #tpu.memory_space<vmem>>, %arg8: memref<1x128xf32, #tpu.memory_space<vmem>>, %arg9: memref<1x8x8x128xbf16, #tpu.memory_space<vmem>>, %arg10: memref<10x8x384xbf16, #tpu.memory_space<vmem>>, %arg11: memref<64x128xf32, #tpu.memory_space<vmem>>) attributes {dimension_semantics = [#tpu.dimension_semantics<parallel>, #tpu.dimension_semantics<parallel>, #tpu.dimension_semantics<parallel>], iteration_bounds = array<i64: 2, 1, 1>, scalar_prefetch = 0 : i64, scratch_operands = 2 : i64, tpu.core_type = #tpu.core_type<tc>, window_params = [{transform_indices = @transform_0, window_bounds = array<i64: 1, 8, 8, 128>}, {transform_indices = @transform_1, window_bounds = array<i64: 1, 1, 8, 128>}, {transform_indices = @transform_2, window_bounds = array<i64: 1, 1, 8, 128>}, {transform_indices = @transform_3, window_bounds = array<i64: 3, 384, 128>}, {transform_indices = @transform_4, window_bounds = array<i64: 1, 128>}, {transform_indices = @transform_5, window_bounds = array<i64: 1, 128>}, {transform_indices = @transform_6, window_bounds = array<i64: 1, 8, 8, 128>}]} {
    %c0 = arith.constant 0 : index
    %c0_0 = arith.constant 0 : index
    %c0_1 = arith.constant 0 : index
    %c0_2 = arith.constant 0 : index
    %0 = vector.load %arg3[%c0, %c0_0, %c0_1, %c0_2] : memref<1x8x8x128xbf16, #tpu.memory_space<vmem>>, vector<1x8x8x128xbf16>
    %1 = vector.shape_cast %0 : vector<1x8x8x128xbf16> to vector<8x8x128xbf16>
    %cst = arith.constant 0.000000e+00 : bf16
    %2 = vector.broadcast %cst : bf16 to vector<8x1x128xbf16>
    %3 = vector.extract_strided_slice %1 {offsets = [0, 0, 0], sizes = [8, 7, 128], strides = [1, 1, 1]} : vector<8x8x128xbf16> to vector<8x7x128xbf16>
    %4 = tpu.concatenate %2, %3 in 1 : vector<8x1x128xbf16>, vector<8x7x128xbf16> -> vector<8x8x128xbf16>
    %5 = vector.extract_strided_slice %1 {offsets = [0, 1, 0], sizes = [8, 7, 128], strides = [1, 1, 1]} : vector<8x8x128xbf16> to vector<8x7x128xbf16>
    %6 = tpu.concatenate %5, %2 in 1 : vector<8x7x128xbf16>, vector<8x1x128xbf16> -> vector<8x8x128xbf16>
    %7 = tpu.concatenate %4, %1, %6 in 2 : vector<8x8x128xbf16>, vector<8x8x128xbf16>, vector<8x8x128xbf16> -> vector<8x8x384xbf16>
    %c1 = arith.constant 1 : index
    %c0_3 = arith.constant 0 : index
    %c0_4 = arith.constant 0 : index
    %8 = vector.load %arg10[%c1, %c0_3, %c0_4] : memref<10x8x384xbf16, #tpu.memory_space<vmem>>, vector<8x8x384xbf16>
    tpu.vector_store %arg10[%c1, %c0_3, %c0_4], %7 {strides = array<i32>} : memref<10x8x384xbf16, #tpu.memory_space<vmem>>, vector<8x8x384xbf16>,
    %c0_5 = arith.constant 0 : index
    %c0_6 = arith.constant 0 : index
    %c0_7 = arith.constant 0 : index
    %c0_8 = arith.constant 0 : index
    %9 = vector.load %arg4[%c0_5, %c0_6, %c0_7, %c0_8] : memref<1x1x8x128xbf16, #tpu.memory_space<vmem>>, vector<1x1x8x128xbf16>
    %10 = vector.shape_cast %9 : vector<1x1x8x128xbf16> to vector<1x8x128xbf16>
    %cst_9 = arith.constant 0.000000e+00 : bf16
    %11 = vector.broadcast %cst_9 : bf16 to vector<1x1x128xbf16>
    %12 = vector.extract_strided_slice %10 {offsets = [0, 0, 0], sizes = [1, 7, 128], strides = [1, 1, 1]} : vector<1x8x128xbf16> to vector<1x7x128xbf16>
    %13 = tpu.concatenate %11, %12 in 1 : vector<1x1x128xbf16>, vector<1x7x128xbf16> -> vector<1x8x128xbf16>
    %14 = vector.extract_strided_slice %10 {offsets = [0, 1, 0], sizes = [1, 7, 128], strides = [1, 1, 1]} : vector<1x8x128xbf16> to vector<1x7x128xbf16>
    %15 = tpu.concatenate %14, %11 in 1 : vector<1x7x128xbf16>, vector<1x1x128xbf16> -> vector<1x8x128xbf16>
    %16 = tpu.concatenate %13, %10, %15 in 2 : vector<1x8x128xbf16>, vector<1x8x128xbf16>, vector<1x8x128xbf16> -> vector<1x8x384xbf16>
    %c0_10 = arith.constant 0 : index
    %c0_11 = arith.constant 0 : index
    %c0_12 = arith.constant 0 : index
    %17 = vector.load %arg10[%c0_10, %c0_11, %c0_12] : memref<10x8x384xbf16, #tpu.memory_space<vmem>>, vector<1x8x384xbf16>
    tpu.vector_store %arg10[%c0_10, %c0_11, %c0_12], %16 {strides = array<i32>} : memref<10x8x384xbf16, #tpu.memory_space<vmem>>, vector<1x8x384xbf16>,
    %c0_13 = arith.constant 0 : index
    %c0_14 = arith.constant 0 : index
    %c0_15 = arith.constant 0 : index
    %c0_16 = arith.constant 0 : index
    %18 = vector.load %arg5[%c0_13, %c0_14, %c0_15, %c0_16] : memref<1x1x8x128xbf16, #tpu.memory_space<vmem>>, vector<1x1x8x128xbf16>
    %19 = vector.shape_cast %18 : vector<1x1x8x128xbf16> to vector<1x8x128xbf16>
    %cst_17 = arith.constant 0.000000e+00 : bf16
    %20 = vector.broadcast %cst_17 : bf16 to vector<1x1x128xbf16>
    %21 = vector.extract_strided_slice %19 {offsets = [0, 0, 0], sizes = [1, 7, 128], strides = [1, 1, 1]} : vector<1x8x128xbf16> to vector<1x7x128xbf16>
    %22 = tpu.concatenate %20, %21 in 1 : vector<1x1x128xbf16>, vector<1x7x128xbf16> -> vector<1x8x128xbf16>
    %23 = vector.extract_strided_slice %19 {offsets = [0, 1, 0], sizes = [1, 7, 128], strides = [1, 1, 1]} : vector<1x8x128xbf16> to vector<1x7x128xbf16>
    %24 = tpu.concatenate %23, %20 in 1 : vector<1x7x128xbf16>, vector<1x1x128xbf16> -> vector<1x8x128xbf16>
    %25 = tpu.concatenate %22, %19, %24 in 2 : vector<1x8x128xbf16>, vector<1x8x128xbf16>, vector<1x8x128xbf16> -> vector<1x8x384xbf16>
    %c9 = arith.constant 9 : index
    %c0_18 = arith.constant 0 : index
    %c0_19 = arith.constant 0 : index
    %26 = vector.load %arg10[%c9, %c0_18, %c0_19] : memref<10x8x384xbf16, #tpu.memory_space<vmem>>, vector<1x8x384xbf16>
    tpu.vector_store %arg10[%c9, %c0_18, %c0_19], %25 {strides = array<i32>} : memref<10x8x384xbf16, #tpu.memory_space<vmem>>, vector<1x8x384xbf16>,
    %c0_i32 = arith.constant 0 : i32
    %27 = arith.cmpi eq, %arg1, %c0_i32 : i32
    %28 = arith.extui %27 : i1 to i32
    %c0_i32_20 = arith.constant 0 : i32
    %29 = arith.cmpi ne, %28, %c0_i32_20 : i32
    scf.if %29 {
      %cst_64 = arith.constant 0.000000e+00 : bf16
      %67 = vector.broadcast %cst_64 : bf16 to vector<1x8x384xbf16>
      %c0_65 = arith.constant 0 : index
      %c0_66 = arith.constant 0 : index
      %c0_67 = arith.constant 0 : index
      %68 = vector.load %arg10[%c0_65, %c0_66, %c0_67] : memref<10x8x384xbf16, #tpu.memory_space<vmem>>, vector<1x8x384xbf16>
      tpu.vector_store %arg10[%c0_65, %c0_66, %c0_67], %67 {strides = array<i32>} : memref<10x8x384xbf16, #tpu.memory_space<vmem>>, vector<1x8x384xbf16>,
    } else {
    }
    %c0_i32_21 = arith.constant 0 : i32
    %30 = arith.cmpi eq, %arg1, %c0_i32_21 : i32
    %31 = arith.extui %30 : i1 to i32
    %c0_i32_22 = arith.constant 0 : i32
    %32 = arith.cmpi ne, %31, %c0_i32_22 : i32
    scf.if %32 {
      %cst_64 = arith.constant 0.000000e+00 : bf16
      %67 = vector.broadcast %cst_64 : bf16 to vector<1x8x384xbf16>
      %c9_65 = arith.constant 9 : index
      %c0_66 = arith.constant 0 : index
      %c0_67 = arith.constant 0 : index
      %68 = vector.load %arg10[%c9_65, %c0_66, %c0_67] : memref<10x8x384xbf16, #tpu.memory_space<vmem>>, vector<1x8x384xbf16>
      tpu.vector_store %arg10[%c9_65, %c0_66, %c0_67], %67 {strides = array<i32>} : memref<10x8x384xbf16, #tpu.memory_space<vmem>>, vector<1x8x384xbf16>,
    } else {
    }
    %c0_23 = arith.constant 0 : index
    %c0_24 = arith.constant 0 : index
    %c0_25 = arith.constant 0 : index
    %33 = vector.load %arg10[%c0_23, %c0_24, %c0_25] : memref<10x8x384xbf16, #tpu.memory_space<vmem>>, vector<8x8x384xbf16>
    %34 = vector.shape_cast %33 : vector<8x8x384xbf16> to vector<64x384xbf16>
    %c0_26 = arith.constant 0 : index
    %c0_27 = arith.constant 0 : index
    %c0_28 = arith.constant 0 : index
    %35 = vector.load %arg6[%c0_26, %c0_27, %c0_28] : memref<3x384x128xbf16, #tpu.memory_space<vmem>>, vector<1x384x128xbf16>
    %36 = vector.shape_cast %35 : vector<1x384x128xbf16> to vector<384x128xbf16>
    %cst_29 = arith.constant dense<0.000000e+00> : vector<64x128xf32>
    %37 = tpu.matmul %34, %36, %cst_29 {dimension_numbers = #tpu.dot_dimension_numbers<[1], [0], [0], [1], [0, 0, 1, 1], [], []>} : vector<64x384xbf16>, vector<384x128xbf16>, vector<64x128xf32> -> vector<64x128xf32>
    %c0_30 = arith.constant 0 : index
    %c0_31 = arith.constant 0 : index
    %38 = vector.load %arg11[%c0_30, %c0_31] : memref<64x128xf32, #tpu.memory_space<vmem>>, vector<64x128xf32>
    tpu.vector_store %arg11[%c0_30, %c0_31], %37 {strides = array<i32>} : memref<64x128xf32, #tpu.memory_space<vmem>>, vector<64x128xf32>,
    %c0_32 = arith.constant 0 : index
    %c0_33 = arith.constant 0 : index
    %39 = vector.load %arg11[%c0_32, %c0_33] : memref<64x128xf32, #tpu.memory_space<vmem>>, vector<64x128xf32>
    %c1_34 = arith.constant 1 : index
    %c0_35 = arith.constant 0 : index
    %c0_36 = arith.constant 0 : index
    %40 = vector.load %arg10[%c1_34, %c0_35, %c0_36] : memref<10x8x384xbf16, #tpu.memory_space<vmem>>, vector<8x8x384xbf16>
    %41 = vector.shape_cast %40 : vector<8x8x384xbf16> to vector<64x384xbf16>
    %c1_37 = arith.constant 1 : index
    %c0_38 = arith.constant 0 : index
    %c0_39 = arith.constant 0 : index
    %42 = vector.load %arg6[%c1_37, %c0_38, %c0_39] : memref<3x384x128xbf16, #tpu.memory_space<vmem>>, vector<1x384x128xbf16>
    %43 = vector.shape_cast %42 : vector<1x384x128xbf16> to vector<384x128xbf16>
    %cst_40 = arith.constant dense<0.000000e+00> : vector<64x128xf32>
    %44 = tpu.matmul %41, %43, %cst_40 {dimension_numbers = #tpu.dot_dimension_numbers<[1], [0], [0], [1], [0, 0, 1, 1], [], []>} : vector<64x384xbf16>, vector<384x128xbf16>, vector<64x128xf32> -> vector<64x128xf32>
    %45 = arith.addf %39, %44 : vector<64x128xf32>
    %c0_41 = arith.constant 0 : index
    %c0_42 = arith.constant 0 : index
    %46 = vector.load %arg11[%c0_41, %c0_42] : memref<64x128xf32, #tpu.memory_space<vmem>>, vector<64x128xf32>
    tpu.vector_store %arg11[%c0_41, %c0_42], %45 {strides = array<i32>} : memref<64x128xf32, #tpu.memory_space<vmem>>, vector<64x128xf32>,
    %c0_43 = arith.constant 0 : index
    %c0_44 = arith.constant 0 : index
    %47 = vector.load %arg11[%c0_43, %c0_44] : memref<64x128xf32, #tpu.memory_space<vmem>>, vector<64x128xf32>
    %c2 = arith.constant 2 : index
    %c0_45 = arith.constant 0 : index
    %c0_46 = arith.constant 0 : index
    %48 = vector.load %arg10[%c2, %c0_45, %c0_46] : memref<10x8x384xbf16, #tpu.memory_space<vmem>>, vector<8x8x384xbf16>
    %49 = vector.shape_cast %48 : vector<8x8x384xbf16> to vector<64x384xbf16>
    %c2_47 = arith.constant 2 : index
    %c0_48 = arith.constant 0 : index
    %c0_49 = arith.constant 0 : index
    %50 = vector.load %arg6[%c2_47, %c0_48, %c0_49] : memref<3x384x128xbf16, #tpu.memory_space<vmem>>, vector<1x384x128xbf16>
    %51 = vector.shape_cast %50 : vector<1x384x128xbf16> to vector<384x128xbf16>
    %cst_50 = arith.constant dense<0.000000e+00> : vector<64x128xf32>
    %52 = tpu.matmul %49, %51, %cst_50 {dimension_numbers = #tpu.dot_dimension_numbers<[1], [0], [0], [1], [0, 0, 1, 1], [], []>} : vector<64x384xbf16>, vector<384x128xbf16>, vector<64x128xf32> -> vector<64x128xf32>
    %53 = arith.addf %47, %52 : vector<64x128xf32>
    %c0_51 = arith.constant 0 : index
    %c0_52 = arith.constant 0 : index
    %54 = vector.load %arg11[%c0_51, %c0_52] : memref<64x128xf32, #tpu.memory_space<vmem>>, vector<64x128xf32>
    tpu.vector_store %arg11[%c0_51, %c0_52], %53 {strides = array<i32>} : memref<64x128xf32, #tpu.memory_space<vmem>>, vector<64x128xf32>,
    %c0_53 = arith.constant 0 : index
    %c0_54 = arith.constant 0 : index
    %55 = vector.load %arg11[%c0_53, %c0_54] : memref<64x128xf32, #tpu.memory_space<vmem>>, vector<64x128xf32>
    %c0_55 = arith.constant 0 : index
    %c0_56 = arith.constant 0 : index
    %56 = vector.load %arg7[%c0_55, %c0_56] : memref<1x128xf32, #tpu.memory_space<vmem>>, vector<1x128xf32>
    %57 = vector.broadcast %56 : vector<1x128xf32> to vector<64x128xf32>
    %58 = arith.mulf %55, %57 : vector<64x128xf32>
    %c0_57 = arith.constant 0 : index
    %c0_58 = arith.constant 0 : index
    %59 = vector.load %arg8[%c0_57, %c0_58] : memref<1x128xf32, #tpu.memory_space<vmem>>, vector<1x128xf32>
    %60 = vector.broadcast %59 : vector<1x128xf32> to vector<64x128xf32>
    %61 = arith.addf %58, %60 : vector<64x128xf32>
    %cst_59 = arith.constant 0.000000e+00 : f32
    %62 = vector.broadcast %cst_59 : f32 to vector<64x128xf32>
    %63 = arith.maximumf %61, %62 : vector<64x128xf32>
    %64 = vector.shape_cast %63 : vector<64x128xf32> to vector<1x8x8x128xf32>
    %65 = arith.truncf %64 : vector<1x8x8x128xf32> to vector<1x8x8x128xbf16>
    %c0_60 = arith.constant 0 : index
    %c0_61 = arith.constant 0 : index
    %c0_62 = arith.constant 0 : index
    %c0_63 = arith.constant 0 : index
    %66 = vector.load %arg9[%c0_60, %c0_61, %c0_62, %c0_63] : memref<1x8x8x128xbf16, #tpu.memory_space<vmem>>, vector<1x8x8x128xbf16>
    tpu.vector_store %arg9[%c0_60, %c0_61, %c0_62, %c0_63], %65 {strides = array<i32>} : memref<1x8x8x128xbf16, #tpu.memory_space<vmem>>, vector<1x8x8x128xbf16>,
    return
  }
  func.func @transform_0(%arg0: i32, %arg1: i32, %arg2: i32) -> (i32, i32, i32, i32) {
    %c0_i32 = arith.constant 0 : i32
    %c0_i32_0 = arith.constant 0 : i32
    %c0_i32_1 = arith.constant 0 : i32
    return %arg0, %arg1, %c0_i32, %c0_i32_0 : i32, i32, i32, i32
  }
  func.func @transform_1(%arg0: i32, %arg1: i32, %arg2: i32) -> (i32, i32, i32, i32) {
    %c8_i32 = arith.constant 8 : i32
    %0 = arith.muli %arg1, %c8_i32 : i32
    %c1_i32 = arith.constant 1 : i32
    %1 = arith.subi %0, %c1_i32 : i32
    %c0_i32 = arith.constant 0 : i32
    %2 = arith.maxsi %1, %c0_i32 : i32
    %c0_i32_0 = arith.constant 0 : i32
    %c0_i32_1 = arith.constant 0 : i32
    %c0_i32_2 = arith.constant 0 : i32
    return %arg0, %2, %c0_i32_0, %c0_i32_1 : i32, i32, i32, i32
  }
  func.func @transform_2(%arg0: i32, %arg1: i32, %arg2: i32) -> (i32, i32, i32, i32) {
    %c8_i32 = arith.constant 8 : i32
    %0 = arith.muli %arg1, %c8_i32 : i32
    %c8_i32_0 = arith.constant 8 : i32
    %1 = arith.addi %0, %c8_i32_0 : i32
    %c7_i32 = arith.constant 7 : i32
    %2 = arith.minsi %1, %c7_i32 : i32
    %c0_i32 = arith.constant 0 : i32
    %c0_i32_1 = arith.constant 0 : i32
    %c0_i32_2 = arith.constant 0 : i32
    return %arg0, %2, %c0_i32, %c0_i32_1 : i32, i32, i32, i32
  }
  func.func @transform_3(%arg0: i32, %arg1: i32, %arg2: i32) -> (i32, i32, i32) {
    %c0_i32 = arith.constant 0 : i32
    %c0_i32_0 = arith.constant 0 : i32
    %c0_i32_1 = arith.constant 0 : i32
    return %c0_i32, %c0_i32_0, %arg2 : i32, i32, i32
  }
  func.func @transform_4(%arg0: i32, %arg1: i32, %arg2: i32) -> (i32, i32) {
    %c0_i32 = arith.constant 0 : i32
    %c0_i32_0 = arith.constant 0 : i32
    return %c0_i32, %arg2 : i32, i32
  }
  func.func @transform_5(%arg0: i32, %arg1: i32, %arg2: i32) -> (i32, i32) {
    %c0_i32 = arith.constant 0 : i32
    %c0_i32_0 = arith.constant 0 : i32
    return %c0_i32, %arg2 : i32, i32
  }
  func.func @transform_6(%arg0: i32, %arg1: i32, %arg2: i32) -> (i32, i32, i32, i32) {
    %c0_i32 = arith.constant 0 : i32
    %c0_i32_0 = arith.constant 0 : i32
    return %arg0, %arg1, %c0_i32, %arg2 : i32, i32, i32, i32
  }
}

module attributes {stable_mosaic.version = 11 : i64} {
  func.func @_mm_bn_add_relu_kernel(%arg0: i32, %arg1: i32, %arg2: i32, %arg3: memref<128x128xbf16, #tpu.memory_space<vmem>>, %arg4: memref<128x128xbf16, #tpu.memory_space<vmem>>, %arg5: memref<1x128xf32, #tpu.memory_space<vmem>>, %arg6: memref<1x128xf32, #tpu.memory_space<vmem>>, %arg7: memref<128x128xbf16, #tpu.memory_space<vmem>>, %arg8: memref<128x128xbf16, #tpu.memory_space<vmem>>, %arg9: memref<128x128xf32, #tpu.memory_space<vmem>>) attributes {dimension_semantics = [#tpu.dimension_semantics<parallel>, #tpu.dimension_semantics<parallel>, #tpu.dimension_semantics<arbitrary>], iteration_bounds = array<i64: 1, 1, 1>, scalar_prefetch = 0 : i64, scratch_operands = 1 : i64, tpu.core_type = #tpu.core_type<tc>, window_params = [{transform_indices = @transform_0, window_bounds = array<i64: 128, 128>}, {transform_indices = @transform_1, window_bounds = array<i64: 128, 128>}, {transform_indices = @transform_2, window_bounds = array<i64: 1, 128>}, {transform_indices = @transform_3, window_bounds = array<i64: 1, 128>}, {transform_indices = @transform_4, window_bounds = array<i64: 128, 128>}, {transform_indices = @transform_5, window_bounds = array<i64: 128, 128>}]} {
    %c0_i32 = arith.constant 0 : i32
    %0 = arith.cmpi eq, %arg2, %c0_i32 : i32
    %1 = arith.extui %0 : i1 to i32
    %c0_i32_0 = arith.constant 0 : i32
    %2 = arith.cmpi ne, %1, %c0_i32_0 : i32
    scf.if %2 {
      %cst_10 = arith.constant 0.000000e+00 : f32
      %12 = vector.broadcast %cst_10 : f32 to vector<128x128xf32>
      %c0_11 = arith.constant 0 : index
      %c0_12 = arith.constant 0 : index
      %13 = vector.load %arg9[%c0_11, %c0_12] : memref<128x128xf32, #tpu.memory_space<vmem>>, vector<128x128xf32>
      tpu.vector_store %arg9[%c0_11, %c0_12], %12 {strides = array<i32>} : memref<128x128xf32, #tpu.memory_space<vmem>>, vector<128x128xf32>,
    } else {
    }
    %c0 = arith.constant 0 : index
    %c0_1 = arith.constant 0 : index
    %3 = vector.load %arg9[%c0, %c0_1] : memref<128x128xf32, #tpu.memory_space<vmem>>, vector<128x128xf32>
    %c0_2 = arith.constant 0 : index
    %c0_3 = arith.constant 0 : index
    %4 = vector.load %arg3[%c0_2, %c0_3] : memref<128x128xbf16, #tpu.memory_space<vmem>>, vector<128x128xbf16>
    %c0_4 = arith.constant 0 : index
    %c0_5 = arith.constant 0 : index
    %5 = vector.load %arg4[%c0_4, %c0_5] : memref<128x128xbf16, #tpu.memory_space<vmem>>, vector<128x128xbf16>
    %cst = arith.constant dense<0.000000e+00> : vector<128x128xf32>
    %6 = tpu.matmul %4, %5, %cst {dimension_numbers = #tpu.dot_dimension_numbers<[1], [0], [0], [1], [0, 0, 1, 1], [], []>} : vector<128x128xbf16>, vector<128x128xbf16>, vector<128x128xf32> -> vector<128x128xf32>
    %7 = arith.addf %3, %6 : vector<128x128xf32>
    %c0_6 = arith.constant 0 : index
    %c0_7 = arith.constant 0 : index
    %8 = vector.load %arg9[%c0_6, %c0_7] : memref<128x128xf32, #tpu.memory_space<vmem>>, vector<128x128xf32>
    tpu.vector_store %arg9[%c0_6, %c0_7], %7 {strides = array<i32>} : memref<128x128xf32, #tpu.memory_space<vmem>>, vector<128x128xf32>,
    %c0_i32_8 = arith.constant 0 : i32
    %9 = arith.cmpi eq, %arg2, %c0_i32_8 : i32
    %10 = arith.extui %9 : i1 to i32
    %c0_i32_9 = arith.constant 0 : i32
    %11 = arith.cmpi ne, %10, %c0_i32_9 : i32
    scf.if %11 {
      %c0_10 = arith.constant 0 : index
      %c0_11 = arith.constant 0 : index
      %12 = vector.load %arg9[%c0_10, %c0_11] : memref<128x128xf32, #tpu.memory_space<vmem>>, vector<128x128xf32>
      %c0_12 = arith.constant 0 : index
      %c0_13 = arith.constant 0 : index
      %13 = vector.load %arg5[%c0_12, %c0_13] : memref<1x128xf32, #tpu.memory_space<vmem>>, vector<1x128xf32>
      %14 = vector.broadcast %13 : vector<1x128xf32> to vector<128x128xf32>
      %15 = arith.mulf %12, %14 : vector<128x128xf32>
      %c0_14 = arith.constant 0 : index
      %c0_15 = arith.constant 0 : index
      %16 = vector.load %arg6[%c0_14, %c0_15] : memref<1x128xf32, #tpu.memory_space<vmem>>, vector<1x128xf32>
      %17 = vector.broadcast %16 : vector<1x128xf32> to vector<128x128xf32>
      %18 = arith.addf %15, %17 : vector<128x128xf32>
      %c0_16 = arith.constant 0 : index
      %c0_17 = arith.constant 0 : index
      %19 = vector.load %arg7[%c0_16, %c0_17] : memref<128x128xbf16, #tpu.memory_space<vmem>>, vector<128x128xbf16>
      %20 = arith.extf %19 : vector<128x128xbf16> to vector<128x128xf32>
      %21 = arith.addf %18, %20 : vector<128x128xf32>
      %cst_18 = arith.constant 0.000000e+00 : f32
      %22 = vector.broadcast %cst_18 : f32 to vector<128x128xf32>
      %23 = arith.maximumf %21, %22 : vector<128x128xf32>
      %24 = arith.truncf %23 : vector<128x128xf32> to vector<128x128xbf16>
      %c0_19 = arith.constant 0 : index
      %c0_20 = arith.constant 0 : index
      %25 = vector.load %arg8[%c0_19, %c0_20] : memref<128x128xbf16, #tpu.memory_space<vmem>>, vector<128x128xbf16>
      tpu.vector_store %arg8[%c0_19, %c0_20], %24 {strides = array<i32>} : memref<128x128xbf16, #tpu.memory_space<vmem>>, vector<128x128xbf16>,
    } else {
    }
    return
  }
  func.func @transform_0(%arg0: i32, %arg1: i32, %arg2: i32) -> (i32, i32) {
    %c0_i32 = arith.constant 0 : i32
    return %arg0, %arg2 : i32, i32
  }
  func.func @transform_1(%arg0: i32, %arg1: i32, %arg2: i32) -> (i32, i32) {
    %c0_i32 = arith.constant 0 : i32
    return %arg2, %arg1 : i32, i32
  }
  func.func @transform_2(%arg0: i32, %arg1: i32, %arg2: i32) -> (i32, i32) {
    %c0_i32 = arith.constant 0 : i32
    %c0_i32_0 = arith.constant 0 : i32
    return %c0_i32, %arg1 : i32, i32
  }
  func.func @transform_3(%arg0: i32, %arg1: i32, %arg2: i32) -> (i32, i32) {
    %c0_i32 = arith.constant 0 : i32
    %c0_i32_0 = arith.constant 0 : i32
    return %c0_i32, %arg1 : i32, i32
  }
  func.func @transform_4(%arg0: i32, %arg1: i32, %arg2: i32) -> (i32, i32) {
    %c0_i32 = arith.constant 0 : i32
    return %arg0, %arg1 : i32, i32
  }
  func.func @transform_5(%arg0: i32, %arg1: i32, %arg2: i32) -> (i32, i32) {
    %c0_i32 = arith.constant 0 : i32
    return %arg0, %arg1 : i32, i32
  }
}

</mosaic_0001>

<llo_original>
// kernel: bottleneck_forward.3
$region0: #{bottleneck_forward.3}
  #allocation0 [shape = 'u32[]', space=smem, size = 0x4, offset = 0x4, fixed_abs, tag = 'smem constant byte address 0x4 - core index']
  #allocation1 [shape = 'u32[144,128]{1,0:T(1,128)}', space=vmem, size = 0x12000, scoped, tag = 'internal scratch']
  #allocation2 [shape = 'f32[128,128]{1,0:T(8,128)}', space=vmem, size = 0x10000, scoped, tag = 'scratch operand']
  %s0 = inlined_call_operand.vmem [shape: bf16[128,128], index: 0, kind: input, shape index: {}]
  %s1 = inlined_call_operand.vmem [shape: bf16[128,128], index: 1, kind: input, shape index: {}]
  %s2 = inlined_call_operand.vmem [shape: f32[1,128], index: 2, kind: input, shape index: {}]
  %s3 = inlined_call_operand.vmem [shape: f32[1,128], index: 3, kind: input, shape index: {}]
  %s4 = inlined_call_operand.vmem [shape: bf16[128,128], index: 4, kind: output, shape index: {}]
  %s5 = sld [smem:[#allocation0]]
  $region34: #{bottleneck_forward.3} parent=0
    _
  %s7 = ssub.s32 1, %s5
  %s8 = scalar_select 0, %s7, %s5
  // Predicated region
  $region2: #{bottleneck_forward.3} parent=0 // pred_check
    _
  $region3: #{bottleneck_forward.3} parent=0 // pred_check_branch
    %10 = sbr.rel (0) target = $region5
  $region4: #{bottleneck_forward.3} parent=0 // pred_region
    _
  $region5: #{bottleneck_forward.3} parent=0 // pred_fallthru
    _
  // Predicated region
  $region6: #{bottleneck_forward.3} parent=0 // pred_check
    _
  $region7: #{bottleneck_forward.3} parent=0 // pred_check_branch
    %12 = sbr.rel (0) target = $region9
  $region8: #{bottleneck_forward.3} parent=0 // pred_region
    _
  $region9: #{bottleneck_forward.3} parent=0 // pred_fallthru
    _
  // Predicated region
  $region10: #{bottleneck_forward.3} parent=0 // pred_check
    _
  $region11: #{bottleneck_forward.3} parent=0 // pred_check_branch
    %14 = sbr.rel (0) target = $region13
  $region12: #{bottleneck_forward.3} parent=0 // pred_region
    _
  $region13: #{bottleneck_forward.3} parent=0 // pred_fallthru
    _
  // Predicated region
  $region14: #{bottleneck_forward.3} parent=0 // pred_check
    _
  $region15: #{bottleneck_forward.3} parent=0 // pred_check_branch
    %16 = sbr.rel (0) target = $region17
  $region16: #{bottleneck_forward.3} parent=0 // pred_region
    _
  $region17: #{bottleneck_forward.3} parent=0 // pred_fallthru
    _
  %p18 = scmp.eq.s32.totalorder 0, 0
  // Predicated region
  $region18: #{bottleneck_forward.3} parent=0 // pred_check
    %p19 = pneg %p18
  $region19: #{bottleneck_forward.3} parent=0 // pred_check_branch
    %21 = sbr.rel (%p19) target = $region21
  $region20: #{bottleneck_forward.3} parent=0 // pred_region
    %22 = vst [vmem:[#allocation2] sm:$0xff] 0.0
    %23 = vst [vmem:[#allocation2 + $0x8] sm:$0xff] 0.0
    %24 = vst [vmem:[#allocation2 + $0x10] sm:$0xff] 0.0
    %25 = vst [vmem:[#allocation2 + $0x18] sm:$0xff] 0.0
    %26 = vst [vmem:[#allocation2 + $0x20] sm:$0xff] 0.0
    %27 = vst [vmem:[#allocation2 + $0x28] sm:$0xff] 0.0
    %28 = vst [vmem:[#allocation2 + $0x30] sm:$0xff] 0.0
    %29 = vst [vmem:[#allocation2 + $0x38] sm:$0xff] 0.0
    %30 = vst [vmem:[#allocation2 + $0x40] sm:$0xff] 0.0
    %31 = vst [vmem:[#allocation2 + $0x48] sm:$0xff] 0.0
    %32 = vst [vmem:[#allocation2 + $0x50] sm:$0xff] 0.0
    %33 = vst [vmem:[#allocation2 + $0x58] sm:$0xff] 0.0
    %34 = vst [vmem:[#allocation2 + $0x60] sm:$0xff] 0.0
    %35 = vst [vmem:[#allocation2 + $0x68] sm:$0xff] 0.0
    %36 = vst [vmem:[#allocation2 + $0x70] sm:$0xff] 0.0
    %37 = vst [vmem:[#allocation2 + $0x78] sm:$0xff] 0.0
  $region21: #{bottleneck_forward.3} parent=0 // pred_fallthru
    _
  %v38 = vld [vmem:[#allocation2] sm:$0xff]
  %v39 = vld [vmem:[#allocation2 + $0x8] sm:$0xff]
  %v40 = vld [vmem:[#allocation2 + $0x10] sm:$0xff]
  %v41 = vld [vmem:[#allocation2 + $0x18] sm:$0xff]
  %v42 = vld [vmem:[#allocation2 + $0x20] sm:$0xff]
  %v43 = vld [vmem:[#allocation2 + $0x28] sm:$0xff]
  %v44 = vld [vmem:[#allocation2 + $0x30] sm:$0xff]
  %v45 = vld [vmem:[#allocation2 + $0x38] sm:$0xff]
  %v46 = vld [vmem:[#allocation2 + $0x40] sm:$0xff]
  %v47 = vld [vmem:[#allocation2 + $0x48] sm:$0xff]
  %v48 = vld [vmem:[#allocation2 + $0x50] sm:$0xff]
  %v49 = vld [vmem:[#allocation2 + $0x58] sm:$0xff]
  %v50 = vld [vmem:[#allocation2 + $0x60] sm:$0xff]
  %v51 = vld [vmem:[#allocation2 + $0x68] sm:$0xff]
  %v52 = vld [vmem:[#allocation2 + $0x70] sm:$0xff]
  %v53 = vld [vmem:[#allocation2 + $0x78] sm:$0xff]
  %v54 = vld [vmem:[%s0] sm:$0xf]
  %v55 = vld [vmem:[%s0 + $0x4] sm:$0xf]
  %v56 = vld [vmem:[%s0 + $0x8] sm:$0xf]
  %v57 = vld [vmem:[%s0 + $0xc] sm:$0xf]
  %v58 = vld [vmem:[%s0 + $0x10] sm:$0xf]
  %v59 = vld [vmem:[%s0 + $0x14] sm:$0xf]
  %v60 = vld [vmem:[%s0 + $0x18] sm:$0xf]
  %v61 = vld [vmem:[%s0 + $0x1c] sm:$0xf]
  %v62 = vld [vmem:[%s0 + $0x20] sm:$0xf]
  %v63 = vld [vmem:[%s0 + $0x24] sm:$0xf]
  %v64 = vld [vmem:[%s0 + $0x28] sm:$0xf]
  %v65 = vld [vmem:[%s0 + $0x2c] sm:$0xf]
  %v66 = vld [vmem:[%s0 + $0x30] sm:$0xf]
  %v67 = vld [vmem:[%s0 + $0x34] sm:$0xf]
  %v68 = vld [vmem:[%s0 + $0x38] sm:$0xf]
  %v69 = vld [vmem:[%s0 + $0x3c] sm:$0xf]
  %v70 = vld [vmem:[%s1] sm:$0xf]
  %v71 = vld [vmem:[%s1 + $0x4] sm:$0xf]
  %v72 = vld [vmem:[%s1 + $0x8] sm:$0xf]
  %v73 = vld [vmem:[%s1 + $0xc] sm:$0xf]
  %v74 = vld [vmem:[%s1 + $0x10] sm:$0xf]
  %v75 = vld [vmem:[%s1 + $0x14] sm:$0xf]
  %v76 = vld [vmem:[%s1 + $0x18] sm:$0xf]
  %v77 = vld [vmem:[%s1 + $0x1c] sm:$0xf]
  %v78 = vld [vmem:[%s1 + $0x20] sm:$0xf]
  %v79 = vld [vmem:[%s1 + $0x24] sm:$0xf]
  %v80 = vld [vmem:[%s1 + $0x28] sm:$0xf]
  %v81 = vld [vmem:[%s1 + $0x2c] sm:$0xf]
  %v82 = vld [vmem:[%s1 + $0x30] sm:$0xf]
  %v83 = vld [vmem:[%s1 + $0x34] sm:$0xf]
  %v84 = vld [vmem:[%s1 + $0x38] sm:$0xf]
  %v85 = vld [vmem:[%s1 + $0x3c] sm:$0xf]
  %v102 = vunpack.c.l.b16 %v54
  %v103 = vunpack.c.l.b16 %v55
  %v104 = vunpack.c.l.b16 %v56
  %v105 = vunpack.c.l.b16 %v57
  %v106 = vunpack.c.l.b16 %v58
  %v107 = vunpack.c.l.b16 %v59
  %v108 = vunpack.c.l.b16 %v60
  %v109 = vunpack.c.l.b16 %v61
  %v110 = vunpack.c.l.b16 %v62
  %v111 = vunpack.c.l.b16 %v63
  %v112 = vunpack.c.l.b16 %v64
  %v113 = vunpack.c.l.b16 %v65
  %v114 = vunpack.c.l.b16 %v66
  %v115 = vunpack.c.l.b16 %v67
  %v116 = vunpack.c.l.b16 %v68
  %v117 = vunpack.c.l.b16 %v69
  %v118 = vpack.c.b16 %v103, %v102
  %v119 = vpack.c.b16 %v105, %v104
  %v120 = vpack.c.b16 %v107, %v106
  %v121 = vpack.c.b16 %v109, %v108
  %v122 = vpack.c.b16 %v111, %v110
  %v123 = vpack.c.b16 %v113, %v112
  %v124 = vpack.c.b16 %v115, %v114
  %v125 = vpack.c.b16 %v117, %v116
  %v150 = vunpack.c.l.b16 %v70
  %v151 = vunpack.c.l.b16 %v71
  %v152 = vunpack.c.l.b16 %v72
  %v153 = vunpack.c.l.b16 %v73
  %v154 = vunpack.c.l.b16 %v74
  %v155 = vunpack.c.l.b16 %v75
  %v156 = vunpack.c.l.b16 %v76
  %v157 = vunpack.c.l.b16 %v77
  %v158 = vunpack.c.l.b16 %v78
  %v159 = vunpack.c.l.b16 %v79
  %v160 = vunpack.c.l.b16 %v80
  %v161 = vunpack.c.l.b16 %v81
  %v162 = vunpack.c.l.b16 %v82
  %v163 = vunpack.c.l.b16 %v83
  %v164 = vunpack.c.l.b16 %v84
  %v165 = vunpack.c.l.b16 %v85
  %v166 = vpack.c.b16 %v151, %v150
  %v167 = vpack.c.b16 %v153, %v152
  %v168 = vpack.c.b16 %v155, %v154
  %v169 = vpack.c.b16 %v157, %v156
  %v170 = vpack.c.b16 %v159, %v158
  %v171 = vpack.c.b16 %v161, %v160
  %v172 = vpack.c.b16 %v163, %v162
  %v173 = vpack.c.b16 %v165, %v164
  %182 = vmatprep.subr.bf16.mxu0 0
  %183 = vmatpush1.bf16.msra.mxu0 %v166
  %184 = vmatprep.subr.bf16.mxu0 0
  %185 = vmatpush1.bf16.msra.mxu0 %v167
  %186 = vmatprep.subr.bf16.mxu0 0
  %187 = vmatpush1.bf16.msra.mxu0 %v168
  %188 = vmatprep.subr.bf16.mxu0 0
  %189 = vmatpush1.bf16.msra.mxu0 %v169
  %190 = vmatprep.subr.bf16.mxu0 0
  %191 = vmatpush1.bf16.msra.mxu0 %v170
  %192 = vmatprep.subr.bf16.mxu0 0
  %193 = vmatpush1.bf16.msra.mxu0 %v171
  %194 = vmatprep.subr.bf16.mxu0 0
  %195 = vmatpush1.bf16.msra.mxu0 %v172
  %196 = vmatprep.subr.bf16.mxu0 0
  %197 = vmatpush1.bf16.msra.mxu0 %v173
  %198 = vmatprep.subr.bf16.mxu0 0
  %199 = vmatpush1.bf16.msra.mxu0 0
  %200 = vmatprep.subr.bf16.mxu0 0
  %201 = vmatpush1.bf16.msra.mxu0 0
  %202 = vmatprep.subr.bf16.mxu0 0
  %203 = vmatpush1.bf16.msra.mxu0 0
  %204 = vmatprep.subr.bf16.mxu0 0
  %205 = vmatpush1.bf16.msra.mxu0 0
  %206 = vmatprep.subr.bf16.mxu0 0
  %207 = vmatpush1.bf16.msra.mxu0 0
  %208 = vmatprep.subr.bf16.mxu0 0
  %209 = vmatpush1.bf16.msra.mxu0 0
  %210 = vmatprep.subr.bf16.mxu0 0
  %211 = vmatpush1.bf16.msra.mxu0 0
  %212 = vmatprep.subr.bf16.mxu0 0
  %213 = vmatpush1.bf16.msra.mxu0 0
  %214 = vmatprep.mubr.bf16.mxu0 0
  %215 = vmatmul.mubr.bf16.gmra.mrb[0].mxu0 %v118
  %v216 = vpop.f32.mrb[0].mxu0
  %v217 = vadd.f32 0.0, %v216
  %v218 = vpop.f32.mrb[0].mxu0
  %v219 = vpop.f32.mrb[0].mxu0
  %v220 = vadd.f32 0.0, %v219
  %v221 = vpop.f32.mrb[0].mxu0
  %222 = vmatprep.mubr.bf16.mxu0 0
  %223 = vmatmul.mubr.bf16.gmra.mrb[0].mxu0 %v119
  %v224 = vpop.f32.mrb[0].mxu0
  %v225 = vadd.f32 0.0, %v224
  %v226 = vpop.f32.mrb[0].mxu0
  %v227 = vpop.f32.mrb[0].mxu0
  %v228 = vadd.f32 0.0, %v227
  %v229 = vpop.f32.mrb[0].mxu0
  %230 = vmatprep.mubr.bf16.mxu0 0
  %231 = vmatmul.mubr.bf16.gmra.mrb[0].mxu0 %v120
  %v232 = vpop.f32.mrb[0].mxu0
  %v233 = vadd.f32 0.0, %v232
  %v234 = vpop.f32.mrb[0].mxu0
  %v235 = vpop.f32.mrb[0].mxu0
  %v236 = vadd.f32 0.0, %v235
  %v237 = vpop.f32.mrb[0].mxu0
  %238 = vmatprep.mubr.bf16.mxu0 0
  %239 = vmatmul.mubr.bf16.gmra.mrb[0].mxu0 %v121
  %v240 = vpop.f32.mrb[0].mxu0
  %v241 = vadd.f32 0.0, %v240
  %v242 = vpop.f32.mrb[0].mxu0
  %v243 = vpop.f32.mrb[0].mxu0
  %v244 = vadd.f32 0.0, %v243
  %v245 = vpop.f32.mrb[0].mxu0
  %246 = vmatprep.mubr.bf16.mxu0 0
  %247 = vmatmul.mubr.bf16.gmra.mrb[0].mxu0 %v122
  %v248 = vpop.f32.mrb[0].mxu0
  %v249 = vadd.f32 0.0, %v248
  %v250 = vpop.f32.mrb[0].mxu0
  %v251 = vpop.f32.mrb[0].mxu0
  %v252 = vadd.f32 0.0, %v251
  %v253 = vpop.f32.mrb[0].mxu0
  %254 = vmatprep.mubr.bf16.mxu0 0
  %255 = vmatmul.mubr.bf16.gmra.mrb[0].mxu0 %v123
  %v256 = vpop.f32.mrb[0].mxu0
  %v257 = vadd.f32 0.0, %v256
  %v258 = vpop.f32.mrb[0].mxu0
  %v259 = vpop.f32.mrb[0].mxu0
  %v260 = vadd.f32 0.0, %v259
  %v261 = vpop.f32.mrb[0].mxu0
  %262 = vmatprep.mubr.bf16.mxu0 0
  %263 = vmatmul.mubr.bf16.gmra.mrb[0].mxu0 %v124
  %v264 = vpop.f32.mrb[0].mxu0
  %v265 = vadd.f32 0.0, %v264
  %v266 = vpop.f32.mrb[0].mxu0
  %v267 = vpop.f32.mrb[0].mxu0
  %v268 = vadd.f32 0.0, %v267
  %v269 = vpop.f32.mrb[0].mxu0
  %270 = vmatprep.mubr.bf16.mxu0 0
  %271 = vmatmul.mubr.bf16.gmra.mrb[0].mxu0 %v125
  %v272 = vpop.f32.mrb[0].mxu0
  %v273 = vadd.f32 0.0, %v272
  %v274 = vpop.f32.mrb[0].mxu0
  %v275 = vpop.f32.mrb[0].mxu0
  %v276 = vadd.f32 0.0, %v275
  %v277 = vpop.f32.mrb[0].mxu0
  %278 = vdwg.mxu0
  %v279 = vadd.f32 %v38, %v217
  %v280 = vadd.f32 %v39, %v220
  %v281 = vadd.f32 %v40, %v225
  %v282 = vadd.f32 %v41, %v228
  %v283 = vadd.f32 %v42, %v233
  %v284 = vadd.f32 %v43, %v236
  %v285 = vadd.f32 %v44, %v241
  %v286 = vadd.f32 %v45, %v244
  %v287 = vadd.f32 %v46, %v249
  %v288 = vadd.f32 %v47, %v252
  %v289 = vadd.f32 %v48, %v257
  %v290 = vadd.f32 %v49, %v260
  %v291 = vadd.f32 %v50, %v265
  %v292 = vadd.f32 %v51, %v268
  %v293 = vadd.f32 %v52, %v273
  %v294 = vadd.f32 %v53, %v276
  %295 = vst [vmem:[#allocation2] sm:$0xff] %v279
  %296 = vst [vmem:[#allocation2 + $0x8] sm:$0xff] %v280
  %297 = vst [vmem:[#allocation2 + $0x10] sm:$0xff] %v281
  %298 = vst [vmem:[#allocation2 + $0x18] sm:$0xff] %v282
  %299 = vst [vmem:[#allocation2 + $0x20] sm:$0xff] %v283
  %300 = vst [vmem:[#allocation2 + $0x28] sm:$0xff] %v284
  %301 = vst [vmem:[#allocation2 + $0x30] sm:$0xff] %v285
  %302 = vst [vmem:[#allocation2 + $0x38] sm:$0xff] %v286
  %303 = vst [vmem:[#allocation2 + $0x40] sm:$0xff] %v287
  %304 = vst [vmem:[#allocation2 + $0x48] sm:$0xff] %v288
  %305 = vst [vmem:[#allocation2 + $0x50] sm:$0xff] %v289
  %306 = vst [vmem:[#allocation2 + $0x58] sm:$0xff] %v290
  %307 = vst [vmem:[#allocation2 + $0x60] sm:$0xff] %v291
  %308 = vst [vmem:[#allocation2 + $0x68] sm:$0xff] %v292
  %309 = vst [vmem:[#allocation2 + $0x70] sm:$0xff] %v293
  %310 = vst [vmem:[#allocation2 + $0x78] sm:$0xff] %v294
  // Predicated region
  $region22: #{bottleneck_forward.3} parent=0 // pred_check
    %p311 = pneg %p18
  $region23: #{bottleneck_forward.3} parent=0 // pred_check_branch
    %313 = sbr.rel (%p311) target = $region25
  $region24: #{bottleneck_forward.3} parent=0 // pred_region
    %v314 = vld [vmem:[#allocation2] sm:$0xff]
    %v315 = vld [vmem:[#allocation2 + $0x8] sm:$0xff]
    %v316 = vld [vmem:[#allocation2 + $0x10] sm:$0xff]
    %v317 = vld [vmem:[#allocation2 + $0x18] sm:$0xff]
    %v318 = vld [vmem:[#allocation2 + $0x20] sm:$0xff]
    %v319 = vld [vmem:[#allocation2 + $0x28] sm:$0xff]
    %v320 = vld [vmem:[#allocation2 + $0x30] sm:$0xff]
    %v321 = vld [vmem:[#allocation2 + $0x38] sm:$0xff]
    %v322 = vld [vmem:[#allocation2 + $0x40] sm:$0xff]
    %v323 = vld [vmem:[#allocation2 + $0x48] sm:$0xff]
    %v324 = vld [vmem:[#allocation2 + $0x50] sm:$0xff]
    %v325 = vld [vmem:[#allocation2 + $0x58] sm:$0xff]
    %v326 = vld [vmem:[#allocation2 + $0x60] sm:$0xff]
    %v327 = vld [vmem:[#allocation2 + $0x68] sm:$0xff]
    %v328 = vld [vmem:[#allocation2 + $0x70] sm:$0xff]
    %v329 = vld [vmem:[#allocation2 + $0x78] sm:$0xff]
    %v330 = vld [vmem:[%s2] sm:$0x1]
    %v332 = vlaneseq
    %v333 = vshrl.u32 %v332, 7
    %v334 = vsub.s32 0, %v333
    %v335 = vrot.slane %v330, %v334
    %v337 = vmul.f32 %v314, %v335
    %v338 = vmul.f32 %v315, %v335
    %v339 = vmul.f32 %v316, %v335
    %v340 = vmul.f32 %v317, %v335
    %v341 = vmul.f32 %v318, %v335
    %v342 = vmul.f32 %v319, %v335
    %v343 = vmul.f32 %v320, %v335
    %v344 = vmul.f32 %v321, %v335
    %v345 = vmul.f32 %v322, %v335
    %v346 = vmul.f32 %v323, %v335
    %v347 = vmul.f32 %v324, %v335
    %v348 = vmul.f32 %v325, %v335
    %v349 = vmul.f32 %v326, %v335
    %v350 = vmul.f32 %v327, %v335
    %v351 = vmul.f32 %v328, %v335
    %v352 = vmul.f32 %v329, %v335
    %v353 = vld [vmem:[%s3] sm:$0x1]
    %v355 = vlaneseq
    %v356 = vshrl.u32 %v355, 7
    %v357 = vsub.s32 0, %v356
    %v358 = vrot.slane %v353, %v357
    %v360 = vadd.f32 %v337, %v358
    %v361 = vadd.f32 %v338, %v358
    %v362 = vadd.f32 %v339, %v358
    %v363 = vadd.f32 %v340, %v358
    %v364 = vadd.f32 %v341, %v358
    %v365 = vadd.f32 %v342, %v358
    %v366 = vadd.f32 %v343, %v358
    %v367 = vadd.f32 %v344, %v358
    %v368 = vadd.f32 %v345, %v358
    %v369 = vadd.f32 %v346, %v358
    %v370 = vadd.f32 %v347, %v358
    %v371 = vadd.f32 %v348, %v358
    %v372 = vadd.f32 %v349, %v358
    %v373 = vadd.f32 %v350, %v358
    %v374 = vadd.f32 %v351, %v358
    %v375 = vadd.f32 %v352, %v358
    %v376 = vmax.f32 %v360, 0.0
    %v377 = vmax.f32 %v361, 0.0
    %v378 = vmax.f32 %v362, 0.0
    %v379 = vmax.f32 %v363, 0.0
    %v380 = vmax.f32 %v364, 0.0
    %v381 = vmax.f32 %v365, 0.0
    %v382 = vmax.f32 %v366, 0.0
    %v383 = vmax.f32 %v367, 0.0
    %v384 = vmax.f32 %v368, 0.0
    %v385 = vmax.f32 %v369, 0.0
    %v386 = vmax.f32 %v370, 0.0
    %v387 = vmax.f32 %v371, 0.0
    %v388 = vmax.f32 %v372, 0.0
    %v389 = vmax.f32 %v373, 0.0
    %v390 = vmax.f32 %v374, 0.0
    %v391 = vmax.f32 %v375, 0.0
    %v392 = vpack.c.bf16 %v377, %v376
    %v393 = vpack.c.bf16 %v379, %v378
    %v394 = vpack.c.bf16 %v381, %v380
    %v395 = vpack.c.bf16 %v383, %v382
    %v396 = vpack.c.bf16 %v385, %v384
    %v397 = vpack.c.bf16 %v387, %v386
    %v398 = vpack.c.bf16 %v389, %v388
    %v399 = vpack.c.bf16 %v391, %v390
    %v408 = vunpack.c.l.b16 %v392
    %v409 = vunpack.c.h.b16 %v392
    %v410 = vunpack.c.l.b16 %v393
    %v411 = vunpack.c.h.b16 %v393
    %v412 = vunpack.c.l.b16 %v394
    %v413 = vunpack.c.h.b16 %v394
    %v414 = vunpack.c.l.b16 %v395
    %v415 = vunpack.c.h.b16 %v395
    %v416 = vunpack.c.l.b16 %v396
    %v417 = vunpack.c.h.b16 %v396
    %v418 = vunpack.c.l.b16 %v397
    %v419 = vunpack.c.h.b16 %v397
    %v420 = vunpack.c.l.b16 %v398
    %v421 = vunpack.c.h.b16 %v398
    %v422 = vunpack.c.l.b16 %v399
    %v423 = vunpack.c.h.b16 %v399
    %v424 = vpack.c.b16 %v408, %v408
    %v425 = vpack.c.b16 %v409, %v409
    %v426 = vpack.c.b16 %v410, %v410
    %v427 = vpack.c.b16 %v411, %v411
    %v428 = vpack.c.b16 %v412, %v412
    %v429 = vpack.c.b16 %v413, %v413
    %v430 = vpack.c.b16 %v414, %v414
    %v431 = vpack.c.b16 %v415, %v415
    %v432 = vpack.c.b16 %v416, %v416
    %v433 = vpack.c.b16 %v417, %v417
    %v434 = vpack.c.b16 %v418, %v418
    %v435 = vpack.c.b16 %v419, %v419
    %v436 = vpack.c.b16 %v420, %v420
    %v437 = vpack.c.b16 %v421, %v421
    %v438 = vpack.c.b16 %v422, %v422
    %v439 = vpack.c.b16 %v423, %v423
    %456 = vst [vmem:[%s4] sm:$0xf] %v424
    %457 = vst [vmem:[%s4 + $0x4] sm:$0xf] %v425
    %458 = vst [vmem:[%s4 + $0x8] sm:$0xf] %v426
    %459 = vst [vmem:[%s4 + $0xc] sm:$0xf] %v427
    %460 = vst [vmem:[%s4 + $0x10] sm:$0xf] %v428
    %461 = vst [vmem:[%s4 + $0x14] sm:$0xf] %v429
    %462 = vst [vmem:[%s4 + $0x18] sm:$0xf] %v430
    %463 = vst [vmem:[%s4 + $0x1c] sm:$0xf] %v431
    %464 = vst [vmem:[%s4 + $0x20] sm:$0xf] %v432
    %465 = vst [vmem:[%s4 + $0x24] sm:$0xf] %v433
    %466 = vst [vmem:[%s4 + $0x28] sm:$0xf] %v434
    %467 = vst [vmem:[%s4 + $0x2c] sm:$0xf] %v435
    %468 = vst [vmem:[%s4 + $0x30] sm:$0xf] %v436
    %469 = vst [vmem:[%s4 + $0x34] sm:$0xf] %v437
    %470 = vst [vmem:[%s4 + $0x38] sm:$0xf] %v438
    %471 = vst [vmem:[%s4 + $0x3c] sm:$0xf] %v439
  $region25: #{bottleneck_forward.3} parent=0 // pred_fallthru
    _
  // Predicated region
  $region26: #{bottleneck_forward.3} parent=0 // pred_check
    _
  $region27: #{bottleneck_forward.3} parent=0 // pred_check_branch
    %473 = sbr.rel (0) target = $region29
  $region28: #{bottleneck_forward.3} parent=0 // pred_region
    _
  $region29: #{bottleneck_forward.3} parent=0 // pred_fallthru
    _
  // Predicated region
  $region30: #{bottleneck_forward.3} parent=0 // pred_check
    _
  $region31: #{bottleneck_forward.3} parent=0 // pred_check_branch
    %475 = sbr.rel (0) target = $region33
  $region32: #{bottleneck_forward.3} parent=0 // pred_region
    _
  $region33: #{bottleneck_forward.3} parent=0 // pred_fallthru
    _

// kernel: bottleneck_forward.5
$region0: #{bottleneck_forward.5}
  #allocation0 [shape = 'u32[]', space=smem, size = 0x4, offset = 0x4, fixed_abs, tag = 'smem constant byte address 0x4 - core index']
  #allocation1 [shape = 'u32[144,128]{1,0:T(1,128)}', space=vmem, size = 0x12000, scoped, tag = 'internal scratch']
  #allocation2 [shape = 'f32[128,128]{1,0:T(8,128)}', space=vmem, size = 0x10000, scoped, tag = 'scratch operand']
  %s0 = inlined_call_operand.vmem [shape: bf16[128,128], index: 0, kind: input, shape index: {}]
  %s1 = inlined_call_operand.vmem [shape: bf16[128,128], index: 1, kind: input, shape index: {}]
  %s2 = inlined_call_operand.vmem [shape: f32[1,128], index: 2, kind: input, shape index: {}]
  %s3 = inlined_call_operand.vmem [shape: f32[1,128], index: 3, kind: input, shape index: {}]
  %s4 = inlined_call_operand.vmem [shape: bf16[128,128], index: 4, kind: input, shape index: {}]
  %s5 = inlined_call_operand.vmem [shape: bf16[128,128], index: 5, kind: output, shape index: {}]
  %s6 = sld [smem:[#allocation0]]
  $region38: #{bottleneck_forward.5} parent=0
    _
  %s8 = ssub.s32 1, %s6
  %s9 = scalar_select 0, %s8, %s6
  // Predicated region
  $region2: #{bottleneck_forward.5} parent=0 // pred_check
    _
  $region3: #{bottleneck_forward.5} parent=0 // pred_check_branch
    %11 = sbr.rel (0) target = $region5
  $region4: #{bottleneck_forward.5} parent=0 // pred_region
    _
  $region5: #{bottleneck_forward.5} parent=0 // pred_fallthru
    _
  // Predicated region
  $region6: #{bottleneck_forward.5} parent=0 // pred_check
    _
  $region7: #{bottleneck_forward.5} parent=0 // pred_check_branch
    %13 = sbr.rel (0) target = $region9
  $region8: #{bottleneck_forward.5} parent=0 // pred_region
    _
  $region9: #{bottleneck_forward.5} parent=0 // pred_fallthru
    _
  // Predicated region
  $region10: #{bottleneck_forward.5} parent=0 // pred_check
    _
  $region11: #{bottleneck_forward.5} parent=0 // pred_check_branch
    %15 = sbr.rel (0) target = $region13
  $region12: #{bottleneck_forward.5} parent=0 // pred_region
    _
  $region13: #{bottleneck_forward.5} parent=0 // pred_fallthru
    _
  // Predicated region
  $region14: #{bottleneck_forward.5} parent=0 // pred_check
    _
  $region15: #{bottleneck_forward.5} parent=0 // pred_check_branch
    %17 = sbr.rel (0) target = $region17
  $region16: #{bottleneck_forward.5} parent=0 // pred_region
    _
  $region17: #{bottleneck_forward.5} parent=0 // pred_fallthru
    _
  // Predicated region
  $region18: #{bottleneck_forward.5} parent=0 // pred_check
    _
  $region19: #{bottleneck_forward.5} parent=0 // pred_check_branch
    %19 = sbr.rel (0) target = $region21
  $region20: #{bottleneck_forward.5} parent=0 // pred_region
    _
  $region21: #{bottleneck_forward.5} parent=0 // pred_fallthru
    _
  %p21 = scmp.eq.s32.totalorder 0, 0
  // Predicated region
  $region22: #{bottleneck_forward.5} parent=0 // pred_check
    %p22 = pneg %p21
  $region23: #{bottleneck_forward.5} parent=0 // pred_check_branch
    %24 = sbr.rel (%p22) target = $region25
  $region24: #{bottleneck_forward.5} parent=0 // pred_region
    %25 = vst [vmem:[#allocation2] sm:$0xff] 0.0
    %26 = vst [vmem:[#allocation2 + $0x8] sm:$0xff] 0.0
    %27 = vst [vmem:[#allocation2 + $0x10] sm:$0xff] 0.0
    %28 = vst [vmem:[#allocation2 + $0x18] sm:$0xff] 0.0
    %29 = vst [vmem:[#allocation2 + $0x20] sm:$0xff] 0.0
    %30 = vst [vmem:[#allocation2 + $0x28] sm:$0xff] 0.0
    %31 = vst [vmem:[#allocation2 + $0x30] sm:$0xff] 0.0
    %32 = vst [vmem:[#allocation2 + $0x38] sm:$0xff] 0.0
    %33 = vst [vmem:[#allocation2 + $0x40] sm:$0xff] 0.0
    %34 = vst [vmem:[#allocation2 + $0x48] sm:$0xff] 0.0
    %35 = vst [vmem:[#allocation2 + $0x50] sm:$0xff] 0.0
    %36 = vst [vmem:[#allocation2 + $0x58] sm:$0xff] 0.0
    %37 = vst [vmem:[#allocation2 + $0x60] sm:$0xff] 0.0
    %38 = vst [vmem:[#allocation2 + $0x68] sm:$0xff] 0.0
    %39 = vst [vmem:[#allocation2 + $0x70] sm:$0xff] 0.0
    %40 = vst [vmem:[#allocation2 + $0x78] sm:$0xff] 0.0
  $region25: #{bottleneck_forward.5} parent=0 // pred_fallthru
    _
  %v41 = vld [vmem:[#allocation2] sm:$0xff]
  %v42 = vld [vmem:[#allocation2 + $0x8] sm:$0xff]
  %v43 = vld [vmem:[#allocation2 + $0x10] sm:$0xff]
  %v44 = vld [vmem:[#allocation2 + $0x18] sm:$0xff]
  %v45 = vld [vmem:[#allocation2 + $0x20] sm:$0xff]
  %v46 = vld [vmem:[#allocation2 + $0x28] sm:$0xff]
  %v47 = vld [vmem:[#allocation2 + $0x30] sm:$0xff]
  %v48 = vld [vmem:[#allocation2 + $0x38] sm:$0xff]
  %v49 = vld [vmem:[#allocation2 + $0x40] sm:$0xff]
  %v50 = vld [vmem:[#allocation2 + $0x48] sm:$0xff]
  %v51 = vld [vmem:[#allocation2 + $0x50] sm:$0xff]
  %v52 = vld [vmem:[#allocation2 + $0x58] sm:$0xff]
  %v53 = vld [vmem:[#allocation2 + $0x60] sm:$0xff]
  %v54 = vld [vmem:[#allocation2 + $0x68] sm:$0xff]
  %v55 = vld [vmem:[#allocation2 + $0x70] sm:$0xff]
  %v56 = vld [vmem:[#allocation2 + $0x78] sm:$0xff]
  %v57 = vld [vmem:[%s0] sm:$0xf]
  %v58 = vld [vmem:[%s0 + $0x4] sm:$0xf]
  %v59 = vld [vmem:[%s0 + $0x8] sm:$0xf]
  %v60 = vld [vmem:[%s0 + $0xc] sm:$0xf]
  %v61 = vld [vmem:[%s0 + $0x10] sm:$0xf]
  %v62 = vld [vmem:[%s0 + $0x14] sm:$0xf]
  %v63 = vld [vmem:[%s0 + $0x18] sm:$0xf]
  %v64 = vld [vmem:[%s0 + $0x1c] sm:$0xf]
  %v65 = vld [vmem:[%s0 + $0x20] sm:$0xf]
  %v66 = vld [vmem:[%s0 + $0x24] sm:$0xf]
  %v67 = vld [vmem:[%s0 + $0x28] sm:$0xf]
  %v68 = vld [vmem:[%s0 + $0x2c] sm:$0xf]
  %v69 = vld [vmem:[%s0 + $0x30] sm:$0xf]
  %v70 = vld [vmem:[%s0 + $0x34] sm:$0xf]
  %v71 = vld [vmem:[%s0 + $0x38] sm:$0xf]
  %v72 = vld [vmem:[%s0 + $0x3c] sm:$0xf]
  %v73 = vld [vmem:[%s1] sm:$0xf]
  %v74 = vld [vmem:[%s1 + $0x4] sm:$0xf]
  %v75 = vld [vmem:[%s1 + $0x8] sm:$0xf]
  %v76 = vld [vmem:[%s1 + $0xc] sm:$0xf]
  %v77 = vld [vmem:[%s1 + $0x10] sm:$0xf]
  %v78 = vld [vmem:[%s1 + $0x14] sm:$0xf]
  %v79 = vld [vmem:[%s1 + $0x18] sm:$0xf]
  %v80 = vld [vmem:[%s1 + $0x1c] sm:$0xf]
  %v81 = vld [vmem:[%s1 + $0x20] sm:$0xf]
  %v82 = vld [vmem:[%s1 + $0x24] sm:$0xf]
  %v83 = vld [vmem:[%s1 + $0x28] sm:$0xf]
  %v84 = vld [vmem:[%s1 + $0x2c] sm:$0xf]
  %v85 = vld [vmem:[%s1 + $0x30] sm:$0xf]
  %v86 = vld [vmem:[%s1 + $0x34] sm:$0xf]
  %v87 = vld [vmem:[%s1 + $0x38] sm:$0xf]
  %v88 = vld [vmem:[%s1 + $0x3c] sm:$0xf]
  %v105 = vunpack.c.l.b16 %v57
  %v106 = vunpack.c.l.b16 %v58
  %v107 = vunpack.c.l.b16 %v59
  %v108 = vunpack.c.l.b16 %v60
  %v109 = vunpack.c.l.b16 %v61
  %v110 = vunpack.c.l.b16 %v62
  %v111 = vunpack.c.l.b16 %v63
  %v112 = vunpack.c.l.b16 %v64
  %v113 = vunpack.c.l.b16 %v65
  %v114 = vunpack.c.l.b16 %v66
  %v115 = vunpack.c.l.b16 %v67
  %v116 = vunpack.c.l.b16 %v68
  %v117 = vunpack.c.l.b16 %v69
  %v118 = vunpack.c.l.b16 %v70
  %v119 = vunpack.c.l.b16 %v71
  %v120 = vunpack.c.l.b16 %v72
  %v121 = vpack.c.b16 %v106, %v105
  %v122 = vpack.c.b16 %v108, %v107
  %v123 = vpack.c.b16 %v110, %v109
  %v124 = vpack.c.b16 %v112, %v111
  %v125 = vpack.c.b16 %v114, %v113
  %v126 = vpack.c.b16 %v116, %v115
  %v127 = vpack.c.b16 %v118, %v117
  %v128 = vpack.c.b16 %v120, %v119
  %v153 = vunpack.c.l.b16 %v73
  %v154 = vunpack.c.l.b16 %v74
  %v155 = vunpack.c.l.b16 %v75
  %v156 = vunpack.c.l.b16 %v76
  %v157 = vunpack.c.l.b16 %v77
  %v158 = vunpack.c.l.b16 %v78
  %v159 = vunpack.c.l.b16 %v79
  %v160 = vunpack.c.l.b16 %v80
  %v161 = vunpack.c.l.b16 %v81
  %v162 = vunpack.c.l.b16 %v82
  %v163 = vunpack.c.l.b16 %v83
  %v164 = vunpack.c.l.b16 %v84
  %v165 = vunpack.c.l.b16 %v85
  %v166 = vunpack.c.l.b16 %v86
  %v167 = vunpack.c.l.b16 %v87
  %v168 = vunpack.c.l.b16 %v88
  %v169 = vpack.c.b16 %v154, %v153
  %v170 = vpack.c.b16 %v156, %v155
  %v171 = vpack.c.b16 %v158, %v157
  %v172 = vpack.c.b16 %v160, %v159
  %v173 = vpack.c.b16 %v162, %v161
  %v174 = vpack.c.b16 %v164, %v163
  %v175 = vpack.c.b16 %v166, %v165
  %v176 = vpack.c.b16 %v168, %v167
  %185 = vmatprep.subr.bf16.mxu0 0
  %186 = vmatpush1.bf16.msra.mxu0 %v169
  %187 = vmatprep.subr.bf16.mxu0 0
  %188 = vmatpush1.bf16.msra.mxu0 %v170
  %189 = vmatprep.subr.bf16.mxu0 0
  %190 = vmatpush1.bf16.msra.mxu0 %v171
  %191 = vmatprep.subr.bf16.mxu0 0
  %192 = vmatpush1.bf16.msra.mxu0 %v172
  %193 = vmatprep.subr.bf16.mxu0 0
  %194 = vmatpush1.bf16.msra.mxu0 %v173
  %195 = vmatprep.subr.bf16.mxu0 0
  %196 = vmatpush1.bf16.msra.mxu0 %v174
  %197 = vmatprep.subr.bf16.mxu0 0
  %198 = vmatpush1.bf16.msra.mxu0 %v175
  %199 = vmatprep.subr.bf16.mxu0 0
  %200 = vmatpush1.bf16.msra.mxu0 %v176
  %201 = vmatprep.subr.bf16.mxu0 0
  %202 = vmatpush1.bf16.msra.mxu0 0
  %203 = vmatprep.subr.bf16.mxu0 0
  %204 = vmatpush1.bf16.msra.mxu0 0
  %205 = vmatprep.subr.bf16.mxu0 0
  %206 = vmatpush1.bf16.msra.mxu0 0
  %207 = vmatprep.subr.bf16.mxu0 0
  %208 = vmatpush1.bf16.msra.mxu0 0
  %209 = vmatprep.subr.bf16.mxu0 0
  %210 = vmatpush1.bf16.msra.mxu0 0
  %211 = vmatprep.subr.bf16.mxu0 0
  %212 = vmatpush1.bf16.msra.mxu0 0
  %213 = vmatprep.subr.bf16.mxu0 0
  %214 = vmatpush1.bf16.msra.mxu0 0
  %215 = vmatprep.subr.bf16.mxu0 0
  %216 = vmatpush1.bf16.msra.mxu0 0
  %217 = vmatprep.mubr.bf16.mxu0 0
  %218 = vmatmul.mubr.bf16.gmra.mrb[0].mxu0 %v121
  %v219 = vpop.f32.mrb[0].mxu0
  %v220 = vadd.f32 0.0, %v219
  %v221 = vpop.f32.mrb[0].mxu0
  %v222 = vpop.f32.mrb[0].mxu0
  %v223 = vadd.f32 0.0, %v222
  %v224 = vpop.f32.mrb[0].mxu0
  %225 = vmatprep.mubr.bf16.mxu0 0
  %226 = vmatmul.mubr.bf16.gmra.mrb[0].mxu0 %v122
  %v227 = vpop.f32.mrb[0].mxu0
  %v228 = vadd.f32 0.0, %v227
  %v229 = vpop.f32.mrb[0].mxu0
  %v230 = vpop.f32.mrb[0].mxu0
  %v231 = vadd.f32 0.0, %v230
  %v232 = vpop.f32.mrb[0].mxu0
  %233 = vmatprep.mubr.bf16.mxu0 0
  %234 = vmatmul.mubr.bf16.gmra.mrb[0].mxu0 %v123
  %v235 = vpop.f32.mrb[0].mxu0
  %v236 = vadd.f32 0.0, %v235
  %v237 = vpop.f32.mrb[0].mxu0
  %v238 = vpop.f32.mrb[0].mxu0
  %v239 = vadd.f32 0.0, %v238
  %v240 = vpop.f32.mrb[0].mxu0
  %241 = vmatprep.mubr.bf16.mxu0 0
  %242 = vmatmul.mubr.bf16.gmra.mrb[0].mxu0 %v124
  %v243 = vpop.f32.mrb[0].mxu0
  %v244 = vadd.f32 0.0, %v243
  %v245 = vpop.f32.mrb[0].mxu0
  %v246 = vpop.f32.mrb[0].mxu0
  %v247 = vadd.f32 0.0, %v246
  %v248 = vpop.f32.mrb[0].mxu0
  %249 = vmatprep.mubr.bf16.mxu0 0
  %250 = vmatmul.mubr.bf16.gmra.mrb[0].mxu0 %v125
  %v251 = vpop.f32.mrb[0].mxu0
  %v252 = vadd.f32 0.0, %v251
  %v253 = vpop.f32.mrb[0].mxu0
  %v254 = vpop.f32.mrb[0].mxu0
  %v255 = vadd.f32 0.0, %v254
  %v256 = vpop.f32.mrb[0].mxu0
  %257 = vmatprep.mubr.bf16.mxu0 0
  %258 = vmatmul.mubr.bf16.gmra.mrb[0].mxu0 %v126
  %v259 = vpop.f32.mrb[0].mxu0
  %v260 = vadd.f32 0.0, %v259
  %v261 = vpop.f32.mrb[0].mxu0
  %v262 = vpop.f32.mrb[0].mxu0
  %v263 = vadd.f32 0.0, %v262
  %v264 = vpop.f32.mrb[0].mxu0
  %265 = vmatprep.mubr.bf16.mxu0 0
  %266 = vmatmul.mubr.bf16.gmra.mrb[0].mxu0 %v127
  %v267 = vpop.f32.mrb[0].mxu0
  %v268 = vadd.f32 0.0, %v267
  %v269 = vpop.f32.mrb[0].mxu0
  %v270 = vpop.f32.mrb[0].mxu0
  %v271 = vadd.f32 0.0, %v270
  %v272 = vpop.f32.mrb[0].mxu0
  %273 = vmatprep.mubr.bf16.mxu0 0
  %274 = vmatmul.mubr.bf16.gmra.mrb[0].mxu0 %v128
  %v275 = vpop.f32.mrb[0].mxu0
  %v276 = vadd.f32 0.0, %v275
  %v277 = vpop.f32.mrb[0].mxu0
  %v278 = vpop.f32.mrb[0].mxu0
  %v279 = vadd.f32 0.0, %v278
  %v280 = vpop.f32.mrb[0].mxu0
  %281 = vdwg.mxu0
  %v282 = vadd.f32 %v41, %v220
  %v283 = vadd.f32 %v42, %v223
  %v284 = vadd.f32 %v43, %v228
  %v285 = vadd.f32 %v44, %v231
  %v286 = vadd.f32 %v45, %v236
  %v287 = vadd.f32 %v46, %v239
  %v288 = vadd.f32 %v47, %v244
  %v289 = vadd.f32 %v48, %v247
  %v290 = vadd.f32 %v49, %v252
  %v291 = vadd.f32 %v50, %v255
  %v292 = vadd.f32 %v51, %v260
  %v293 = vadd.f32 %v52, %v263
  %v294 = vadd.f32 %v53, %v268
  %v295 = vadd.f32 %v54, %v271
  %v296 = vadd.f32 %v55, %v276
  %v297 = vadd.f32 %v56, %v279
  %298 = vst [vmem:[#allocation2] sm:$0xff] %v282
  %299 = vst [vmem:[#allocation2 + $0x8] sm:$0xff] %v283
  %300 = vst [vmem:[#allocation2 + $0x10] sm:$0xff] %v284
  %301 = vst [vmem:[#allocation2 + $0x18] sm:$0xff] %v285
  %302 = vst [vmem:[#allocation2 + $0x20] sm:$0xff] %v286
  %303 = vst [vmem:[#allocation2 + $0x28] sm:$0xff] %v287
  %304 = vst [vmem:[#allocation2 + $0x30] sm:$0xff] %v288
  %305 = vst [vmem:[#allocation2 + $0x38] sm:$0xff] %v289
  %306 = vst [vmem:[#allocation2 + $0x40] sm:$0xff] %v290
  %307 = vst [vmem:[#allocation2 + $0x48] sm:$0xff] %v291
  %308 = vst [vmem:[#allocation2 + $0x50] sm:$0xff] %v292
  %309 = vst [vmem:[#allocation2 + $0x58] sm:$0xff] %v293
  %310 = vst [vmem:[#allocation2 + $0x60] sm:$0xff] %v294
  %311 = vst [vmem:[#allocation2 + $0x68] sm:$0xff] %v295
  %312 = vst [vmem:[#allocation2 + $0x70] sm:$0xff] %v296
  %313 = vst [vmem:[#allocation2 + $0x78] sm:$0xff] %v297
  // Predicated region
  $region26: #{bottleneck_forward.5} parent=0 // pred_check
    %p314 = pneg %p21
  $region27: #{bottleneck_forward.5} parent=0 // pred_check_branch
    %316 = sbr.rel (%p314) target = $region29
  $region28: #{bottleneck_forward.5} parent=0 // pred_region
    %v317 = vld [vmem:[#allocation2] sm:$0xff]
    %v318 = vld [vmem:[#allocation2 + $0x8] sm:$0xff]
    %v319 = vld [vmem:[#allocation2 + $0x10] sm:$0xff]
    %v320 = vld [vmem:[#allocation2 + $0x18] sm:$0xff]
    %v321 = vld [vmem:[#allocation2 + $0x20] sm:$0xff]
    %v322 = vld [vmem:[#allocation2 + $0x28] sm:$0xff]
    %v323 = vld [vmem:[#allocation2 + $0x30] sm:$0xff]
    %v324 = vld [vmem:[#allocation2 + $0x38] sm:$0xff]
    %v325 = vld [vmem:[#allocation2 + $0x40] sm:$0xff]
    %v326 = vld [vmem:[#allocation2 + $0x48] sm:$0xff]
    %v327 = vld [vmem:[#allocation2 + $0x50] sm:$0xff]
    %v328 = vld [vmem:[#allocation2 + $0x58] sm:$0xff]
    %v329 = vld [vmem:[#allocation2 + $0x60] sm:$0xff]
    %v330 = vld [vmem:[#allocation2 + $0x68] sm:$0xff]
    %v331 = vld [vmem:[#allocation2 + $0x70] sm:$0xff]
    %v332 = vld [vmem:[#allocation2 + $0x78] sm:$0xff]
    %v333 = vld [vmem:[%s2] sm:$0x1]
    %v335 = vlaneseq
    %v336 = vshrl.u32 %v335, 7
    %v337 = vsub.s32 0, %v336
    %v338 = vrot.slane %v333, %v337
    %v340 = vmul.f32 %v317, %v338
    %v341 = vmul.f32 %v318, %v338
    %v342 = vmul.f32 %v319, %v338
    %v343 = vmul.f32 %v320, %v338
    %v344 = vmul.f32 %v321, %v338
    %v345 = vmul.f32 %v322, %v338
    %v346 = vmul.f32 %v323, %v338
    %v347 = vmul.f32 %v324, %v338
    %v348 = vmul.f32 %v325, %v338
    %v349 = vmul.f32 %v326, %v338
    %v350 = vmul.f32 %v327, %v338
    %v351 = vmul.f32 %v328, %v338
    %v352 = vmul.f32 %v329, %v338
    %v353 = vmul.f32 %v330, %v338
    %v354 = vmul.f32 %v331, %v338
    %v355 = vmul.f32 %v332, %v338
    %v356 = vld [vmem:[%s3] sm:$0x1]
    %v358 = vlaneseq
    %v359 = vshrl.u32 %v358, 7
    %v360 = vsub.s32 0, %v359
    %v361 = vrot.slane %v356, %v360
    %v363 = vadd.f32 %v340, %v361
    %v364 = vadd.f32 %v341, %v361
    %v365 = vadd.f32 %v342, %v361
    %v366 = vadd.f32 %v343, %v361
    %v367 = vadd.f32 %v344, %v361
    %v368 = vadd.f32 %v345, %v361
    %v369 = vadd.f32 %v346, %v361
    %v370 = vadd.f32 %v347, %v361
    %v371 = vadd.f32 %v348, %v361
    %v372 = vadd.f32 %v349, %v361
    %v373 = vadd.f32 %v350, %v361
    %v374 = vadd.f32 %v351, %v361
    %v375 = vadd.f32 %v352, %v361
    %v376 = vadd.f32 %v353, %v361
    %v377 = vadd.f32 %v354, %v361
    %v378 = vadd.f32 %v355, %v361
    %v379 = vld [vmem:[%s4] sm:$0xf]
    %v380 = vld [vmem:[%s4 + $0x4] sm:$0xf]
    %v381 = vld [vmem:[%s4 + $0x8] sm:$0xf]
    %v382 = vld [vmem:[%s4 + $0xc] sm:$0xf]
    %v383 = vld [vmem:[%s4 + $0x10] sm:$0xf]
    %v384 = vld [vmem:[%s4 + $0x14] sm:$0xf]
    %v385 = vld [vmem:[%s4 + $0x18] sm:$0xf]
    %v386 = vld [vmem:[%s4 + $0x1c] sm:$0xf]
    %v387 = vld [vmem:[%s4 + $0x20] sm:$0xf]
    %v388 = vld [vmem:[%s4 + $0x24] sm:$0xf]
    %v389 = vld [vmem:[%s4 + $0x28] sm:$0xf]
    %v390 = vld [vmem:[%s4 + $0x2c] sm:$0xf]
    %v391 = vld [vmem:[%s4 + $0x30] sm:$0xf]
    %v392 = vld [vmem:[%s4 + $0x34] sm:$0xf]
    %v393 = vld [vmem:[%s4 + $0x38] sm:$0xf]
    %v394 = vld [vmem:[%s4 + $0x3c] sm:$0xf]
    %v395 = vunpack.c.l.bf16 %v379
    %v396 = vunpack.c.l.bf16 %v380
    %v397 = vunpack.c.l.bf16 %v381
    %v398 = vunpack.c.l.bf16 %v382
    %v399 = vunpack.c.l.bf16 %v383
    %v400 = vunpack.c.l.bf16 %v384
    %v401 = vunpack.c.l.bf16 %v385
    %v402 = vunpack.c.l.bf16 %v386
    %v403 = vunpack.c.l.bf16 %v387
    %v404 = vunpack.c.l.bf16 %v388
    %v405 = vunpack.c.l.bf16 %v389
    %v406 = vunpack.c.l.bf16 %v390
    %v407 = vunpack.c.l.bf16 %v391
    %v408 = vunpack.c.l.bf16 %v392
    %v409 = vunpack.c.l.bf16 %v393
    %v410 = vunpack.c.l.bf16 %v394
    %v411 = vadd.f32 %v363, %v395
    %v412 = vadd.f32 %v364, %v396
    %v413 = vadd.f32 %v365, %v397
    %v414 = vadd.f32 %v366, %v398
    %v415 = vadd.f32 %v367, %v399
    %v416 = vadd.f32 %v368, %v400
    %v417 = vadd.f32 %v369, %v401
    %v418 = vadd.f32 %v370, %v402
    %v419 = vadd.f32 %v371, %v403
    %v420 = vadd.f32 %v372, %v404
    %v421 = vadd.f32 %v373, %v405
    %v422 = vadd.f32 %v374, %v406
    %v423 = vadd.f32 %v375, %v407
    %v424 = vadd.f32 %v376, %v408
    %v425 = vadd.f32 %v377, %v409
    %v426 = vadd.f32 %v378, %v410
    %v427 = vmax.f32 %v411, 0.0
    %v428 = vmax.f32 %v412, 0.0
    %v429 = vmax.f32 %v413, 0.0
    %v430 = vmax.f32 %v414, 0.0
    %v431 = vmax.f32 %v415, 0.0
    %v432 = vmax.f32 %v416, 0.0
    %v433 = vmax.f32 %v417, 0.0
    %v434 = vmax.f32 %v418, 0.0
    %v435 = vmax.f32 %v419, 0.0
    %v436 = vmax.f32 %v420, 0.0
    %v437 = vmax.f32 %v421, 0.0
    %v438 = vmax.f32 %v422, 0.0
    %v439 = vmax.f32 %v423, 0.0
    %v440 = vmax.f32 %v424, 0.0
    %v441 = vmax.f32 %v425, 0.0
    %v442 = vmax.f32 %v426, 0.0
    %v443 = vpack.c.bf16 %v428, %v427
    %v444 = vpack.c.bf16 %v430, %v429
    %v445 = vpack.c.bf16 %v432, %v431
    %v446 = vpack.c.bf16 %v434, %v433
    %v447 = vpack.c.bf16 %v436, %v435
    %v448 = vpack.c.bf16 %v438, %v437
    %v449 = vpack.c.bf16 %v440, %v439
    %v450 = vpack.c.bf16 %v442, %v441
    %v459 = vunpack.c.l.b16 %v443
    %v460 = vunpack.c.h.b16 %v443
    %v461 = vunpack.c.l.b16 %v444
    %v462 = vunpack.c.h.b16 %v444
    %v463 = vunpack.c.l.b16 %v445
    %v464 = vunpack.c.h.b16 %v445
    %v465 = vunpack.c.l.b16 %v446
    %v466 = vunpack.c.h.b16 %v446
    %v467 = vunpack.c.l.b16 %v447
    %v468 = vunpack.c.h.b16 %v447
    %v469 = vunpack.c.l.b16 %v448
    %v470 = vunpack.c.h.b16 %v448
    %v471 = vunpack.c.l.b16 %v449
    %v472 = vunpack.c.h.b16 %v449
    %v473 = vunpack.c.l.b16 %v450
    %v474 = vunpack.c.h.b16 %v450
    %v475 = vpack.c.b16 %v459, %v459
    %v476 = vpack.c.b16 %v460, %v460
    %v477 = vpack.c.b16 %v461, %v461
    %v478 = vpack.c.b16 %v462, %v462
    %v479 = vpack.c.b16 %v463, %v463
    %v480 = vpack.c.b16 %v464, %v464
    %v481 = vpack.c.b16 %v465, %v465
    %v482 = vpack.c.b16 %v466, %v466
    %v483 = vpack.c.b16 %v467, %v467
    %v484 = vpack.c.b16 %v468, %v468
    %v485 = vpack.c.b16 %v469, %v469
    %v486 = vpack.c.b16 %v470, %v470
    %v487 = vpack.c.b16 %v471, %v471
    %v488 = vpack.c.b16 %v472, %v472
    %v489 = vpack.c.b16 %v473, %v473
    %v490 = vpack.c.b16 %v474, %v474
    %507 = vst [vmem:[%s5] sm:$0xf] %v475
    %508 = vst [vmem:[%s5 + $0x4] sm:$0xf] %v476
    %509 = vst [vmem:[%s5 + $0x8] sm:$0xf] %v477
    %510 = vst [vmem:[%s5 + $0xc] sm:$0xf] %v478
    %511 = vst [vmem:[%s5 + $0x10] sm:$0xf] %v479
    %512 = vst [vmem:[%s5 + $0x14] sm:$0xf] %v480
    %513 = vst [vmem:[%s5 + $0x18] sm:$0xf] %v481
    %514 = vst [vmem:[%s5 + $0x1c] sm:$0xf] %v482
    %515 = vst [vmem:[%s5 + $0x20] sm:$0xf] %v483
    %516 = vst [vmem:[%s5 + $0x24] sm:$0xf] %v484
    %517 = vst [vmem:[%s5 + $0x28] sm:$0xf] %v485
    %518 = vst [vmem:[%s5 + $0x2c] sm:$0xf] %v486
    %519 = vst [vmem:[%s5 + $0x30] sm:$0xf] %v487
    %520 = vst [vmem:[%s5 + $0x34] sm:$0xf] %v488
    %521 = vst [vmem:[%s5 + $0x38] sm:$0xf] %v489
    %522 = vst [vmem:[%s5 + $0x3c] sm:$0xf] %v490
  $region29: #{bottleneck_forward.5} parent=0 // pred_fallthru
    _
  // Predicated region
  $region30: #{bottleneck_forward.5} parent=0 // pred_check
    _
  $region31: #{bottleneck_forward.5} parent=0 // pred_check_branch
    %524 = sbr.rel (0) target = $region33
  $region32: #{bottleneck_forward.5} parent=0 // pred_region
    _
  $region33: #{bottleneck_forward.5} parent=0 // pred_fallthru
    _
  // Predicated region
  $region34: #{bottleneck_forward.5} parent=0 // pred_check
    _
  $region35: #{bottleneck_forward.5} parent=0 // pred_check_branch
    %526 = sbr.rel (0) target = $region37
  $region36: #{bottleneck_forward.5} parent=0 // pred_region
    _
  $region37: #{bottleneck_forward.5} parent=0 // pred_fallthru
    _

// kernel: bottleneck_forward.4
$region0: #{bottleneck_forward.4}
  #allocation0 [shape = 'u32[]', space=smem, size = 0x4, offset = 0x4, fixed_abs, tag = 'smem constant byte address 0x4 - core index']
  #allocation1 [shape = 'u32[144,128]{1,0:T(1,128)}', space=vmem, size = 0x12000, scoped, tag = 'internal scratch']
  #allocation2 [shape = 'bf16[10,8,384]{2,1,0:T(8,128)(2,1)}', space=vmem, size = 0xf000, scoped, tag = 'scratch operand']
  #allocation3 [shape = 'f32[64,128]{1,0:T(8,128)}', space=vmem, size = 0x8000, scoped, tag = 'scratch operand']
  %s0 = inlined_call_operand.vmem [shape: bf16[2,8,8,128], index: 0, kind: input, shape index: {}, may-alias: {0,1,2}]
  %s1 = inlined_call_operand.vmem [shape: bf16[2,8,8,128], index: 1, kind: input, shape index: {}, may-alias: {0,1,2}]
  %s2 = inlined_call_operand.vmem [shape: bf16[2,8,8,128], index: 2, kind: input, shape index: {}, may-alias: {0,1,2}]
  %s3 = inlined_call_operand.hbm [shape: bf16[3,384,128], index: 3, kind: input, shape index: {}]
  %s4 = inlined_call_operand.vmem [shape: f32[1,128], index: 4, kind: input, shape index: {}]
  %s5 = inlined_call_operand.vmem [shape: f32[1,128], index: 5, kind: input, shape index: {}]
  %s6 = inlined_call_operand.vmem [shape: bf16[2,8,8,128], index: 6, kind: output, shape index: {}]
  %s7 = sld [smem:[#allocation0]]
  $region65: #{bottleneck_forward.4} parent=0
    _
  %s9 = ssub.s32 1, %s7
  %s10 = scalar_select 0, %s9, %s7
  $region1: #{bottleneck_forward.4} parent=0
    #allocation4 [shape = 'u8[294912]{0}', space=vmem, size = 0x48000, scoped, tag = 'input window, operand 3, single buffered']
    #allocation5 [shape = 's32[2]{0}', space=sflag, size = 0x8, scoped, tag = 'scoped memory for bottleneck_forward.4']
    %11 = vsyncpa [#allocation5], 0
    loop: start=0, step=1, limit=4
    $region2: #{bottleneck_forward.4} parent=1 // loop_pre_header
      _
    $region3: #{bottleneck_forward.4} parent=1 // loop_header
      %s13 = sphi 0, %s17
      %p14 = scmp.ge.s32.totalorder %s13, 4
      %s20 = sphi 0, %s39
      %s21 = sphi 0, %s35
      %s22 = sphi 0, %s31
      %s23 = sphi 0, %s20
      %s24 = sphi 0, %s21
      %s25 = sphi 0, %s22
      %s26 = sphi 0, %s23
      %s27 = sphi 0, %s24
      %s28 = sphi 0, %s25
      %s44 = sphi 0, %s46
      %s47 = sphi 0, %s44
      %s48 = sphi 0, %s47
      %s64 = sphi 0, %s48
      %s80 = sphi 0, %s82
      %s83 = sphi 0, %s80
      %s84 = sphi 0, %s83
      %s100 = sphi 0, %s84
      %s116 = sphi 0, %s118
      %s119 = sphi 0, %s116
      %s120 = sphi 0, %s119
      %s136 = sphi 0, %s120
      %s142 = sphi 0, %s144
      %s145 = sphi 0, %s142
      %s146 = sphi 0, %s145
      %s162 = sphi 0, %s146
      %s168 = sphi 0, %s170
      %s171 = sphi 0, %s168
      %s172 = sphi 0, %s171
      %s188 = sphi 0, %s172
      %s194 = sphi 0, %s196
      %s197 = sphi 0, %s194
      %s198 = sphi 0, %s197
      %s214 = sphi 0, %s198
      %s224 = sphi 0, %s226
      %s227 = sphi 0, %s224
      %s228 = sphi 0, %s227
      %s244 = sphi 0, %s228
    $region4: #{bottleneck_forward.4} parent=1 // loop_header_branch
      %16 = sbr.rel (%p14) target = $region8
    $region5: #{bottleneck_forward.4} parent=1 // loop_body
      %s18 = ssub.s32 %s13, 1
      %s19 = ssub.s32 %s13, 2
      %s29 = sadd.s32 1, %s22
      %p30 = scmp.ge.s32.totalorder %s29, 1
      %s31 = scalar_select %p30, 0, %s29
      %s32 = sadd.s32 1, %s21
      %s33 = scalar_select %p30, %s32, %s21
      %p34 = scmp.ge.s32.totalorder %s33, 1
      %s35 = scalar_select %p34, 0, %s33
      %s36 = sadd.s32 1, %s20
      %s37 = scalar_select %p34, %s36, %s20
      %p38 = scmp.ge.s32.totalorder %s37, 2
      %s39 = scalar_select %p38, 0, %s37
      %s40 = ssub.s32 %s20, %s39
      %s41 = ssub.s32 %s21, %s35
      %s42 = sor.u32 %s40, %s41
      %p43 = scmp.eq.s32.totalorder %s42, 0
      %s45 = sadd.s32 %s44, 1
      %s46 = scalar_select %p43, %s44, %s45
      %p49 = pneg %p43
      %p50 = scmp.eq.s32.totalorder %s13, 1
      %p51 = por %p49, %p50
      %p52 = scmp.ne.s32.totalorder %s44, %s47
      %p53 = scmp.eq.s32.totalorder %s13, 0
      %p54 = por %p52, %p53
      %p55 = scmp.ne.s32.totalorder %s44, %s47
      %p56 = scmp.eq.s32.totalorder %s18, 1
      %p57 = por %p55, %p56
      %p58 = scmp.ne.s32.totalorder %s47, %s48
      %p59 = scmp.eq.s32.totalorder %s18, 0
      %p60 = por %p58, %p59
      %p61 = scmp.ne.s32.totalorder %s47, %s48
      %p62 = scmp.eq.s32.totalorder %s19, 1
      %p63 = por %p61, %p62
      %p65 = scmp.ne.s32.totalorder %s48, %s64
      %p66 = scmp.eq.s32.totalorder %s19, 0
      %p67 = por %p65, %p66
      %s68 = smul.u32 %s21, 8
      %s69 = ssub.s32 %s68, 1
      %p70 = scmp.gt.s32.totalorder %s69, 0
      %s71 = scalar_select %p70, %s69, 0
      %s72 = smul.u32 %s35, 8
      %s73 = ssub.s32 %s72, 1
      %p74 = scmp.gt.s32.totalorder %s73, 0
      %s75 = scalar_select %p74, %s73, 0
      %s76 = ssub.s32 %s20, %s39
      %s77 = ssub.s32 %s71, %s75
      %s78 = sor.u32 %s76, %s77
      %p79 = scmp.eq.s32.totalorder %s78, 0
      %s81 = sadd.s32 %s80, 1
      %s82 = scalar_select %p79, %s80, %s81
      %p85 = pneg %p79
      %p86 = scmp.eq.s32.totalorder %s13, 1
      %p87 = por %p85, %p86
      %p88 = scmp.ne.s32.totalorder %s80, %s83
      %p89 = scmp.eq.s32.totalorder %s13, 0
      %p90 = por %p88, %p89
      %p91 = scmp.ne.s32.totalorder %s80, %s83
      %p92 = scmp.eq.s32.totalorder %s18, 1
      %p93 = por %p91, %p92
      %p94 = scmp.ne.s32.totalorder %s83, %s84
      %p95 = scmp.eq.s32.totalorder %s18, 0
      %p96 = por %p94, %p95
      %p97 = scmp.ne.s32.totalorder %s83, %s84
      %p98 = scmp.eq.s32.totalorder %s19, 1
      %p99 = por %p97, %p98
      %p101 = scmp.ne.s32.totalorder %s84, %s100
      %p102 = scmp.eq.s32.totalorder %s19, 0
      %p103 = por %p101, %p102
      %s104 = smul.u32 %s21, 8
      %s105 = sadd.s32 %s104, 8
      %p106 = scmp.lt.s32.totalorder %s105, 7
      %s107 = scalar_select %p106, %s105, 7
      %s108 = smul.u32 %s35, 8
      %s109 = sadd.s32 %s108, 8
      %p110 = scmp.lt.s32.totalorder %s109, 7
      %s111 = scalar_select %p110, %s109, 7
      %s112 = ssub.s32 %s20, %s39
      %s113 = ssub.s32 %s107, %s111
      %s114 = sor.u32 %s112, %s113
      %p115 = scmp.eq.s32.totalorder %s114, 0
      %s117 = sadd.s32 %s116, 1
      %s118 = scalar_select %p115, %s116, %s117
      %p121 = pneg %p115
      %p122 = scmp.eq.s32.totalorder %s13, 1
      %p123 = por %p121, %p122
      %p124 = scmp.ne.s32.totalorder %s116, %s119
      %p125 = scmp.eq.s32.totalorder %s13, 0
      %p126 = por %p124, %p125
      %p127 = scmp.ne.s32.totalorder %s116, %s119
      %p128 = scmp.eq.s32.totalorder %s18, 1
      %p129 = por %p127, %p128
      %p130 = scmp.ne.s32.totalorder %s119, %s120
      %p131 = scmp.eq.s32.totalorder %s18, 0
      %p132 = por %p130, %p131
      %p133 = scmp.ne.s32.totalorder %s119, %s120
      %p134 = scmp.eq.s32.totalorder %s19, 1
      %p135 = por %p133, %p134
      %p137 = scmp.ne.s32.totalorder %s120, %s136
      %p138 = scmp.eq.s32.totalorder %s19, 0
      %p139 = por %p137, %p138
      %s140 = ssub.s32 %s22, %s31
      %p141 = scmp.eq.s32.totalorder %s140, 0
      %s143 = sadd.s32 %s142, 1
      %s144 = scalar_select %p141, %s142, %s143
      %p147 = pneg %p141
      %p148 = scmp.eq.s32.totalorder %s13, 1
      %p149 = por %p147, %p148
      %p150 = scmp.ne.s32.totalorder %s142, %s145
      %p151 = scmp.eq.s32.totalorder %s13, 0
      %p152 = por %p150, %p151
      %p153 = scmp.ne.s32.totalorder %s142, %s145
      %p154 = scmp.eq.s32.totalorder %s18, 1
      %p155 = por %p153, %p154
      %p156 = scmp.ne.s32.totalorder %s145, %s146
      %p157 = scmp.eq.s32.totalorder %s18, 0
      %p158 = por %p156, %p157
      %p159 = scmp.ne.s32.totalorder %s145, %s146
      %p160 = scmp.eq.s32.totalorder %s19, 1
      %p161 = por %p159, %p160
      %p163 = scmp.ne.s32.totalorder %s146, %s162
      %p164 = scmp.eq.s32.totalorder %s19, 0
      %p165 = por %p163, %p164
      %s166 = ssub.s32 %s22, %s31
      %p167 = scmp.eq.s32.totalorder %s166, 0
      %s169 = sadd.s32 %s168, 1
      %s170 = scalar_select %p167, %s168, %s169
      %p173 = pneg %p167
      %p174 = scmp.eq.s32.totalorder %s13, 1
      %p175 = por %p173, %p174
      %p176 = scmp.ne.s32.totalorder %s168, %s171
      %p177 = scmp.eq.s32.totalorder %s13, 0
      %p178 = por %p176, %p177
      %p179 = scmp.ne.s32.totalorder %s168, %s171
      %p180 = scmp.eq.s32.totalorder %s18, 1
      %p181 = por %p179, %p180
      %p182 = scmp.ne.s32.totalorder %s171, %s172
      %p183 = scmp.eq.s32.totalorder %s18, 0
      %p184 = por %p182, %p183
      %p185 = scmp.ne.s32.totalorder %s171, %s172
      %p186 = scmp.eq.s32.totalorder %s19, 1
      %p187 = por %p185, %p186
      %p189 = scmp.ne.s32.totalorder %s172, %s188
      %p190 = scmp.eq.s32.totalorder %s19, 0
      %p191 = por %p189, %p190
      %s192 = ssub.s32 %s22, %s31
      %p193 = scmp.eq.s32.totalorder %s192, 0
      %s195 = sadd.s32 %s194, 1
      %s196 = scalar_select %p193, %s194, %s195
      %p199 = pneg %p193
      %p200 = scmp.eq.s32.totalorder %s13, 1
      %p201 = por %p199, %p200
      %p202 = scmp.ne.s32.totalorder %s194, %s197
      %p203 = scmp.eq.s32.totalorder %s13, 0
      %p204 = por %p202, %p203
      %p205 = scmp.ne.s32.totalorder %s194, %s197
      %p206 = scmp.eq.s32.totalorder %s18, 1
      %p207 = por %p205, %p206
      %p208 = scmp.ne.s32.totalorder %s197, %s198
      %p209 = scmp.eq.s32.totalorder %s18, 0
      %p210 = por %p208, %p209
      %p211 = scmp.ne.s32.totalorder %s197, %s198
      %p212 = scmp.eq.s32.totalorder %s19, 1
      %p213 = por %p211, %p212
      %p215 = scmp.ne.s32.totalorder %s198, %s214
      %p216 = scmp.eq.s32.totalorder %s19, 0
      %p217 = por %p215, %p216
      %s218 = ssub.s32 %s20, %s39
      %s219 = ssub.s32 %s21, %s35
      %s220 = sor.u32 %s218, %s219
      %s221 = ssub.s32 %s22, %s31
      %s222 = sor.u32 %s220, %s221
      %p223 = scmp.eq.s32.totalorder %s222, 0
      %s225 = sadd.s32 %s224, 1
      %s226 = scalar_select %p223, %s224, %s225
      %p229 = pneg %p223
      %p230 = scmp.eq.s32.totalorder %s13, 1
      %p231 = por %p229, %p230
      %p232 = scmp.ne.s32.totalorder %s224, %s227
      %p233 = scmp.eq.s32.totalorder %s13, 0
      %p234 = por %p232, %p233
      %p235 = scmp.ne.s32.totalorder %s224, %s227
      %p236 = scmp.eq.s32.totalorder %s18, 1
      %p237 = por %p235, %p236
      %p238 = scmp.ne.s32.totalorder %s227, %s228
      %p239 = scmp.eq.s32.totalorder %s18, 0
      %p240 = por %p238, %p239
      %p241 = scmp.ne.s32.totalorder %s227, %s228
      %p242 = scmp.eq.s32.totalorder %s19, 1
      %p243 = por %p241, %p242
      %p245 = scmp.ne.s32.totalorder %s228, %s244
      %p246 = scmp.eq.s32.totalorder %s19, 0
      %p247 = por %p245, %p246
      %p248 = scmp.le.s32.totalorder 1, %s13
      %p249 = scmp.lt.s32.totalorder %s13, 3
      %p250 = pnand %p248, %p249
      %p251 = pneg %p250
      // Predicated region
      $region9: #{bottleneck_forward.4} parent=5 // pred_check
        _
      $region10: #{bottleneck_forward.4} parent=5 // pred_check_branch
        %253 = sbr.rel (%p250) target = $region12
      $region11: #{bottleneck_forward.4} parent=5 // pred_region
        %s254 = ssub.s32 %s13, 1
        // Predicated region
        $region13: #{bottleneck_forward.4} parent=11 // pred_check
          %p255 = pneg %p158
        $region14: #{bottleneck_forward.4} parent=11 // pred_check_branch
          %257 = sbr.rel (%p255) target = $region16
        $region15: #{bottleneck_forward.4} parent=11 // pred_region
          %s259 = ssub.s32 9216, 9216
          %260 = vsyncadd [#allocation5], %s259
          %s261 = smul.addr %s25, 64
          %s262 = scalar_lea.hbm %s3, %s261
          %s263 = sshll.u32 [#allocation4], 4
          %s264 = int_to_ptr.vmem [resolvable:$true] %s263
          %269 = dma.hbm_to_vmem [thread:$0]  %s262, 9216, %s264, [#allocation5], 64, 64, 4
        $region16: #{bottleneck_forward.4} parent=11 // pred_fallthru
          _
        // Predicated region
        $region17: #{bottleneck_forward.4} parent=11 // pred_check
          %p270 = pneg %p184
        $region18: #{bottleneck_forward.4} parent=11 // pred_check_branch
          %272 = sbr.rel (%p270) target = $region20
        $region19: #{bottleneck_forward.4} parent=11 // pred_region
          %p273 = scmp.lt.s32.totalorder %s25, 0
          %s274 = scalar_select %p273, %s25, 0
          %s275 = scalar_lea.vmem %s4, %s274
        $region20: #{bottleneck_forward.4} parent=11 // pred_fallthru
          _
        // Predicated region
        $region21: #{bottleneck_forward.4} parent=11 // pred_check
          %p276 = pneg %p210
        $region22: #{bottleneck_forward.4} parent=11 // pred_check_branch
          %278 = sbr.rel (%p276) target = $region24
        $region23: #{bottleneck_forward.4} parent=11 // pred_region
          %p279 = scmp.lt.s32.totalorder %s25, 0
          %s280 = scalar_select %p279, %s25, 0
          %s281 = scalar_lea.vmem %s5, %s280
        $region24: #{bottleneck_forward.4} parent=11 // pred_fallthru
          _
      $region12: #{bottleneck_forward.4} parent=5 // pred_fallthru
        _
      %p282 = scmp.lt.s32.totalorder %s13, 2
      // Predicated region
      $region25: #{bottleneck_forward.4} parent=5 // pred_check
        %p283 = pneg %p282
      $region26: #{bottleneck_forward.4} parent=5 // pred_check_branch
        %285 = sbr.rel (%p283) target = $region28
      $region27: #{bottleneck_forward.4} parent=5 // pred_region
        // Predicated region
        $region29: #{bottleneck_forward.4} parent=27 // pred_check
          %p286 = pneg %p54
        $region30: #{bottleneck_forward.4} parent=27 // pred_check_branch
          %288 = sbr.rel (%p286) target = $region32
        $region31: #{bottleneck_forward.4} parent=27 // pred_region
          %s289 = smul.u32 8, %s21
          %p290 = scmp.lt.s32.totalorder %s20, 1
          %s291 = scalar_select %p290, %s20, 1
          %p292 = scmp.lt.s32.totalorder %s289, 7
          %s293 = scalar_select %p292, %s289, 7
          %s294 = smul.addr %s291, 8
          %s295 = sadd.s32 %s293, %s294
          %s296 = smul.addr %s295, 4
          %s297 = scalar_lea.vmem %s0, %s296
          %s298 = smul.u32 8, %s21
        $region32: #{bottleneck_forward.4} parent=27 // pred_fallthru
          _
        // Predicated region
        $region33: #{bottleneck_forward.4} parent=27 // pred_check
          %p299 = pneg %p90
        $region34: #{bottleneck_forward.4} parent=27 // pred_check_branch
          %301 = sbr.rel (%p299) target = $region36
        $region35: #{bottleneck_forward.4} parent=27 // pred_region
          %s302 = smul.u32 %s21, 8
          %s303 = ssub.s32 %s302, 1
          %p304 = scmp.gt.s32.totalorder %s303, 0
          %s305 = scalar_select %p304, %s303, 0
          %p306 = scmp.lt.s32.totalorder %s20, 1
          %s307 = scalar_select %p306, %s20, 1
          %p308 = scmp.lt.s32.totalorder %s305, 7
          %s309 = scalar_select %p308, %s305, 7
          %s310 = smul.addr %s307, 8
          %s311 = sadd.s32 %s309, %s310
          %s312 = smul.addr %s311, 4
          %s313 = scalar_lea.vmem %s1, %s312
          %s314 = smul.u32 %s21, 8
          %s315 = ssub.s32 %s314, 1
          %p316 = scmp.gt.s32.totalorder %s315, 0
          %s317 = scalar_select %p316, %s315, 0
        $region36: #{bottleneck_forward.4} parent=27 // pred_fallthru
          _
        // Predicated region
        $region37: #{bottleneck_forward.4} parent=27 // pred_check
          %p318 = pneg %p126
        $region38: #{bottleneck_forward.4} parent=27 // pred_check_branch
          %320 = sbr.rel (%p318) target = $region40
        $region39: #{bottleneck_forward.4} parent=27 // pred_region
          %s321 = smul.u32 %s21, 8
          %s322 = sadd.s32 %s321, 8
          %p323 = scmp.lt.s32.totalorder %s322, 7
          %s324 = scalar_select %p323, %s322, 7
          %p325 = scmp.lt.s32.totalorder %s20, 1
          %s326 = scalar_select %p325, %s20, 1
          %p327 = scmp.lt.s32.totalorder %s324, 7
          %s328 = scalar_select %p327, %s324, 7
          %s329 = smul.addr %s326, 8
          %s330 = sadd.s32 %s328, %s329
          %s331 = smul.addr %s330, 4
          %s332 = scalar_lea.vmem %s2, %s331
          %s333 = smul.u32 %s21, 8
          %s334 = sadd.s32 %s333, 8
          %p335 = scmp.lt.s32.totalorder %s334, 7
          %s336 = scalar_select %p335, %s334, 7
        $region40: #{bottleneck_forward.4} parent=27 // pred_fallthru
          _
      $region28: #{bottleneck_forward.4} parent=5 // pred_fallthru
        _
      %p337 = scmp.le.s32.totalorder 1, %s13
      %p338 = scmp.lt.s32.totalorder %s13, 3
      %p339 = pnand %p337, %p338
      %p340 = pneg %p339
      // Predicated region
      $region41: #{bottleneck_forward.4} parent=5 // pred_check
        _
      $region42: #{bottleneck_forward.4} parent=5 // pred_check_branch
        %342 = sbr.rel (%p339) target = $region44
      $region43: #{bottleneck_forward.4} parent=5 // pred_region
        %s343 = ssub.s32 %s13, 1
        // Predicated region
        $region45: #{bottleneck_forward.4} parent=43 // pred_check
          %p344 = pneg %p158
        $region46: #{bottleneck_forward.4} parent=43 // pred_check_branch
          %346 = sbr.rel (%p344) target = $region48
        $region47: #{bottleneck_forward.4} parent=43 // pred_region
          %347 = dma.done [#allocation5], 9216
        $region48: #{bottleneck_forward.4} parent=43 // pred_fallthru
          _
        %s348 = smul.u32 8, %s24
        %p349 = scmp.lt.s32.totalorder %s23, 1
        %s350 = scalar_select %p349, %s23, 1
        %p351 = scmp.lt.s32.totalorder %s348, 7
        %s352 = scalar_select %p351, %s348, 7
        %s353 = smul.addr %s350, 8
        %s354 = sadd.s32 %s352, %s353
        %s355 = smul.addr %s354, 4
        %s356 = scalar_lea.vmem %s0, %s355
        %p357 = pneg %p60
        %p358 = pneg %p57
        %s359 = smul.u32 %s24, 8
        %s360 = ssub.s32 %s359, 1
        %p361 = scmp.gt.s32.totalorder %s360, 0
        %s362 = scalar_select %p361, %s360, 0
        %p363 = scmp.lt.s32.totalorder %s23, 1
        %s364 = scalar_select %p363, %s23, 1
        %p365 = scmp.lt.s32.totalorder %s362, 7
        %s366 = scalar_select %p365, %s362, 7
        %s367 = smul.addr %s364, 8
        %s368 = sadd.s32 %s366, %s367
        %s369 = smul.addr %s368, 4
        %s370 = scalar_lea.vmem %s1, %s369
        %p371 = pneg %p96
        %p372 = pneg %p93
        %s373 = smul.u32 %s24, 8
        %s374 = sadd.s32 %s373, 8
        %p375 = scmp.lt.s32.totalorder %s374, 7
        %s376 = scalar_select %p375, %s374, 7
        %p377 = scmp.lt.s32.totalorder %s23, 1
        %s378 = scalar_select %p377, %s23, 1
        %p379 = scmp.lt.s32.totalorder %s376, 7
        %s380 = scalar_select %p379, %s376, 7
        %s381 = smul.addr %s378, 8
        %s382 = sadd.s32 %s380, %s381
        %s383 = smul.addr %s382, 4
        %s384 = scalar_lea.vmem %s2, %s383
        %p385 = pneg %p132
        %p386 = pneg %p129
        %p387 = pneg %p158
        %p388 = pneg %p155
        %p389 = scmp.lt.s32.totalorder %s25, 0
        %s390 = scalar_select %p389, %s25, 0
        %s391 = scalar_lea.vmem %s4, %s390
        %p392 = pneg %p184
        %p393 = pneg %p181
        %p394 = scmp.lt.s32.totalorder %s25, 0
        %s395 = scalar_select %p394, %s25, 0
        %s396 = scalar_lea.vmem %s5, %s395
        %p397 = pneg %p210
        %p398 = pneg %p207
        %p399 = pneg %p240
        %p400 = pneg %p237
        %s401 = smul.u32 8, %s24
        %p402 = scmp.lt.s32.totalorder %s23, 1
        %s403 = scalar_select %p402, %s23, 1
        %p404 = scmp.lt.s32.totalorder %s401, 7
        %s405 = scalar_select %p404, %s401, 7
        %p406 = scmp.lt.s32.totalorder %s25, 0
        %s407 = scalar_select %p406, %s25, 0
        %s408 = sadd.s32 %s407, %s405
        %s409 = smul.addr %s403, 8
        %s410 = sadd.s32 %s408, %s409
        %s411 = smul.addr %s410, 4
        %s412 = scalar_lea.vmem %s6, %s411
        %s413 = smul.u32 8, %s24
        %p414 = scmp.lt.s32.totalorder %s23, 1
        %s415 = scalar_select %p414, %s23, 1
        %p416 = scmp.lt.s32.totalorder %s413, 7
        %s417 = scalar_select %p416, %s413, 7
        %s418 = smul.addr %s415, 8
        %s419 = sadd.s32 %s417, %s418
        %s420 = smul.addr %s419, 4
        %s421 = scalar_lea.vmem %s0, %s420
        %s422 = smul.u32 8, %s24
        %s423 = smul.u32 %s24, 8
        %s424 = ssub.s32 %s423, 1
        %p425 = scmp.gt.s32.totalorder %s424, 0
        %s426 = scalar_select %p425, %s424, 0
        %p427 = scmp.lt.s32.totalorder %s23, 1
        %s428 = scalar_select %p427, %s23, 1
        %p429 = scmp.lt.s32.totalorder %s426, 7
        %s430 = scalar_select %p429, %s426, 7
        %s431 = smul.addr %s428, 8
        %s432 = sadd.s32 %s430, %s431
        %s433 = smul.addr %s432, 4
        %s434 = scalar_lea.vmem %s1, %s433
        %s435 = smul.u32 %s24, 8
        %s436 = ssub.s32 %s435, 1
        %p437 = scmp.gt.s32.totalorder %s436, 0
        %s438 = scalar_select %p437, %s436, 0
        %s439 = smul.u32 %s24, 8
        %s440 = sadd.s32 %s439, 8
        %p441 = scmp.lt.s32.totalorder %s440, 7
        %s442 = scalar_select %p441, %s440, 7
        %p443 = scmp.lt.s32.totalorder %s23, 1
        %s444 = scalar_select %p443, %s23, 1
        %p445 = scmp.lt.s32.totalorder %s442, 7
        %s446 = scalar_select %p445, %s442, 7
        %s447 = smul.addr %s444, 8
        %s448 = sadd.s32 %s446, %s447
        %s449 = smul.addr %s448, 4
        %s450 = scalar_lea.vmem %s2, %s449
        %s451 = smul.u32 %s24, 8
        %s452 = sadd.s32 %s451, 8
        %p453 = scmp.lt.s32.totalorder %s452, 7
        %s454 = scalar_select %p453, %s452, 7
        %p455 = scmp.lt.s32.totalorder %s25, 0
        %s456 = scalar_select %p455, %s25, 0
        %s457 = scalar_lea.vmem %s4, %s456
        %p458 = scmp.lt.s32.totalorder %s25, 0
        %s459 = scalar_select %p458, %s25, 0
        %s460 = scalar_lea.vmem %s5, %s459
        %s461 = smul.u32 8, %s24
        %p462 = scmp.lt.s32.totalorder %s23, 1
        %s463 = scalar_select %p462, %s23, 1
        %p464 = scmp.lt.s32.totalorder %s461, 7
        %s465 = scalar_select %p464, %s461, 7
        %p466 = scmp.lt.s32.totalorder %s25, 0
        %s467 = scalar_select %p466, %s25, 0
        %s468 = sadd.s32 %s467, %s465
        %s469 = smul.addr %s463, 8
        %s470 = sadd.s32 %s468, %s469
        %s471 = smul.addr %s470, 4
        %s472 = scalar_lea.vmem %s6, %s471
        %s473 = smul.u32 8, %s24
        %v475 = vld [vmem:[%s421] sm:$0xf]
        %v476 = vld [vmem:[%s421 + $0x4] sm:$0xf]
        %v477 = vld [vmem:[%s421 + $0x8] sm:$0xf]
        %v478 = vld [vmem:[%s421 + $0xc] sm:$0xf]
        %v479 = vld [vmem:[%s421 + $0x10] sm:$0xf]
        %v480 = vld [vmem:[%s421 + $0x14] sm:$0xf]
        %v481 = vld [vmem:[%s421 + $0x18] sm:$0xf]
        %v482 = vld [vmem:[%s421 + $0x1c] sm:$0xf]
        %v491 = vunpack.c.l.b16 %v475
        %v492 = vunpack.c.l.b16 %v476
        %v493 = vunpack.c.l.b16 %v477
        %v494 = vunpack.c.l.b16 %v478
        %v495 = vunpack.c.l.b16 %v479
        %v496 = vunpack.c.l.b16 %v480
        %v497 = vunpack.c.l.b16 %v481
        %v498 = vunpack.c.l.b16 %v482
        %v499 = vpack.c.b16 %v491, %v491
        %v500 = vpack.c.b16 %v492, %v492
        %v501 = vpack.c.b16 %v493, %v493
        %v502 = vpack.c.b16 %v494, %v494
        %v503 = vpack.c.b16 %v495, %v495
        %v504 = vpack.c.b16 %v496, %v496
        %v505 = vpack.c.b16 %v497, %v497
        %v506 = vpack.c.b16 %v498, %v498
        %v508 = vshrl.u32 %v499, 16
        %v510 = vrot.slane %v508, 7
        %v511 = vshll.u32 %v499, 16
        %v513 = vor.u32 %v510, %v511
        %v515 = vshrl.u32 %v500, 16
        %v517 = vrot.slane %v515, 7
        %v518 = vshll.u32 %v500, 16
        %v520 = vor.u32 %v517, %v518
        %v522 = vshrl.u32 %v501, 16
        %v524 = vrot.slane %v522, 7
        %v525 = vshll.u32 %v501, 16
        %v527 = vor.u32 %v524, %v525
        %v529 = vshrl.u32 %v502, 16
        %v531 = vrot.slane %v529, 7
        %v532 = vshll.u32 %v502, 16
        %v534 = vor.u32 %v531, %v532
        %v536 = vshrl.u32 %v503, 16
        %v538 = vrot.slane %v536, 7
        %v539 = vshll.u32 %v503, 16
        %v541 = vor.u32 %v538, %v539
        %v543 = vshrl.u32 %v504, 16
        %v545 = vrot.slane %v543, 7
        %v546 = vshll.u32 %v504, 16
        %v548 = vor.u32 %v545, %v546
        %v550 = vshrl.u32 %v505, 16
        %v552 = vrot.slane %v550, 7
        %v553 = vshll.u32 %v505, 16
        %v555 = vor.u32 %v552, %v553
        %v557 = vshrl.u32 %v506, 16
        %v559 = vrot.slane %v557, 7
        %v560 = vshll.u32 %v506, 16
        %v562 = vor.u32 %v559, %v560
        %vm571 = vcmask 1040384
        %vm572 = vsmask.f32 256
        %vm573 = vmand %vm571, %vm572
        %v574 = vsel %vm573, 0, %v513
        %v575 = vsel %vm573, 0, %v520
        %v576 = vsel %vm573, 0, %v527
        %v577 = vsel %vm573, 0, %v534
        %v578 = vsel %vm573, 0, %v541
        %v579 = vsel %vm573, 0, %v548
        %v580 = vsel %vm573, 0, %v555
        %v581 = vsel %vm573, 0, %v562
        %v582 = vrot.slane %v511, 1
        %v583 = vor.u32 %v508, %v582
        %v584 = vrot.slane %v518, 1
        %v585 = vor.u32 %v515, %v584
        %v586 = vrot.slane %v525, 1
        %v587 = vor.u32 %v522, %v586
        %v588 = vrot.slane %v532, 1
        %v589 = vor.u32 %v529, %v588
        %v590 = vrot.slane %v539, 1
        %v591 = vor.u32 %v536, %v590
        %v592 = vrot.slane %v546, 1
        %v593 = vor.u32 %v543, %v592
        %v594 = vrot.slane %v553, 1
        %v595 = vor.u32 %v550, %v594
        %v596 = vrot.slane %v560, 1
        %v597 = vor.u32 %v557, %v596
        %vm606 = vcmask 1043456
        %vm607 = vsmask.f32 3328
        %vm608 = vmand %vm606, %vm607
        %v609 = vsel %vm608, %v583, 0
        %v610 = vsel %vm608, %v585, 0
        %v611 = vsel %vm608, %v587, 0
        %v612 = vsel %vm608, %v589, 0
        %v613 = vsel %vm608, %v591, 0
        %v614 = vsel %vm608, %v593, 0
        %v615 = vsel %vm608, %v595, 0
        %v616 = vsel %vm608, %v597, 0
        %v633 = vunpack.c.l.b16 %v574
        %v634 = vunpack.c.l.b16 %v609
        %v635 = vunpack.c.l.b16 %v575
        %v636 = vunpack.c.l.b16 %v610
        %v637 = vunpack.c.l.b16 %v576
        %v638 = vunpack.c.l.b16 %v611
        %v639 = vunpack.c.l.b16 %v577
        %v640 = vunpack.c.l.b16 %v612
        %v641 = vunpack.c.l.b16 %v578
        %v642 = vunpack.c.l.b16 %v613
        %v643 = vunpack.c.l.b16 %v579
        %v644 = vunpack.c.l.b16 %v614
        %v645 = vunpack.c.l.b16 %v580
        %v646 = vunpack.c.l.b16 %v615
        %v647 = vunpack.c.l.b16 %v581
        %v648 = vunpack.c.l.b16 %v616
        %v649 = vpack.c.b16 %v491, %v633
        %v650 = vpack.c.b16 %v634, %v634
        %v651 = vpack.c.b16 %v492, %v635
        %v652 = vpack.c.b16 %v636, %v636
        %v653 = vpack.c.b16 %v493, %v637
        %v654 = vpack.c.b16 %v638, %v638
        %v655 = vpack.c.b16 %v494, %v639
        %v656 = vpack.c.b16 %v640, %v640
        %v657 = vpack.c.b16 %v495, %v641
        %v658 = vpack.c.b16 %v642, %v642
        %v659 = vpack.c.b16 %v496, %v643
        %v660 = vpack.c.b16 %v644, %v644
        %v661 = vpack.c.b16 %v497, %v645
        %v662 = vpack.c.b16 %v646, %v646
        %v663 = vpack.c.b16 %v498, %v647
        %v664 = vpack.c.b16 %v648, %v648
        %s681 = scalar_lea.vmem [#allocation2], 12
        %682 = vst [vmem:[%s681] sm:$0xff] %v649
        %683 = vst [vmem:[%s681 + $0x8] sm:$0xf] %v650
        %684 = vst [vmem:[%s681 + $0xc] sm:$0xff] %v651
        %685 = vst [vmem:[%s681 + $0x14] sm:$0xf] %v652
        %686 = vst [vmem:[%s681 + $0x18] sm:$0xff] %v653
        %687 = vst [vmem:[%s681 + $0x20] sm:$0xf] %v654
        %688 = vst [vmem:[%s681 + $0x24] sm:$0xff] %v655
        %689 = vst [vmem:[%s681 + $0x2c] sm:$0xf] %v656
        %690 = vst [vmem:[%s681 + $0x30] sm:$0xff] %v657
        %691 = vst [vmem:[%s681 + $0x38] sm:$0xf] %v658
        %692 = vst [vmem:[%s681 + $0x3c] sm:$0xff] %v659
        %693 = vst [vmem:[%s681 + $0x44] sm:$0xf] %v660
        %694 = vst [vmem:[%s681 + $0x48] sm:$0xff] %v661
        %695 = vst [vmem:[%s681 + $0x50] sm:$0xf] %v662
        %696 = vst [vmem:[%s681 + $0x54] sm:$0xff] %v663
        %697 = vst [vmem:[%s681 + $0x5c] sm:$0xf] %v664
        %v698 = vld [vmem:[%s434] sm:$0xf]
        %v700 = vunpack.c.l.b16 %v698
        %v701 = vpack.c.b16 %v700, %v700
        %v703 = vshrl.u32 %v701, 16
        %v705 = vrot.slane %v703, 7
        %v706 = vshll.u32 %v701, 16
        %v708 = vor.u32 %v705, %v706
        %v710 = vsel %vm573, 0, %v708
        %v711 = vrot.slane %v706, 1
        %v712 = vor.u32 %v703, %v711
        %v714 = vsel %vm608, %v712, 0
        %v717 = vunpack.c.l.b16 %v710
        %v718 = vunpack.c.l.b16 %v714
        %v719 = vpack.c.b16 %v700, %v717
        %v720 = vpack.c.b16 %v718, %v718
        %723 = vst [vmem:[#allocation2] sm:$0xff] %v719
        %724 = vst [vmem:[#allocation2 + $0x8] sm:$0xf] %v720
        %v725 = vld [vmem:[%s450] sm:$0xf]
        %v727 = vunpack.c.l.b16 %v725
        %v728 = vpack.c.b16 %v727, %v727
        %v730 = vshrl.u32 %v728, 16
        %v732 = vrot.slane %v730, 7
        %v733 = vshll.u32 %v728, 16
        %v735 = vor.u32 %v732, %v733
        %v737 = vsel %vm573, 0, %v735
        %v738 = vrot.slane %v733, 1
        %v739 = vor.u32 %v730, %v738
        %v741 = vsel %vm608, %v739, 0
        %v744 = vunpack.c.l.b16 %v737
        %v745 = vunpack.c.l.b16 %v741
        %v746 = vpack.c.b16 %v727, %v744
        %v747 = vpack.c.b16 %v745, %v745
        %s750 = scalar_lea.vmem [#allocation2], 108
        %751 = vst [vmem:[%s750] sm:$0xff] %v746
        %752 = vst [vmem:[%s750 + $0x8] sm:$0xf] %v747
        %p753 = scmp.eq.s32.totalorder %s24, 0
        // Predicated region
        $region49: #{bottleneck_forward.4} parent=43 // pred_check
          %p754 = pneg %p753
        $region50: #{bottleneck_forward.4} parent=43 // pred_check_branch
          %756 = sbr.rel (%p754) target = $region52
        $region51: #{bottleneck_forward.4} parent=43 // pred_region
          %757 = vst [vmem:[#allocation2] sm:$0xff] 0
          %758 = vst [vmem:[#allocation2 + $0x8] sm:$0xf] 0
          %759 = vst [vmem:[%s750] sm:$0xff] 0
          %760 = vst [vmem:[%s750 + $0x8] sm:$0xf] 0
        $region52: #{bottleneck_forward.4} parent=43 // pred_fallthru
          _
        %v761 = vld [vmem:[#allocation2] sm:$0xff]
        %v762 = vld [vmem:[#allocation2 + $0x8] sm:$0xf]
        %v763 = vld [vmem:[#allocation2 + $0xc] sm:$0xff]
        %v764 = vld [vmem:[#allocation2 + $0x14] sm:$0xf]
        %v765 = vld [vmem:[#allocation2 + $0x18] sm:$0xff]
        %v766 = vld [vmem:[#allocation2 + $0x20] sm:$0xf]
        %v767 = vld [vmem:[#allocation2 + $0x24] sm:$0xff]
        %v768 = vld [vmem:[#allocation2 + $0x2c] sm:$0xf]
        %v769 = vld [vmem:[#allocation2 + $0x30] sm:$0xff]
        %v770 = vld [vmem:[#allocation2 + $0x38] sm:$0xf]
        %v771 = vld [vmem:[#allocation2 + $0x3c] sm:$0xff]
        %v772 = vld [vmem:[#allocation2 + $0x44] sm:$0xf]
        %v773 = vld [vmem:[#allocation2 + $0x48] sm:$0xff]
        %v774 = vld [vmem:[#allocation2 + $0x50] sm:$0xf]
        %v775 = vld [vmem:[#allocation2 + $0x54] sm:$0xff]
        %v776 = vld [vmem:[#allocation2 + $0x5c] sm:$0xf]
        %v777 = vld [vmem:[#allocation4] sm:$0xf]
        %v778 = vld [vmem:[#allocation4 + $0x4] sm:$0xf]
        %v779 = vld [vmem:[#allocation4 + $0x8] sm:$0xf]
        %v780 = vld [vmem:[#allocation4 + $0xc] sm:$0xf]
        %v781 = vld [vmem:[#allocation4 + $0x10] sm:$0xf]
        %v782 = vld [vmem:[#allocation4 + $0x14] sm:$0xf]
        %v783 = vld [vmem:[#allocation4 + $0x18] sm:$0xf]
        %v784 = vld [vmem:[#allocation4 + $0x1c] sm:$0xf]
        %v785 = vld [vmem:[#allocation4 + $0x20] sm:$0xf]
        %v786 = vld [vmem:[#allocation4 + $0x24] sm:$0xf]
        %v787 = vld [vmem:[#allocation4 + $0x28] sm:$0xf]
        %v788 = vld [vmem:[#allocation4 + $0x2c] sm:$0xf]
        %v789 = vld [vmem:[#allocation4 + $0x30] sm:$0xf]
        %v790 = vld [vmem:[#allocation4 + $0x34] sm:$0xf]
        %v791 = vld [vmem:[#allocation4 + $0x38] sm:$0xf]
        %v792 = vld [vmem:[#allocation4 + $0x3c] sm:$0xf]
        %v793 = vld [vmem:[#allocation4 + $0x40] sm:$0xf]
        %v794 = vld [vmem:[#allocation4 + $0x44] sm:$0xf]
        %v795 = vld [vmem:[#allocation4 + $0x48] sm:$0xf]
        %v796 = vld [vmem:[#allocation4 + $0x4c] sm:$0xf]
        %v797 = vld [vmem:[#allocation4 + $0x50] sm:$0xf]
        %v798 = vld [vmem:[#allocation4 + $0x54] sm:$0xf]
        %v799 = vld [vmem:[#allocation4 + $0x58] sm:$0xf]
        %v800 = vld [vmem:[#allocation4 + $0x5c] sm:$0xf]
        %v801 = vld [vmem:[#allocation4 + $0x60] sm:$0xf]
        %v802 = vld [vmem:[#allocation4 + $0x64] sm:$0xf]
        %v803 = vld [vmem:[#allocation4 + $0x68] sm:$0xf]
        %v804 = vld [vmem:[#allocation4 + $0x6c] sm:$0xf]
        %v805 = vld [vmem:[#allocation4 + $0x70] sm:$0xf]
        %v806 = vld [vmem:[#allocation4 + $0x74] sm:$0xf]
        %v807 = vld [vmem:[#allocation4 + $0x78] sm:$0xf]
        %v808 = vld [vmem:[#allocation4 + $0x7c] sm:$0xf]
        %v809 = vld [vmem:[#allocation4 + $0x80] sm:$0xf]
        %v810 = vld [vmem:[#allocation4 + $0x84] sm:$0xf]
        %v811 = vld [vmem:[#allocation4 + $0x88] sm:$0xf]
        %v812 = vld [vmem:[#allocation4 + $0x8c] sm:$0xf]
        %v813 = vld [vmem:[#allocation4 + $0x90] sm:$0xf]
        %v814 = vld [vmem:[#allocation4 + $0x94] sm:$0xf]
        %v815 = vld [vmem:[#allocation4 + $0x98] sm:$0xf]
        %v816 = vld [vmem:[#allocation4 + $0x9c] sm:$0xf]
        %v817 = vld [vmem:[#allocation4 + $0xa0] sm:$0xf]
        %v818 = vld [vmem:[#allocation4 + $0xa4] sm:$0xf]
        %v819 = vld [vmem:[#allocation4 + $0xa8] sm:$0xf]
        %v820 = vld [vmem:[#allocation4 + $0xac] sm:$0xf]
        %v821 = vld [vmem:[#allocation4 + $0xb0] sm:$0xf]
        %v822 = vld [vmem:[#allocation4 + $0xb4] sm:$0xf]
        %v823 = vld [vmem:[#allocation4 + $0xb8] sm:$0xf]
        %v824 = vld [vmem:[#allocation4 + $0xbc] sm:$0xf]
        %v841 = vunpack.c.l.b16 %v761
        %v842 = vunpack.c.h.b16 %v761
        %v843 = vunpack.c.l.b16 %v762
        %v844 = vunpack.c.l.b16 %v763
        %v845 = vunpack.c.h.b16 %v763
        %v846 = vunpack.c.l.b16 %v764
        %v847 = vunpack.c.l.b16 %v765
        %v848 = vunpack.c.h.b16 %v765
        %v849 = vunpack.c.l.b16 %v766
        %v850 = vunpack.c.l.b16 %v767
        %v851 = vunpack.c.h.b16 %v767
        %v852 = vunpack.c.l.b16 %v768
        %v853 = vunpack.c.l.b16 %v769
        %v854 = vunpack.c.h.b16 %v769
        %v855 = vunpack.c.l.b16 %v770
        %v856 = vunpack.c.l.b16 %v771
        %v857 = vunpack.c.h.b16 %v771
        %v858 = vunpack.c.l.b16 %v772
        %v859 = vunpack.c.l.b16 %v773
        %v860 = vunpack.c.h.b16 %v773
        %v861 = vunpack.c.l.b16 %v774
        %v862 = vunpack.c.l.b16 %v775
        %v863 = vunpack.c.h.b16 %v775
        %v864 = vunpack.c.l.b16 %v776
        %v865 = vpack.c.b16 %v844, %v841
        %v866 = vpack.c.b16 %v845, %v842
        %v867 = vpack.c.b16 %v846, %v843
        %v868 = vpack.c.b16 %v850, %v847
        %v869 = vpack.c.b16 %v851, %v848
        %v870 = vpack.c.b16 %v852, %v849
        %v871 = vpack.c.b16 %v856, %v853
        %v872 = vpack.c.b16 %v857, %v854
        %v873 = vpack.c.b16 %v858, %v855
        %v874 = vpack.c.b16 %v862, %v859
        %v875 = vpack.c.b16 %v863, %v860
        %v876 = vpack.c.b16 %v864, %v861
        %v937 = vunpack.c.l.b16 %v777
        %v938 = vunpack.c.l.b16 %v778
        %v939 = vunpack.c.l.b16 %v779
        %v940 = vunpack.c.l.b16 %v780
        %v941 = vunpack.c.l.b16 %v781
        %v942 = vunpack.c.l.b16 %v782
        %v943 = vunpack.c.l.b16 %v783
        %v944 = vunpack.c.l.b16 %v784
        %v945 = vunpack.c.l.b16 %v785
        %v946 = vunpack.c.l.b16 %v786
        %v947 = vunpack.c.l.b16 %v787
        %v948 = vunpack.c.l.b16 %v788
        %v949 = vunpack.c.l.b16 %v789
        %v950 = vunpack.c.l.b16 %v790
        %v951 = vunpack.c.l.b16 %v791
        %v952 = vunpack.c.l.b16 %v792
        %v953 = vunpack.c.l.b16 %v793
        %v954 = vunpack.c.l.b16 %v794
        %v955 = vunpack.c.l.b16 %v795
        %v956 = vunpack.c.l.b16 %v796
        %v957 = vunpack.c.l.b16 %v797
        %v958 = vunpack.c.l.b16 %v798
        %v959 = vunpack.c.l.b16 %v799
        %v960 = vunpack.c.l.b16 %v800
        %v961 = vunpack.c.l.b16 %v801
        %v962 = vunpack.c.l.b16 %v802
        %v963 = vunpack.c.l.b16 %v803
        %v964 = vunpack.c.l.b16 %v804
        %v965 = vunpack.c.l.b16 %v805
        %v966 = vunpack.c.l.b16 %v806
        %v967 = vunpack.c.l.b16 %v807
        %v968 = vunpack.c.l.b16 %v808
        %v969 = vunpack.c.l.b16 %v809
        %v970 = vunpack.c.l.b16 %v810
        %v971 = vunpack.c.l.b16 %v811
        %v972 = vunpack.c.l.b16 %v812
        %v973 = vunpack.c.l.b16 %v813
        %v974 = vunpack.c.l.b16 %v814
        %v975 = vunpack.c.l.b16 %v815
        %v976 = vunpack.c.l.b16 %v816
        %v977 = vunpack.c.l.b16 %v817
        %v978 = vunpack.c.l.b16 %v818
        %v979 = vunpack.c.l.b16 %v819
        %v980 = vunpack.c.l.b16 %v820
        %v981 = vunpack.c.l.b16 %v821
        %v982 = vunpack.c.l.b16 %v822
        %v983 = vunpack.c.l.b16 %v823
        %v984 = vunpack.c.l.b16 %v824
        %v985 = vpack.c.b16 %v938, %v937
        %v986 = vpack.c.b16 %v940, %v939
        %v987 = vpack.c.b16 %v942, %v941
        %v988 = vpack.c.b16 %v944, %v943
        %v989 = vpack.c.b16 %v946, %v945
        %v990 = vpack.c.b16 %v948, %v947
        %v991 = vpack.c.b16 %v950, %v949
        %v992 = vpack.c.b16 %v952, %v951
        %v993 = vpack.c.b16 %v954, %v953
        %v994 = vpack.c.b16 %v956, %v955
        %v995 = vpack.c.b16 %v958, %v957
        %v996 = vpack.c.b16 %v960, %v959
        %v997 = vpack.c.b16 %v962, %v961
        %v998 = vpack.c.b16 %v964, %v963
        %v999 = vpack.c.b16 %v966, %v965
        %v1000 = vpack.c.b16 %v968, %v967
        %v1001 = vpack.c.b16 %v970, %v969
        %v1002 = vpack.c.b16 %v972, %v971
        %v1003 = vpack.c.b16 %v974, %v973
        %v1004 = vpack.c.b16 %v976, %v975
        %v1005 = vpack.c.b16 %v978, %v977
        %v1006 = vpack.c.b16 %v980, %v979
        %v1007 = vpack.c.b16 %v982, %v981
        %v1008 = vpack.c.b16 %v984, %v983
        %1033 = vmatprep.subr.bf16.mxu0 0
        %1034 = vmatpush1.bf16.msra.mxu0 %v985
        %1035 = vmatprep.subr.bf16.mxu0 0
        %1036 = vmatpush1.bf16.msra.mxu0 %v986
        %1037 = vmatprep.subr.bf16.mxu0 0
        %1038 = vmatpush1.bf16.msra.mxu0 %v987
        %1039 = vmatprep.subr.bf16.mxu0 0
        %1040 = vmatpush1.bf16.msra.mxu0 %v988
        %1041 = vmatprep.subr.bf16.mxu0 0
        %1042 = vmatpush1.bf16.msra.mxu0 %v989
        %1043 = vmatprep.subr.bf16.mxu0 0
        %1044 = vmatpush1.bf16.msra.mxu0 %v990
        %1045 = vmatprep.subr.bf16.mxu0 0
        %1046 = vmatpush1.bf16.msra.mxu0 %v991
        %1047 = vmatprep.subr.bf16.mxu0 0
        %1048 = vmatpush1.bf16.msra.mxu0 %v992
        %1049 = vmatprep.subr.bf16.mxu0 0
        %1050 = vmatpush1.bf16.msra.mxu0 %v993
        %1051 = vmatprep.subr.bf16.mxu0 0
        %1052 = vmatpush1.bf16.msra.mxu0 %v994
        %1053 = vmatprep.subr.bf16.mxu0 0
        %1054 = vmatpush1.bf16.msra.mxu0 %v995
        %1055 = vmatprep.subr.bf16.mxu0 0
        %1056 = vmatpush1.bf16.msra.mxu0 %v996
        %1057 = vmatprep.subr.bf16.mxu0 0
        %1058 = vmatpush1.bf16.msra.mxu0 %v997
        %1059 = vmatprep.subr.bf16.mxu0 0
        %1060 = vmatpush1.bf16.msra.mxu0 %v998
        %1061 = vmatprep.subr.bf16.mxu0 0
        %1062 = vmatpush1.bf16.msra.mxu0 %v999
        %1063 = vmatprep.subr.bf16.mxu0 0
        %1064 = vmatpush1.bf16.msra.mxu0 %v1000
        %1065 = vmatprep.mubr.bf16.mxu0 %v866
        %1066 = vmatmul.mubr.bf16.gmra.mrb[0].mxu0 %v865
        %v1067 = vpop.f32.mrb[0].mxu0
        %v1068 = vadd.f32 0.0, %v1067
        %v1069 = vpop.f32.mrb[0].mxu0
        %v1070 = vpop.f32.mrb[0].mxu0
        %v1071 = vadd.f32 0.0, %v1070
        %v1072 = vpop.f32.mrb[0].mxu0
        %1073 = vmatprep.mubr.bf16.mxu0 %v869
        %1074 = vmatmul.mubr.bf16.gmra.mrb[0].mxu0 %v868
        %v1075 = vpop.f32.mrb[0].mxu0
        %v1076 = vadd.f32 0.0, %v1075
        %v1077 = vpop.f32.mrb[0].mxu0
        %v1078 = vpop.f32.mrb[0].mxu0
        %v1079 = vadd.f32 0.0, %v1078
        %v1080 = vpop.f32.mrb[0].mxu0
        %1081 = vmatprep.mubr.bf16.mxu0 %v872
        %1082 = vmatmul.mubr.bf16.gmra.mrb[0].mxu0 %v871
        %v1083 = vpop.f32.mrb[0].mxu0
        %v1084 = vadd.f32 0.0, %v1083
        %v1085 = vpop.f32.mrb[0].mxu0
        %v1086 = vpop.f32.mrb[0].mxu0
        %v1087 = vadd.f32 0.0, %v1086
        %v1088 = vpop.f32.mrb[0].mxu0
        %1089 = vmatprep.mubr.bf16.mxu0 %v875
        %1090 = vmatmul.mubr.bf16.gmra.mrb[0].mxu0 %v874
        %v1091 = vpop.f32.mrb[0].mxu0
        %v1092 = vadd.f32 0.0, %v1091
        %v1093 = vpop.f32.mrb[0].mxu0
        %v1094 = vpop.f32.mrb[0].mxu0
        %v1095 = vadd.f32 0.0, %v1094
        %v1096 = vpop.f32.mrb[0].mxu0
        %1097 = vdwg.mxu0
        %1098 = vmatprep.subr.bf16.mxu0 0
        %1099 = vmatpush1.bf16.msra.mxu0 %v1001
        %1100 = vmatprep.subr.bf16.mxu0 0
        %1101 = vmatpush1.bf16.msra.mxu0 %v1002
        %1102 = vmatprep.subr.bf16.mxu0 0
        %1103 = vmatpush1.bf16.msra.mxu0 %v1003
        %1104 = vmatprep.subr.bf16.mxu0 0
        %1105 = vmatpush1.bf16.msra.mxu0 %v1004
        %1106 = vmatprep.subr.bf16.mxu0 0
        %1107 = vmatpush1.bf16.msra.mxu0 %v1005
        %1108 = vmatprep.subr.bf16.mxu0 0
        %1109 = vmatpush1.bf16.msra.mxu0 %v1006
        %1110 = vmatprep.subr.bf16.mxu0 0
        %1111 = vmatpush1.bf16.msra.mxu0 %v1007
        %1112 = vmatprep.subr.bf16.mxu0 0
        %1113 = vmatpush1.bf16.msra.mxu0 %v1008
        %1114 = vmatprep.subr.bf16.mxu0 0
        %1115 = vmatpush1.bf16.msra.mxu0 0
        %1116 = vmatprep.subr.bf16.mxu0 0
        %1117 = vmatpush1.bf16.msra.mxu0 0
        %1118 = vmatprep.subr.bf16.mxu0 0
        %1119 = vmatpush1.bf16.msra.mxu0 0
        %1120 = vmatprep.subr.bf16.mxu0 0
        %1121 = vmatpush1.bf16.msra.mxu0 0
        %1122 = vmatprep.subr.bf16.mxu0 0
        %1123 = vmatpush1.bf16.msra.mxu0 0
        %1124 = vmatprep.subr.bf16.mxu0 0
        %1125 = vmatpush1.bf16.msra.mxu0 0
        %1126 = vmatprep.subr.bf16.mxu0 0
        %1127 = vmatpush1.bf16.msra.mxu0 0
        %1128 = vmatprep.subr.bf16.mxu0 0
        %1129 = vmatpush1.bf16.msra.mxu0 0
        %1130 = vmatprep.mubr.bf16.mxu0 0
        %1131 = vmatmul.mubr.bf16.gmra.mrb[0].mxu0 %v867
        %v1132 = vpop.f32.mrb[0].mxu0
        %v1133 = vadd.f32 %v1068, %v1132
        %v1134 = vpop.f32.mrb[0].mxu0
        %v1135 = vpop.f32.mrb[0].mxu0
        %v1136 = vadd.f32 %v1071, %v1135
        %v1137 = vpop.f32.mrb[0].mxu0
        %1138 = vmatprep.mubr.bf16.mxu0 0
        %1139 = vmatmul.mubr.bf16.gmra.mrb[0].mxu0 %v870
        %v1140 = vpop.f32.mrb[0].mxu0
        %v1141 = vadd.f32 %v1076, %v1140
        %v1142 = vpop.f32.mrb[0].mxu0
        %v1143 = vpop.f32.mrb[0].mxu0
        %v1144 = vadd.f32 %v1079, %v1143
        %v1145 = vpop.f32.mrb[0].mxu0
        %1146 = vmatprep.mubr.bf16.mxu0 0
        %1147 = vmatmul.mubr.bf16.gmra.mrb[0].mxu0 %v873
        %v1148 = vpop.f32.mrb[0].mxu0
        %v1149 = vadd.f32 %v1084, %v1148
        %v1150 = vpop.f32.mrb[0].mxu0
        %v1151 = vpop.f32.mrb[0].mxu0
        %v1152 = vadd.f32 %v1087, %v1151
        %v1153 = vpop.f32.mrb[0].mxu0
        %1154 = vmatprep.mubr.bf16.mxu0 0
        %1155 = vmatmul.mubr.bf16.gmra.mrb[0].mxu0 %v876
        %v1156 = vpop.f32.mrb[0].mxu0
        %v1157 = vadd.f32 %v1092, %v1156
        %v1158 = vpop.f32.mrb[0].mxu0
        %v1159 = vpop.f32.mrb[0].mxu0
        %v1160 = vadd.f32 %v1095, %v1159
        %v1161 = vpop.f32.mrb[0].mxu0
        %1162 = vdwg.mxu0
        %1163 = vst [vmem:[#allocation3] sm:$0xff] %v1133
        %1164 = vst [vmem:[#allocation3 + $0x8] sm:$0xff] %v1136
        %1165 = vst [vmem:[#allocation3 + $0x10] sm:$0xff] %v1141
        %1166 = vst [vmem:[#allocation3 + $0x18] sm:$0xff] %v1144
        %1167 = vst [vmem:[#allocation3 + $0x20] sm:$0xff] %v1149
        %1168 = vst [vmem:[#allocation3 + $0x28] sm:$0xff] %v1152
        %1169 = vst [vmem:[#allocation3 + $0x30] sm:$0xff] %v1157
        %1170 = vst [vmem:[#allocation3 + $0x38] sm:$0xff] %v1160
        %v1171 = vld [vmem:[#allocation3] sm:$0xff]
        %v1172 = vld [vmem:[#allocation3 + $0x8] sm:$0xff]
        %v1173 = vld [vmem:[#allocation3 + $0x10] sm:$0xff]
        %v1174 = vld [vmem:[#allocation3 + $0x18] sm:$0xff]
        %v1175 = vld [vmem:[#allocation3 + $0x20] sm:$0xff]
        %v1176 = vld [vmem:[#allocation3 + $0x28] sm:$0xff]
        %v1177 = vld [vmem:[#allocation3 + $0x30] sm:$0xff]
        %v1178 = vld [vmem:[#allocation3 + $0x38] sm:$0xff]
        %v1179 = vld [vmem:[%s681] sm:$0xff]
        %v1180 = vld [vmem:[%s681 + $0x8] sm:$0xf]
        %v1181 = vld [vmem:[%s681 + $0xc] sm:$0xff]
        %v1182 = vld [vmem:[%s681 + $0x14] sm:$0xf]
        %v1183 = vld [vmem:[%s681 + $0x18] sm:$0xff]
        %v1184 = vld [vmem:[%s681 + $0x20] sm:$0xf]
        %v1185 = vld [vmem:[%s681 + $0x24] sm:$0xff]
        %v1186 = vld [vmem:[%s681 + $0x2c] sm:$0xf]
        %v1187 = vld [vmem:[%s681 + $0x30] sm:$0xff]
        %v1188 = vld [vmem:[%s681 + $0x38] sm:$0xf]
        %v1189 = vld [vmem:[%s681 + $0x3c] sm:$0xff]
        %v1190 = vld [vmem:[%s681 + $0x44] sm:$0xf]
        %v1191 = vld [vmem:[%s681 + $0x48] sm:$0xff]
        %v1192 = vld [vmem:[%s681 + $0x50] sm:$0xf]
        %v1193 = vld [vmem:[%s681 + $0x54] sm:$0xff]
        %v1194 = vld [vmem:[%s681 + $0x5c] sm:$0xf]
        %s1195 = scalar_lea.vmem [#allocation4], 192
        %v1196 = vld [vmem:[%s1195] sm:$0xf]
        %v1197 = vld [vmem:[%s1195 + $0x4] sm:$0xf]
        %v1198 = vld [vmem:[%s1195 + $0x8] sm:$0xf]
        %v1199 = vld [vmem:[%s1195 + $0xc] sm:$0xf]
        %v1200 = vld [vmem:[%s1195 + $0x10] sm:$0xf]
        %v1201 = vld [vmem:[%s1195 + $0x14] sm:$0xf]
        %v1202 = vld [vmem:[%s1195 + $0x18] sm:$0xf]
        %v1203 = vld [vmem:[%s1195 + $0x1c] sm:$0xf]
        %v1204 = vld [vmem:[%s1195 + $0x20] sm:$0xf]
        %v1205 = vld [vmem:[%s1195 + $0x24] sm:$0xf]
        %v1206 = vld [vmem:[%s1195 + $0x28] sm:$0xf]
        %v1207 = vld [vmem:[%s1195 + $0x2c] sm:$0xf]
        %v1208 = vld [vmem:[%s1195 + $0x30] sm:$0xf]
        %v1209 = vld [vmem:[%s1195 + $0x34] sm:$0xf]
        %v1210 = vld [vmem:[%s1195 + $0x38] sm:$0xf]
        %v1211 = vld [vmem:[%s1195 + $0x3c] sm:$0xf]
        %v1212 = vld [vmem:[%s1195 + $0x40] sm:$0xf]
        %v1213 = vld [vmem:[%s1195 + $0x44] sm:$0xf]
        %v1214 = vld [vmem:[%s1195 + $0x48] sm:$0xf]
        %v1215 = vld [vmem:[%s1195 + $0x4c] sm:$0xf]
        %v1216 = vld [vmem:[%s1195 + $0x50] sm:$0xf]
        %v1217 = vld [vmem:[%s1195 + $0x54] sm:$0xf]
        %v1218 = vld [vmem:[%s1195 + $0x58] sm:$0xf]
        %v1219 = vld [vmem:[%s1195 + $0x5c] sm:$0xf]
        %v1220 = vld [vmem:[%s1195 + $0x60] sm:$0xf]
        %v1221 = vld [vmem:[%s1195 + $0x64] sm:$0xf]
        %v1222 = vld [vmem:[%s1195 + $0x68] sm:$0xf]
        %v1223 = vld [vmem:[%s1195 + $0x6c] sm:$0xf]
        %v1224 = vld [vmem:[%s1195 + $0x70] sm:$0xf]
        %v1225 = vld [vmem:[%s1195 + $0x74] sm:$0xf]
        %v1226 = vld [vmem:[%s1195 + $0x78] sm:$0xf]
        %v1227 = vld [vmem:[%s1195 + $0x7c] sm:$0xf]
        %v1228 = vld [vmem:[%s1195 + $0x80] sm:$0xf]
        %v1229 = vld [vmem:[%s1195 + $0x84] sm:$0xf]
        %v1230 = vld [vmem:[%s1195 + $0x88] sm:$0xf]
        %v1231 = vld [vmem:[%s1195 + $0x8c] sm:$0xf]
        %v1232 = vld [vmem:[%s1195 + $0x90] sm:$0xf]
        %v1233 = vld [vmem:[%s1195 + $0x94] sm:$0xf]
        %v1234 = vld [vmem:[%s1195 + $0x98] sm:$0xf]
        %v1235 = vld [vmem:[%s1195 + $0x9c] sm:$0xf]
        %v1236 = vld [vmem:[%s1195 + $0xa0] sm:$0xf]
        %v1237 = vld [vmem:[%s1195 + $0xa4] sm:$0xf]
        %v1238 = vld [vmem:[%s1195 + $0xa8] sm:$0xf]
        %v1239 = vld [vmem:[%s1195 + $0xac] sm:$0xf]
        %v1240 = vld [vmem:[%s1195 + $0xb0] sm:$0xf]
        %v1241 = vld [vmem:[%s1195 + $0xb4] sm:$0xf]
        %v1242 = vld [vmem:[%s1195 + $0xb8] sm:$0xf]
        %v1243 = vld [vmem:[%s1195 + $0xbc] sm:$0xf]
        %v1260 = vunpack.c.l.b16 %v1179
        %v1261 = vunpack.c.h.b16 %v1179
        %v1262 = vunpack.c.l.b16 %v1180
        %v1263 = vunpack.c.l.b16 %v1181
        %v1264 = vunpack.c.h.b16 %v1181
        %v1265 = vunpack.c.l.b16 %v1182
        %v1266 = vunpack.c.l.b16 %v1183
        %v1267 = vunpack.c.h.b16 %v1183
        %v1268 = vunpack.c.l.b16 %v1184
        %v1269 = vunpack.c.l.b16 %v1185
        %v1270 = vunpack.c.h.b16 %v1185
        %v1271 = vunpack.c.l.b16 %v1186
        %v1272 = vunpack.c.l.b16 %v1187
        %v1273 = vunpack.c.h.b16 %v1187
        %v1274 = vunpack.c.l.b16 %v1188
        %v1275 = vunpack.c.l.b16 %v1189
        %v1276 = vunpack.c.h.b16 %v1189
        %v1277 = vunpack.c.l.b16 %v1190
        %v1278 = vunpack.c.l.b16 %v1191
        %v1279 = vunpack.c.h.b16 %v1191
        %v1280 = vunpack.c.l.b16 %v1192
        %v1281 = vunpack.c.l.b16 %v1193
        %v1282 = vunpack.c.h.b16 %v1193
        %v1283 = vunpack.c.l.b16 %v1194
        %v1284 = vpack.c.b16 %v1263, %v1260
        %v1285 = vpack.c.b16 %v1264, %v1261
        %v1286 = vpack.c.b16 %v1265, %v1262
        %v1287 = vpack.c.b16 %v1269, %v1266
        %v1288 = vpack.c.b16 %v1270, %v1267
        %v1289 = vpack.c.b16 %v1271, %v1268
        %v1290 = vpack.c.b16 %v1275, %v1272
        %v1291 = vpack.c.b16 %v1276, %v1273
        %v1292 = vpack.c.b16 %v1277, %v1274
        %v1293 = vpack.c.b16 %v1281, %v1278
        %v1294 = vpack.c.b16 %v1282, %v1279
        %v1295 = vpack.c.b16 %v1283, %v1280
        %v1356 = vunpack.c.l.b16 %v1196
        %v1357 = vunpack.c.l.b16 %v1197
        %v1358 = vunpack.c.l.b16 %v1198
        %v1359 = vunpack.c.l.b16 %v1199
        %v1360 = vunpack.c.l.b16 %v1200
        %v1361 = vunpack.c.l.b16 %v1201
        %v1362 = vunpack.c.l.b16 %v1202
        %v1363 = vunpack.c.l.b16 %v1203
        %v1364 = vunpack.c.l.b16 %v1204
        %v1365 = vunpack.c.l.b16 %v1205
        %v1366 = vunpack.c.l.b16 %v1206
        %v1367 = vunpack.c.l.b16 %v1207
        %v1368 = vunpack.c.l.b16 %v1208
        %v1369 = vunpack.c.l.b16 %v1209
        %v1370 = vunpack.c.l.b16 %v1210
        %v1371 = vunpack.c.l.b16 %v1211
        %v1372 = vunpack.c.l.b16 %v1212
        %v1373 = vunpack.c.l.b16 %v1213
        %v1374 = vunpack.c.l.b16 %v1214
        %v1375 = vunpack.c.l.b16 %v1215
        %v1376 = vunpack.c.l.b16 %v1216
        %v1377 = vunpack.c.l.b16 %v1217
        %v1378 = vunpack.c.l.b16 %v1218
        %v1379 = vunpack.c.l.b16 %v1219
        %v1380 = vunpack.c.l.b16 %v1220
        %v1381 = vunpack.c.l.b16 %v1221
        %v1382 = vunpack.c.l.b16 %v1222
        %v1383 = vunpack.c.l.b16 %v1223
        %v1384 = vunpack.c.l.b16 %v1224
        %v1385 = vunpack.c.l.b16 %v1225
        %v1386 = vunpack.c.l.b16 %v1226
        %v1387 = vunpack.c.l.b16 %v1227
        %v1388 = vunpack.c.l.b16 %v1228
        %v1389 = vunpack.c.l.b16 %v1229
        %v1390 = vunpack.c.l.b16 %v1230
        %v1391 = vunpack.c.l.b16 %v1231
        %v1392 = vunpack.c.l.b16 %v1232
        %v1393 = vunpack.c.l.b16 %v1233
        %v1394 = vunpack.c.l.b16 %v1234
        %v1395 = vunpack.c.l.b16 %v1235
        %v1396 = vunpack.c.l.b16 %v1236
        %v1397 = vunpack.c.l.b16 %v1237
        %v1398 = vunpack.c.l.b16 %v1238
        %v1399 = vunpack.c.l.b16 %v1239
        %v1400 = vunpack.c.l.b16 %v1240
        %v1401 = vunpack.c.l.b16 %v1241
        %v1402 = vunpack.c.l.b16 %v1242
        %v1403 = vunpack.c.l.b16 %v1243
        %v1404 = vpack.c.b16 %v1357, %v1356
        %v1405 = vpack.c.b16 %v1359, %v1358
        %v1406 = vpack.c.b16 %v1361, %v1360
        %v1407 = vpack.c.b16 %v1363, %v1362
        %v1408 = vpack.c.b16 %v1365, %v1364
        %v1409 = vpack.c.b16 %v1367, %v1366
        %v1410 = vpack.c.b16 %v1369, %v1368
        %v1411 = vpack.c.b16 %v1371, %v1370
        %v1412 = vpack.c.b16 %v1373, %v1372
        %v1413 = vpack.c.b16 %v1375, %v1374
        %v1414 = vpack.c.b16 %v1377, %v1376
        %v1415 = vpack.c.b16 %v1379, %v1378
        %v1416 = vpack.c.b16 %v1381, %v1380
        %v1417 = vpack.c.b16 %v1383, %v1382
        %v1418 = vpack.c.b16 %v1385, %v1384
        %v1419 = vpack.c.b16 %v1387, %v1386
        %v1420 = vpack.c.b16 %v1389, %v1388
        %v1421 = vpack.c.b16 %v1391, %v1390
        %v1422 = vpack.c.b16 %v1393, %v1392
        %v1423 = vpack.c.b16 %v1395, %v1394
        %v1424 = vpack.c.b16 %v1397, %v1396
        %v1425 = vpack.c.b16 %v1399, %v1398
        %v1426 = vpack.c.b16 %v1401, %v1400
        %v1427 = vpack.c.b16 %v1403, %v1402
        %1452 = vmatprep.subr.bf16.mxu0 0
        %1453 = vmatpush1.bf16.msra.mxu0 %v1404
        %1454 = vmatprep.subr.bf16.mxu0 0
        %1455 = vmatpush1.bf16.msra.mxu0 %v1405
        %1456 = vmatprep.subr.bf16.mxu0 0
        %1457 = vmatpush1.bf16.msra.mxu0 %v1406
        %1458 = vmatprep.subr.bf16.mxu0 0
        %1459 = vmatpush1.bf16.msra.mxu0 %v1407
        %1460 = vmatprep.subr.bf16.mxu0 0
        %1461 = vmatpush1.bf16.msra.mxu0 %v1408
        %1462 = vmatprep.subr.bf16.mxu0 0
        %1463 = vmatpush1.bf16.msra.mxu0 %v1409
        %1464 = vmatprep.subr.bf16.mxu0 0
        %1465 = vmatpush1.bf16.msra.mxu0 %v1410
        %1466 = vmatprep.subr.bf16.mxu0 0
        %1467 = vmatpush1.bf16.msra.mxu0 %v1411
        %1468 = vmatprep.subr.bf16.mxu0 0
        %1469 = vmatpush1.bf16.msra.mxu0 %v1412
        %1470 = vmatprep.subr.bf16.mxu0 0
        %1471 = vmatpush1.bf16.msra.mxu0 %v1413
        %1472 = vmatprep.subr.bf16.mxu0 0
        %1473 = vmatpush1.bf16.msra.mxu0 %v1414
        %1474 = vmatprep.subr.bf16.mxu0 0
        %1475 = vmatpush1.bf16.msra.mxu0 %v1415
        %1476 = vmatprep.subr.bf16.mxu0 0
        %1477 = vmatpush1.bf16.msra.mxu0 %v1416
        %1478 = vmatprep.subr.bf16.mxu0 0
        %1479 = vmatpush1.bf16.msra.mxu0 %v1417
        %1480 = vmatprep.subr.bf16.mxu0 0
        %1481 = vmatpush1.bf16.msra.mxu0 %v1418
        %1482 = vmatprep.subr.bf16.mxu0 0
        %1483 = vmatpush1.bf16.msra.mxu0 %v1419
        %1484 = vmatprep.mubr.bf16.mxu0 %v1285
        %1485 = vmatmul.mubr.bf16.gmra.mrb[0].mxu0 %v1284
        %v1486 = vpop.f32.mrb[0].mxu0
        %v1487 = vadd.f32 0.0, %v1486
        %v1488 = vpop.f32.mrb[0].mxu0
        %v1489 = vpop.f32.mrb[0].mxu0
        %v1490 = vadd.f32 0.0, %v1489
        %v1491 = vpop.f32.mrb[0].mxu0
        %1492 = vmatprep.mubr.bf16.mxu0 %v1288
        %1493 = vmatmul.mubr.bf16.gmra.mrb[0].mxu0 %v1287
        %v1494 = vpop.f32.mrb[0].mxu0
        %v1495 = vadd.f32 0.0, %v1494
        %v1496 = vpop.f32.mrb[0].mxu0
        %v1497 = vpop.f32.mrb[0].mxu0
        %v1498 = vadd.f32 0.0, %v1497
        %v1499 = vpop.f32.mrb[0].mxu0
        %1500 = vmatprep.mubr.bf16.mxu0 %v1291
        %1501 = vmatmul.mubr.bf16.gmra.mrb[0].mxu0 %v1290
        %v1502 = vpop.f32.mrb[0].mxu0
        %v1503 = vadd.f32 0.0, %v1502
        %v1504 = vpop.f32.mrb[0].mxu0
        %v1505 = vpop.f32.mrb[0].mxu0
        %v1506 = vadd.f32 0.0, %v1505
        %v1507 = vpop.f32.mrb[0].mxu0
        %1508 = vmatprep.mubr.bf16.mxu0 %v1294
        %1509 = vmatmul.mubr.bf16.gmra.mrb[0].mxu0 %v1293
        %v1510 = vpop.f32.mrb[0].mxu0
        %v1511 = vadd.f32 0.0, %v1510
        %v1512 = vpop.f32.mrb[0].mxu0
        %v1513 = vpop.f32.mrb[0].mxu0
        %v1514 = vadd.f32 0.0, %v1513
        %v1515 = vpop.f32.mrb[0].mxu0
        %1516 = vdwg.mxu0
        %1517 = vmatprep.subr.bf16.mxu0 0
        %1518 = vmatpush1.bf16.msra.mxu0 %v1420
        %1519 = vmatprep.subr.bf16.mxu0 0
        %1520 = vmatpush1.bf16.msra.mxu0 %v1421
        %1521 = vmatprep.subr.bf16.mxu0 0
        %1522 = vmatpush1.bf16.msra.mxu0 %v1422
        %1523 = vmatprep.subr.bf16.mxu0 0
        %1524 = vmatpush1.bf16.msra.mxu0 %v1423
        %1525 = vmatprep.subr.bf16.mxu0 0
        %1526 = vmatpush1.bf16.msra.mxu0 %v1424
        %1527 = vmatprep.subr.bf16.mxu0 0
        %1528 = vmatpush1.bf16.msra.mxu0 %v1425
        %1529 = vmatprep.subr.bf16.mxu0 0
        %1530 = vmatpush1.bf16.msra.mxu0 %v1426
        %1531 = vmatprep.subr.bf16.mxu0 0
        %1532 = vmatpush1.bf16.msra.mxu0 %v1427
        %1533 = vmatprep.subr.bf16.mxu0 0
        %1534 = vmatpush1.bf16.msra.mxu0 0
        %1535 = vmatprep.subr.bf16.mxu0 0
        %1536 = vmatpush1.bf16.msra.mxu0 0
        %1537 = vmatprep.subr.bf16.mxu0 0
        %1538 = vmatpush1.bf16.msra.mxu0 0
        %1539 = vmatprep.subr.bf16.mxu0 0
        %1540 = vmatpush1.bf16.msra.mxu0 0
        %1541 = vmatprep.subr.bf16.mxu0 0
        %1542 = vmatpush1.bf16.msra.mxu0 0
        %1543 = vmatprep.subr.bf16.mxu0 0
        %1544 = vmatpush1.bf16.msra.mxu0 0
        %1545 = vmatprep.subr.bf16.mxu0 0
        %1546 = vmatpush1.bf16.msra.mxu0 0
        %1547 = vmatprep.subr.bf16.mxu0 0
        %1548 = vmatpush1.bf16.msra.mxu0 0
        %1549 = vmatprep.mubr.bf16.mxu0 0
        %1550 = vmatmul.mubr.bf16.gmra.mrb[0].mxu0 %v1286
        %v1551 = vpop.f32.mrb[0].mxu0
        %v1552 = vadd.f32 %v1487, %v1551
        %v1553 = vpop.f32.mrb[0].mxu0
        %v1554 = vpop.f32.mrb[0].mxu0
        %v1555 = vadd.f32 %v1490, %v1554
        %v1556 = vpop.f32.mrb[0].mxu0
        %1557 = vmatprep.mubr.bf16.mxu0 0
        %1558 = vmatmul.mubr.bf16.gmra.mrb[0].mxu0 %v1289
        %v1559 = vpop.f32.mrb[0].mxu0
        %v1560 = vadd.f32 %v1495, %v1559
        %v1561 = vpop.f32.mrb[0].mxu0
        %v1562 = vpop.f32.mrb[0].mxu0
        %v1563 = vadd.f32 %v1498, %v1562
        %v1564 = vpop.f32.mrb[0].mxu0
        %1565 = vmatprep.mubr.bf16.mxu0 0
        %1566 = vmatmul.mubr.bf16.gmra.mrb[0].mxu0 %v1292
        %v1567 = vpop.f32.mrb[0].mxu0
        %v1568 = vadd.f32 %v1503, %v1567
        %v1569 = vpop.f32.mrb[0].mxu0
        %v1570 = vpop.f32.mrb[0].mxu0
        %v1571 = vadd.f32 %v1506, %v1570
        %v1572 = vpop.f32.mrb[0].mxu0
        %1573 = vmatprep.mubr.bf16.mxu0 0
        %1574 = vmatmul.mubr.bf16.gmra.mrb[0].mxu0 %v1295
        %v1575 = vpop.f32.mrb[0].mxu0
        %v1576 = vadd.f32 %v1511, %v1575
        %v1577 = vpop.f32.mrb[0].mxu0
        %v1578 = vpop.f32.mrb[0].mxu0
        %v1579 = vadd.f32 %v1514, %v1578
        %v1580 = vpop.f32.mrb[0].mxu0
        %1581 = vdwg.mxu0
        %v1582 = vadd.f32 %v1171, %v1552
        %v1583 = vadd.f32 %v1172, %v1555
        %v1584 = vadd.f32 %v1173, %v1560
        %v1585 = vadd.f32 %v1174, %v1563
        %v1586 = vadd.f32 %v1175, %v1568
        %v1587 = vadd.f32 %v1176, %v1571
        %v1588 = vadd.f32 %v1177, %v1576
        %v1589 = vadd.f32 %v1178, %v1579
        %1590 = vst [vmem:[#allocation3] sm:$0xff] %v1582
        %1591 = vst [vmem:[#allocation3 + $0x8] sm:$0xff] %v1583
        %1592 = vst [vmem:[#allocation3 + $0x10] sm:$0xff] %v1584
        %1593 = vst [vmem:[#allocation3 + $0x18] sm:$0xff] %v1585
        %1594 = vst [vmem:[#allocation3 + $0x20] sm:$0xff] %v1586
        %1595 = vst [vmem:[#allocation3 + $0x28] sm:$0xff] %v1587
        %1596 = vst [vmem:[#allocation3 + $0x30] sm:$0xff] %v1588
        %1597 = vst [vmem:[#allocation3 + $0x38] sm:$0xff] %v1589
        %v1598 = vld [vmem:[#allocation3] sm:$0xff]
        %v1599 = vld [vmem:[#allocation3 + $0x8] sm:$0xff]
        %v1600 = vld [vmem:[#allocation3 + $0x10] sm:$0xff]
        %v1601 = vld [vmem:[#allocation3 + $0x18] sm:$0xff]
        %v1602 = vld [vmem:[#allocation3 + $0x20] sm:$0xff]
        %v1603 = vld [vmem:[#allocation3 + $0x28] sm:$0xff]
        %v1604 = vld [vmem:[#allocation3 + $0x30] sm:$0xff]
        %v1605 = vld [vmem:[#allocation3 + $0x38] sm:$0xff]
        %s1606 = scalar_lea.vmem [#allocation2], 24
        %v1607 = vld [vmem:[%s1606] sm:$0xff]
        %v1608 = vld [vmem:[%s1606 + $0x8] sm:$0xf]
        %v1609 = vld [vmem:[%s1606 + $0xc] sm:$0xff]
        %v1610 = vld [vmem:[%s1606 + $0x14] sm:$0xf]
        %v1611 = vld [vmem:[%s1606 + $0x18] sm:$0xff]
        %v1612 = vld [vmem:[%s1606 + $0x20] sm:$0xf]
        %v1613 = vld [vmem:[%s1606 + $0x24] sm:$0xff]
        %v1614 = vld [vmem:[%s1606 + $0x2c] sm:$0xf]
        %v1615 = vld [vmem:[%s1606 + $0x30] sm:$0xff]
        %v1616 = vld [vmem:[%s1606 + $0x38] sm:$0xf]
        %v1617 = vld [vmem:[%s1606 + $0x3c] sm:$0xff]
        %v1618 = vld [vmem:[%s1606 + $0x44] sm:$0xf]
        %v1619 = vld [vmem:[%s1606 + $0x48] sm:$0xff]
        %v1620 = vld [vmem:[%s1606 + $0x50] sm:$0xf]
        %v1621 = vld [vmem:[%s1606 + $0x54] sm:$0xff]
        %v1622 = vld [vmem:[%s1606 + $0x5c] sm:$0xf]
        %s1623 = scalar_lea.vmem [#allocation4], 384
        %v1624 = vld [vmem:[%s1623] sm:$0xf]
        %v1625 = vld [vmem:[%s1623 + $0x4] sm:$0xf]
        %v1626 = vld [vmem:[%s1623 + $0x8] sm:$0xf]
        %v1627 = vld [vmem:[%s1623 + $0xc] sm:$0xf]
        %v1628 = vld [vmem:[%s1623 + $0x10] sm:$0xf]
        %v1629 = vld [vmem:[%s1623 + $0x14] sm:$0xf]
        %v1630 = vld [vmem:[%s1623 + $0x18] sm:$0xf]
        %v1631 = vld [vmem:[%s1623 + $0x1c] sm:$0xf]
        %v1632 = vld [vmem:[%s1623 + $0x20] sm:$0xf]
        %v1633 = vld [vmem:[%s1623 + $0x24] sm:$0xf]
        %v1634 = vld [vmem:[%s1623 + $0x28] sm:$0xf]
        %v1635 = vld [vmem:[%s1623 + $0x2c] sm:$0xf]
        %v1636 = vld [vmem:[%s1623 + $0x30] sm:$0xf]
        %v1637 = vld [vmem:[%s1623 + $0x34] sm:$0xf]
        %v1638 = vld [vmem:[%s1623 + $0x38] sm:$0xf]
        %v1639 = vld [vmem:[%s1623 + $0x3c] sm:$0xf]
        %v1640 = vld [vmem:[%s1623 + $0x40] sm:$0xf]
        %v1641 = vld [vmem:[%s1623 + $0x44] sm:$0xf]
        %v1642 = vld [vmem:[%s1623 + $0x48] sm:$0xf]
        %v1643 = vld [vmem:[%s1623 + $0x4c] sm:$0xf]
        %v1644 = vld [vmem:[%s1623 + $0x50] sm:$0xf]
        %v1645 = vld [vmem:[%s1623 + $0x54] sm:$0xf]
        %v1646 = vld [vmem:[%s1623 + $0x58] sm:$0xf]
        %v1647 = vld [vmem:[%s1623 + $0x5c] sm:$0xf]
        %v1648 = vld [vmem:[%s1623 + $0x60] sm:$0xf]
        %v1649 = vld [vmem:[%s1623 + $0x64] sm:$0xf]
        %v1650 = vld [vmem:[%s1623 + $0x68] sm:$0xf]
        %v1651 = vld [vmem:[%s1623 + $0x6c] sm:$0xf]
        %v1652 = vld [vmem:[%s1623 + $0x70] sm:$0xf]
        %v1653 = vld [vmem:[%s1623 + $0x74] sm:$0xf]
        %v1654 = vld [vmem:[%s1623 + $0x78] sm:$0xf]
        %v1655 = vld [vmem:[%s1623 + $0x7c] sm:$0xf]
        %v1656 = vld [vmem:[%s1623 + $0x80] sm:$0xf]
        %v1657 = vld [vmem:[%s1623 + $0x84] sm:$0xf]
        %v1658 = vld [vmem:[%s1623 + $0x88] sm:$0xf]
        %v1659 = vld [vmem:[%s1623 + $0x8c] sm:$0xf]
        %v1660 = vld [vmem:[%s1623 + $0x90] sm:$0xf]
        %v1661 = vld [vmem:[%s1623 + $0x94] sm:$0xf]
        %v1662 = vld [vmem:[%s1623 + $0x98] sm:$0xf]
        %v1663 = vld [vmem:[%s1623 + $0x9c] sm:$0xf]
        %v1664 = vld [vmem:[%s1623 + $0xa0] sm:$0xf]
        %v1665 = vld [vmem:[%s1623 + $0xa4] sm:$0xf]
        %v1666 = vld [vmem:[%s1623 + $0xa8] sm:$0xf]
        %v1667 = vld [vmem:[%s1623 + $0xac] sm:$0xf]
        %v1668 = vld [vmem:[%s1623 + $0xb0] sm:$0xf]
        %v1669 = vld [vmem:[%s1623 + $0xb4] sm:$0xf]
        %v1670 = vld [vmem:[%s1623 + $0xb8] sm:$0xf]
        %v1671 = vld [vmem:[%s1623 + $0xbc] sm:$0xf]
        %v1688 = vunpack.c.l.b16 %v1607
        %v1689 = vunpack.c.h.b16 %v1607
        %v1690 = vunpack.c.l.b16 %v1608
        %v1691 = vunpack.c.l.b16 %v1609
        %v1692 = vunpack.c.h.b16 %v1609
        %v1693 = vunpack.c.l.b16 %v1610
        %v1694 = vunpack.c.l.b16 %v1611
        %v1695 = vunpack.c.h.b16 %v1611
        %v1696 = vunpack.c.l.b16 %v1612
        %v1697 = vunpack.c.l.b16 %v1613
        %v1698 = vunpack.c.h.b16 %v1613
        %v1699 = vunpack.c.l.b16 %v1614
        %v1700 = vunpack.c.l.b16 %v1615
        %v1701 = vunpack.c.h.b16 %v1615
        %v1702 = vunpack.c.l.b16 %v1616
        %v1703 = vunpack.c.l.b16 %v1617
        %v1704 = vunpack.c.h.b16 %v1617
        %v1705 = vunpack.c.l.b16 %v1618
        %v1706 = vunpack.c.l.b16 %v1619
        %v1707 = vunpack.c.h.b16 %v1619
        %v1708 = vunpack.c.l.b16 %v1620
        %v1709 = vunpack.c.l.b16 %v1621
        %v1710 = vunpack.c.h.b16 %v1621
        %v1711 = vunpack.c.l.b16 %v1622
        %v1712 = vpack.c.b16 %v1691, %v1688
        %v1713 = vpack.c.b16 %v1692, %v1689
        %v1714 = vpack.c.b16 %v1693, %v1690
        %v1715 = vpack.c.b16 %v1697, %v1694
        %v1716 = vpack.c.b16 %v1698, %v1695
        %v1717 = vpack.c.b16 %v1699, %v1696
        %v1718 = vpack.c.b16 %v1703, %v1700
        %v1719 = vpack.c.b16 %v1704, %v1701
        %v1720 = vpack.c.b16 %v1705, %v1702
        %v1721 = vpack.c.b16 %v1709, %v1706
        %v1722 = vpack.c.b16 %v1710, %v1707
        %v1723 = vpack.c.b16 %v1711, %v1708
        %v1784 = vunpack.c.l.b16 %v1624
        %v1785 = vunpack.c.l.b16 %v1625
        %v1786 = vunpack.c.l.b16 %v1626
        %v1787 = vunpack.c.l.b16 %v1627
        %v1788 = vunpack.c.l.b16 %v1628
        %v1789 = vunpack.c.l.b16 %v1629
        %v1790 = vunpack.c.l.b16 %v1630
        %v1791 = vunpack.c.l.b16 %v1631
        %v1792 = vunpack.c.l.b16 %v1632
        %v1793 = vunpack.c.l.b16 %v1633
        %v1794 = vunpack.c.l.b16 %v1634
        %v1795 = vunpack.c.l.b16 %v1635
        %v1796 = vunpack.c.l.b16 %v1636
        %v1797 = vunpack.c.l.b16 %v1637
        %v1798 = vunpack.c.l.b16 %v1638
        %v1799 = vunpack.c.l.b16 %v1639
        %v1800 = vunpack.c.l.b16 %v1640
        %v1801 = vunpack.c.l.b16 %v1641
        %v1802 = vunpack.c.l.b16 %v1642
        %v1803 = vunpack.c.l.b16 %v1643
        %v1804 = vunpack.c.l.b16 %v1644
        %v1805 = vunpack.c.l.b16 %v1645
        %v1806 = vunpack.c.l.b16 %v1646
        %v1807 = vunpack.c.l.b16 %v1647
        %v1808 = vunpack.c.l.b16 %v1648
        %v1809 = vunpack.c.l.b16 %v1649
        %v1810 = vunpack.c.l.b16 %v1650
        %v1811 = vunpack.c.l.b16 %v1651
        %v1812 = vunpack.c.l.b16 %v1652
        %v1813 = vunpack.c.l.b16 %v1653
        %v1814 = vunpack.c.l.b16 %v1654
        %v1815 = vunpack.c.l.b16 %v1655
        %v1816 = vunpack.c.l.b16 %v1656
        %v1817 = vunpack.c.l.b16 %v1657
        %v1818 = vunpack.c.l.b16 %v1658
        %v1819 = vunpack.c.l.b16 %v1659
        %v1820 = vunpack.c.l.b16 %v1660
        %v1821 = vunpack.c.l.b16 %v1661
        %v1822 = vunpack.c.l.b16 %v1662
        %v1823 = vunpack.c.l.b16 %v1663
        %v1824 = vunpack.c.l.b16 %v1664
        %v1825 = vunpack.c.l.b16 %v1665
        %v1826 = vunpack.c.l.b16 %v1666
        %v1827 = vunpack.c.l.b16 %v1667
        %v1828 = vunpack.c.l.b16 %v1668
        %v1829 = vunpack.c.l.b16 %v1669
        %v1830 = vunpack.c.l.b16 %v1670
        %v1831 = vunpack.c.l.b16 %v1671
        %v1832 = vpack.c.b16 %v1785, %v1784
        %v1833 = vpack.c.b16 %v1787, %v1786
        %v1834 = vpack.c.b16 %v1789, %v1788
        %v1835 = vpack.c.b16 %v1791, %v1790
        %v1836 = vpack.c.b16 %v1793, %v1792
        %v1837 = vpack.c.b16 %v1795, %v1794
        %v1838 = vpack.c.b16 %v1797, %v1796
        %v1839 = vpack.c.b16 %v1799, %v1798
        %v1840 = vpack.c.b16 %v1801, %v1800
        %v1841 = vpack.c.b16 %v1803, %v1802
        %v1842 = vpack.c.b16 %v1805, %v1804
        %v1843 = vpack.c.b16 %v1807, %v1806
        %v1844 = vpack.c.b16 %v1809, %v1808
        %v1845 = vpack.c.b16 %v1811, %v1810
        %v1846 = vpack.c.b16 %v1813, %v1812
        %v1847 = vpack.c.b16 %v1815, %v1814
        %v1848 = vpack.c.b16 %v1817, %v1816
        %v1849 = vpack.c.b16 %v1819, %v1818
        %v1850 = vpack.c.b16 %v1821, %v1820
        %v1851 = vpack.c.b16 %v1823, %v1822
        %v1852 = vpack.c.b16 %v1825, %v1824
        %v1853 = vpack.c.b16 %v1827, %v1826
        %v1854 = vpack.c.b16 %v1829, %v1828
        %v1855 = vpack.c.b16 %v1831, %v1830
        %1880 = vmatprep.subr.bf16.mxu0 0
        %1881 = vmatpush1.bf16.msra.mxu0 %v1832
        %1882 = vmatprep.subr.bf16.mxu0 0
        %1883 = vmatpush1.bf16.msra.mxu0 %v1833
        %1884 = vmatprep.subr.bf16.mxu0 0
        %1885 = vmatpush1.bf16.msra.mxu0 %v1834
        %1886 = vmatprep.subr.bf16.mxu0 0
        %1887 = vmatpush1.bf16.msra.mxu0 %v1835
        %1888 = vmatprep.subr.bf16.mxu0 0
        %1889 = vmatpush1.bf16.msra.mxu0 %v1836
        %1890 = vmatprep.subr.bf16.mxu0 0
        %1891 = vmatpush1.bf16.msra.mxu0 %v1837
        %1892 = vmatprep.subr.bf16.mxu0 0
        %1893 = vmatpush1.bf16.msra.mxu0 %v1838
        %1894 = vmatprep.subr.bf16.mxu0 0
        %1895 = vmatpush1.bf16.msra.mxu0 %v1839
        %1896 = vmatprep.subr.bf16.mxu0 0
        %1897 = vmatpush1.bf16.msra.mxu0 %v1840
        %1898 = vmatprep.subr.bf16.mxu0 0
        %1899 = vmatpush1.bf16.msra.mxu0 %v1841
        %1900 = vmatprep.subr.bf16.mxu0 0
        %1901 = vmatpush1.bf16.msra.mxu0 %v1842
        %1902 = vmatprep.subr.bf16.mxu0 0
        %1903 = vmatpush1.bf16.msra.mxu0 %v1843
        %1904 = vmatprep.subr.bf16.mxu0 0
        %1905 = vmatpush1.bf16.msra.mxu0 %v1844
        %1906 = vmatprep.subr.bf16.mxu0 0
        %1907 = vmatpush1.bf16.msra.mxu0 %v1845
        %1908 = vmatprep.subr.bf16.mxu0 0
        %1909 = vmatpush1.bf16.msra.mxu0 %v1846
        %1910 = vmatprep.subr.bf16.mxu0 0
        %1911 = vmatpush1.bf16.msra.mxu0 %v1847
        %1912 = vmatprep.mubr.bf16.mxu0 %v1713
        %1913 = vmatmul.mubr.bf16.gmra.mrb[0].mxu0 %v1712
        %v1914 = vpop.f32.mrb[0].mxu0
        %v1915 = vadd.f32 0.0, %v1914
        %v1916 = vpop.f32.mrb[0].mxu0
        %v1917 = vpop.f32.mrb[0].mxu0
        %v1918 = vadd.f32 0.0, %v1917
        %v1919 = vpop.f32.mrb[0].mxu0
        %1920 = vmatprep.mubr.bf16.mxu0 %v1716
        %1921 = vmatmul.mubr.bf16.gmra.mrb[0].mxu0 %v1715
        %v1922 = vpop.f32.mrb[0].mxu0
        %v1923 = vadd.f32 0.0, %v1922
        %v1924 = vpop.f32.mrb[0].mxu0
        %v1925 = vpop.f32.mrb[0].mxu0
        %v1926 = vadd.f32 0.0, %v1925
        %v1927 = vpop.f32.mrb[0].mxu0
        %1928 = vmatprep.mubr.bf16.mxu0 %v1719
        %1929 = vmatmul.mubr.bf16.gmra.mrb[0].mxu0 %v1718
        %v1930 = vpop.f32.mrb[0].mxu0
        %v1931 = vadd.f32 0.0, %v1930
        %v1932 = vpop.f32.mrb[0].mxu0
        %v1933 = vpop.f32.mrb[0].mxu0
        %v1934 = vadd.f32 0.0, %v1933
        %v1935 = vpop.f32.mrb[0].mxu0
        %1936 = vmatprep.mubr.bf16.mxu0 %v1722
        %1937 = vmatmul.mubr.bf16.gmra.mrb[0].mxu0 %v1721
        %v1938 = vpop.f32.mrb[0].mxu0
        %v1939 = vadd.f32 0.0, %v1938
        %v1940 = vpop.f32.mrb[0].mxu0
        %v1941 = vpop.f32.mrb[0].mxu0
        %v1942 = vadd.f32 0.0, %v1941
        %v1943 = vpop.f32.mrb[0].mxu0
        %1944 = vdwg.mxu0
        %1945 = vmatprep.subr.bf16.mxu0 0
        %1946 = vmatpush1.bf16.msra.mxu0 %v1848
        %1947 = vmatprep.subr.bf16.mxu0 0
        %1948 = vmatpush1.bf16.msra.mxu0 %v1849
        %1949 = vmatprep.subr.bf16.mxu0 0
        %1950 = vmatpush1.bf16.msra.mxu0 %v1850
        %1951 = vmatprep.subr.bf16.mxu0 0
        %1952 = vmatpush1.bf16.msra.mxu0 %v1851
        %1953 = vmatprep.subr.bf16.mxu0 0
        %1954 = vmatpush1.bf16.msra.mxu0 %v1852
        %1955 = vmatprep.subr.bf16.mxu0 0
        %1956 = vmatpush1.bf16.msra.mxu0 %v1853
        %1957 = vmatprep.subr.bf16.mxu0 0
        %1958 = vmatpush1.bf16.msra.mxu0 %v1854
        %1959 = vmatprep.subr.bf16.mxu0 0
        %1960 = vmatpush1.bf16.msra.mxu0 %v1855
        %1961 = vmatprep.subr.bf16.mxu0 0
        %1962 = vmatpush1.bf16.msra.mxu0 0
        %1963 = vmatprep.subr.bf16.mxu0 0
        %1964 = vmatpush1.bf16.msra.mxu0 0
        %1965 = vmatprep.subr.bf16.mxu0 0
        %1966 = vmatpush1.bf16.msra.mxu0 0
        %1967 = vmatprep.subr.bf16.mxu0 0
        %1968 = vmatpush1.bf16.msra.mxu0 0
        %1969 = vmatprep.subr.bf16.mxu0 0
        %1970 = vmatpush1.bf16.msra.mxu0 0
        %1971 = vmatprep.subr.bf16.mxu0 0
        %1972 = vmatpush1.bf16.msra.mxu0 0
        %1973 = vmatprep.subr.bf16.mxu0 0
        %1974 = vmatpush1.bf16.msra.mxu0 0
        %1975 = vmatprep.subr.bf16.mxu0 0
        %1976 = vmatpush1.bf16.msra.mxu0 0
        %1977 = vmatprep.mubr.bf16.mxu0 0
        %1978 = vmatmul.mubr.bf16.gmra.mrb[0].mxu0 %v1714
        %v1979 = vpop.f32.mrb[0].mxu0
        %v1980 = vadd.f32 %v1915, %v1979
        %v1981 = vpop.f32.mrb[0].mxu0
        %v1982 = vpop.f32.mrb[0].mxu0
        %v1983 = vadd.f32 %v1918, %v1982
        %v1984 = vpop.f32.mrb[0].mxu0
        %1985 = vmatprep.mubr.bf16.mxu0 0
        %1986 = vmatmul.mubr.bf16.gmra.mrb[0].mxu0 %v1717
        %v1987 = vpop.f32.mrb[0].mxu0
        %v1988 = vadd.f32 %v1923, %v1987
        %v1989 = vpop.f32.mrb[0].mxu0
        %v1990 = vpop.f32.mrb[0].mxu0
        %v1991 = vadd.f32 %v1926, %v1990
        %v1992 = vpop.f32.mrb[0].mxu0
        %1993 = vmatprep.mubr.bf16.mxu0 0
        %1994 = vmatmul.mubr.bf16.gmra.mrb[0].mxu0 %v1720
        %v1995 = vpop.f32.mrb[0].mxu0
        %v1996 = vadd.f32 %v1931, %v1995
        %v1997 = vpop.f32.mrb[0].mxu0
        %v1998 = vpop.f32.mrb[0].mxu0
        %v1999 = vadd.f32 %v1934, %v1998
        %v2000 = vpop.f32.mrb[0].mxu0
        %2001 = vmatprep.mubr.bf16.mxu0 0
        %2002 = vmatmul.mubr.bf16.gmra.mrb[0].mxu0 %v1723
        %v2003 = vpop.f32.mrb[0].mxu0
        %v2004 = vadd.f32 %v1939, %v2003
        %v2005 = vpop.f32.mrb[0].mxu0
        %v2006 = vpop.f32.mrb[0].mxu0
        %v2007 = vadd.f32 %v1942, %v2006
        %v2008 = vpop.f32.mrb[0].mxu0
        %2009 = vdwg.mxu0
        %v2010 = vadd.f32 %v1598, %v1980
        %v2011 = vadd.f32 %v1599, %v1983
        %v2012 = vadd.f32 %v1600, %v1988
        %v2013 = vadd.f32 %v1601, %v1991
        %v2014 = vadd.f32 %v1602, %v1996
        %v2015 = vadd.f32 %v1603, %v1999
        %v2016 = vadd.f32 %v1604, %v2004
        %v2017 = vadd.f32 %v1605, %v2007
        %2018 = vst [vmem:[#allocation3] sm:$0xff] %v2010
        %2019 = vst [vmem:[#allocation3 + $0x8] sm:$0xff] %v2011
        %2020 = vst [vmem:[#allocation3 + $0x10] sm:$0xff] %v2012
        %2021 = vst [vmem:[#allocation3 + $0x18] sm:$0xff] %v2013
        %2022 = vst [vmem:[#allocation3 + $0x20] sm:$0xff] %v2014
        %2023 = vst [vmem:[#allocation3 + $0x28] sm:$0xff] %v2015
        %2024 = vst [vmem:[#allocation3 + $0x30] sm:$0xff] %v2016
        %2025 = vst [vmem:[#allocation3 + $0x38] sm:$0xff] %v2017
        %v2026 = vld [vmem:[#allocation3] sm:$0xff]
        %v2027 = vld [vmem:[#allocation3 + $0x8] sm:$0xff]
        %v2028 = vld [vmem:[#allocation3 + $0x10] sm:$0xff]
        %v2029 = vld [vmem:[#allocation3 + $0x18] sm:$0xff]
        %v2030 = vld [vmem:[#allocation3 + $0x20] sm:$0xff]
        %v2031 = vld [vmem:[#allocation3 + $0x28] sm:$0xff]
        %v2032 = vld [vmem:[#allocation3 + $0x30] sm:$0xff]
        %v2033 = vld [vmem:[#allocation3 + $0x38] sm:$0xff]
        %v2034 = vld [vmem:[%s457] sm:$0x1]
        %v2036 = vlaneseq
        %v2037 = vshrl.u32 %v2036, 7
        %v2038 = vsub.s32 0, %v2037
        %v2039 = vrot.slane %v2034, %v2038
        %v2041 = vmul.f32 %v2026, %v2039
        %v2042 = vmul.f32 %v2027, %v2039
        %v2043 = vmul.f32 %v2028, %v2039
        %v2044 = vmul.f32 %v2029, %v2039
        %v2045 = vmul.f32 %v2030, %v2039
        %v2046 = vmul.f32 %v2031, %v2039
        %v2047 = vmul.f32 %v2032, %v2039
        %v2048 = vmul.f32 %v2033, %v2039
        %v2049 = vld [vmem:[%s460] sm:$0x1]
        %v2051 = vlaneseq
        %v2052 = vshrl.u32 %v2051, 7
        %v2053 = vsub.s32 0, %v2052
        %v2054 = vrot.slane %v2049, %v2053
        %v2056 = vadd.f32 %v2041, %v2054
        %v2057 = vadd.f32 %v2042, %v2054
        %v2058 = vadd.f32 %v2043, %v2054
        %v2059 = vadd.f32 %v2044, %v2054
        %v2060 = vadd.f32 %v2045, %v2054
        %v2061 = vadd.f32 %v2046, %v2054
        %v2062 = vadd.f32 %v2047, %v2054
        %v2063 = vadd.f32 %v2048, %v2054
        %v2064 = vmax.f32 %v2056, 0.0
        %v2065 = vmax.f32 %v2057, 0.0
        %v2066 = vmax.f32 %v2058, 0.0
        %v2067 = vmax.f32 %v2059, 0.0
        %v2068 = vmax.f32 %v2060, 0.0
        %v2069 = vmax.f32 %v2061, 0.0
        %v2070 = vmax.f32 %v2062, 0.0
        %v2071 = vmax.f32 %v2063, 0.0
        %v2072 = vpack.c.bf16 %v2064, %v2064
        %v2073 = vpack.c.bf16 %v2065, %v2065
        %v2074 = vpack.c.bf16 %v2066, %v2066
        %v2075 = vpack.c.bf16 %v2067, %v2067
        %v2076 = vpack.c.bf16 %v2068, %v2068
        %v2077 = vpack.c.bf16 %v2069, %v2069
        %v2078 = vpack.c.bf16 %v2070, %v2070
        %v2079 = vpack.c.bf16 %v2071, %v2071
        %2080 = vst [vmem:[%s472] sm:$0xf] %v2072
        %2081 = vst [vmem:[%s472 + $0x4] sm:$0xf] %v2073
        %2082 = vst [vmem:[%s472 + $0x8] sm:$0xf] %v2074
        %2083 = vst [vmem:[%s472 + $0xc] sm:$0xf] %v2075
        %2084 = vst [vmem:[%s472 + $0x10] sm:$0xf] %v2076
        %2085 = vst [vmem:[%s472 + $0x14] sm:$0xf] %v2077
        %2086 = vst [vmem:[%s472 + $0x18] sm:$0xf] %v2078
        %2087 = vst [vmem:[%s472 + $0x1c] sm:$0xf] %v2079
        %s2088 = smul.u32 8, %s24
        %p2089 = scmp.lt.s32.totalorder %s23, 1
        %s2090 = scalar_select %p2089, %s23, 1
        %p2091 = scmp.lt.s32.totalorder %s2088, 7
        %s2092 = scalar_select %p2091, %s2088, 7
        %p2093 = scmp.lt.s32.totalorder %s25, 0
        %s2094 = scalar_select %p2093, %s25, 0
        %s2095 = sadd.s32 %s2094, %s2092
        %s2096 = smul.addr %s2090, 8
        %s2097 = sadd.s32 %s2095, %s2096
        %s2098 = smul.addr %s2097, 4
        %s2099 = scalar_lea.vmem %s6, %s2098
        // Predicated region
        $region53: #{bottleneck_forward.4} parent=43 // pred_check
          %p2100 = pneg %p237
        $region54: #{bottleneck_forward.4} parent=43 // pred_check_branch
          %2102 = sbr.rel (%p2100) target = $region56
        $region55: #{bottleneck_forward.4} parent=43 // pred_region
          %s2103 = smul.u32 8, %s24
        $region56: #{bottleneck_forward.4} parent=43 // pred_fallthru
          _
      $region44: #{bottleneck_forward.4} parent=5 // pred_fallthru
        _
      %p2104 = scmp.le.s32.totalorder 2, %s13
      // Predicated region
      $region57: #{bottleneck_forward.4} parent=5 // pred_check
        %p2105 = pneg %p2104
      $region58: #{bottleneck_forward.4} parent=5 // pred_check_branch
        %2107 = sbr.rel (%p2105) target = $region60
      $region59: #{bottleneck_forward.4} parent=5 // pred_region
        %s2108 = ssub.s32 %s13, 2
        // Predicated region
        $region61: #{bottleneck_forward.4} parent=59 // pred_check
          %p2109 = pneg %p243
        $region62: #{bottleneck_forward.4} parent=59 // pred_check_branch
          %2111 = sbr.rel (%p2109) target = $region64
        $region63: #{bottleneck_forward.4} parent=59 // pred_region
          %s2112 = smul.u32 8, %s27
          %p2113 = scmp.lt.s32.totalorder %s26, 1
          %s2114 = scalar_select %p2113, %s26, 1
          %p2115 = scmp.lt.s32.totalorder %s2112, 7
          %s2116 = scalar_select %p2115, %s2112, 7
          %p2117 = scmp.lt.s32.totalorder %s28, 0
          %s2118 = scalar_select %p2117, %s28, 0
          %s2119 = sadd.s32 %s2118, %s2116
          %s2120 = smul.addr %s2114, 8
          %s2121 = sadd.s32 %s2119, %s2120
          %s2122 = smul.addr %s2121, 4
          %s2123 = scalar_lea.vmem %s6, %s2122
        $region64: #{bottleneck_forward.4} parent=59 // pred_fallthru
          _
      $region60: #{bottleneck_forward.4} parent=5 // pred_fallthru
        _
    $region6: #{bottleneck_forward.4} parent=1 // loop_footer
      %s17 = sadd.s32 1, %s13
    $region7: #{bottleneck_forward.4} parent=1 // loop_footer_branch
      %12 = sbr.rel target = $region3
    $region8: #{bottleneck_forward.4} parent=1 // loop_exit
      _
    %2124 = vsyncpa [#allocation5], 1
    %s2125 = scalar_lea.sflag [#allocation5], 1
    %2126 = vsyncpa %s2125, 1

</llo_original>
